<compile_context>
chip_gen: v7x
topology: tpu7x:2x2x1
jax: 0.10.0
libtpu: 0.0.40
codegen_flags: <defaults>
</compile_context>

<pallas_src>
import functools

import jax
import jax.numpy as jnp
from jax.experimental import pallas as pl
from jax.experimental.pallas import tpu as pltpu

_NEG_SLOPE = 0.2  # LeakyReLU(0.2, inplace=True) in the PyTorch module


def _round_up(x, m):
    return ((x + m - 1) // m) * m


# --------------------------------------------------------------------------- #
# Kernel: one fused [LeakyReLU ->] reflect-padded 3x3 conv layer, one batch elem
# --------------------------------------------------------------------------- #
def _conv3x3_layer_kernel(apply_act, tap_phase, tap_shift,
                          x_ref, w_ref, b_ref, o_ref, xs_ref):
    """
    x_ref : (1, P, R_in, C_in)  phase-decomposed, row-flattened, padded input
    w_ref : (9, C_in, C_out)    weight-normed weights, one (C_in, C_out) slab per tap
    b_ref : (1, C_out)
    o_ref : (1, R_out, C_out)   row-flattened output (cropped in the wrapper)
    xs_ref: VMEM scratch (P, R_in, C_in)
    """
    x = x_ref[0]
    if apply_act:
        # LeakyReLU commutes with the reflection pad (pure elementwise), so it is
        # applied here, after padding, to the whole staged slab exactly once.
        x = jnp.where(x > 0, x, _NEG_SLOPE * x)
    xs_ref[...] = x

    r_out = o_ref.shape[1]
    c_out = o_ref.shape[2]
    acc = jnp.zeros((r_out, c_out), jnp.float32)
    for t in range(9):  # static unroll: 9 taps -> 9 MXU matmuls
        patch = xs_ref[tap_phase[t], pl.ds(tap_shift[t], r_out), :]
        acc = acc + jnp.dot(patch, w_ref[t], preferred_element_type=jnp.float32)
    o_ref[0] = (acc + b_ref[...]).astype(o_ref.dtype)


# --------------------------------------------------------------------------- #
# Per-layer wrapper: layout prep + pallas_call
# --------------------------------------------------------------------------- #
def _conv3x3_layer(a_nhwc, w_taps, bias, *, stride, apply_act):
    """a_nhwc: (N, H, W, C_in) f32 -> (N, H_out, W_out, C_out) f32."""
    n, h, w, c_in = a_nhwc.shape
    c_out = w_taps.shape[-1]

    # ReflectionPad2d((1,1,1,1)); elementwise LeakyReLU is fused in-kernel.
    ap = jnp.pad(a_nhwc, ((0, 0), (1, 1), (1, 1), (0, 0)), mode="reflect")
    hp, wp = h + 2, w + 2
    taps = [(dy, dx) for dy in range(3) for dx in range(3)]

    if stride == 1:
        h_out, w_out = h, w
        row_w = wp                          # row stride of the flattened grid
        r_out = h_out * row_w               # extra columns are garbage, cropped below
        tap_phase = tuple(0 for _ in taps)
        tap_shift = tuple(dy * row_w + dx for dy, dx in taps)
        x_flat = ap.reshape(n, 1, hp * wp, c_in)
        nat_rows = hp * wp
    else:  # stride == 2: polyphase split so every tap is a contiguous shifted read
        h_out = (hp - 3) // 2 + 1
        w_out = (wp - 3) // 2 + 1
        hpe, wpe = _round_up(hp, 2), _round_up(wp, 2)
        ape = jnp.pad(ap, ((0, 0), (0, hpe - hp), (0, wpe - wp), (0, 0)))
        hq, wq = hpe // 2, wpe // 2
        phases = jnp.stack(
            [ape[:, a::2, b::2, :] for a in range(2) for b in range(2)], axis=1)
        x_flat = phases.reshape(n, 4, hq * wq, c_in)
        row_w = wq
        r_out = h_out * row_w
        tap_phase = tuple((dy % 2) * 2 + (dx % 2) for dy, dx in taps)
        tap_shift = tuple((dy // 2) * row_w + (dx // 2) for dy, dx in taps)
        nat_rows = hq * wq

    # Pad flattened rows so the most-shifted tap never reads out of bounds.
    r_in = _round_up(max(nat_rows, r_out + max(tap_shift)), 8)
    x_flat = jnp.pad(x_flat, ((0, 0), (0, 0), (0, r_in - nat_rows), (0, 0)))
    p = x_flat.shape[1]

    kernel = functools.partial(_conv3x3_layer_kernel, apply_act, tap_phase, tap_shift)

    out_flat = pl.pallas_call(
        kernel,
        out_shape=jax.ShapeDtypeStruct((n, r_out, c_out), jnp.float32),
        grid_spec=pltpu.PrefetchScalarGridSpec(
            num_scalar_prefetch=0,
            grid=(n,),
            in_specs=[
                pl.BlockSpec((1, p, r_in, c_in), lambda i: (i, 0, 0, 0)),
                pl.BlockSpec((9, c_in, c_out), lambda i: (0, 0, 0)),
                pl.BlockSpec((1, c_out), lambda i: (0, 0)),
            ],
            out_specs=pl.BlockSpec((1, r_out, c_out), lambda i: (i, 0, 0)),
            scratch_shapes=[pltpu.VMEM((p, r_in, c_in), jnp.float32)],
        ),
        compiler_params=pltpu.CompilerParams(
            dimension_semantics=("parallel",)),
    )(x_flat, w_taps, bias.reshape(1, c_out))

    out = out_flat.reshape(n, h_out, row_w, c_out)[:, :, :w_out, :]
    return out


# --------------------------------------------------------------------------- #
# Parameters / model
# --------------------------------------------------------------------------- #
def _weight_norm_taps(v, g):
    """PyTorch weight_norm (dim=0): w = g * v / ||v||; reshape to (9, C_in, C_out)."""
    norm = jnp.sqrt(jnp.sum(v * v, axis=(1, 2, 3), keepdims=True))
    w = v * (g.reshape(-1, 1, 1, 1) / norm)          # (C_out, C_in, 3, 3)
    return jnp.transpose(w, (2, 3, 1, 0)).reshape(9, v.shape[1], v.shape[0])


def init_params(key, in_channels, hidden_channels=512):
    chans = [in_channels,
             hidden_channels // 32, hidden_channels // 16, hidden_channels // 8,
             hidden_channels // 4, hidden_channels // 2, hidden_channels, 1]
    strides = [1, 2, 1, 2, 1, 2, 1]
    params = []
    for li in range(7):
        c_in, c_out = chans[li], chans[li + 1]
        key, kv, kg, kb = jax.random.split(key, 4)
        v = jax.random.normal(kv, (c_out, c_in, 3, 3), jnp.float32) / jnp.sqrt(9.0 * c_in)
        # weight_norm init g = ||v||, perturbed so the g*v/||v|| path is non-trivial.
        g = jnp.sqrt(jnp.sum(v * v, axis=(1, 2, 3))) * (
            1.0 + 0.1 * jax.random.normal(kg, (c_out,), jnp.float32))
        b = 0.01 * jax.random.normal(kb, (c_out,), jnp.float32)
        params.append(dict(v=v, g=g, b=b, stride=strides[li]))
    return params


def frequence_discriminator_forward(x_nchw, params):
    """Pallas forward pass. Returns (x, hiddens[:-1]) in NCHW, like the PyTorch module."""
    a = jnp.transpose(x_nchw, (0, 2, 3, 1)).astype(jnp.float32)   # NHWC (C in lanes)
    hiddens = []
    for li, prm in enumerate(params):
        w_taps = _weight_norm_taps(prm["v"], prm["g"])
        a = _conv3x3_layer(a, w_taps, prm["b"],
                           stride=prm["stride"], apply_act=(li > 0))
        hiddens.append(a)
    to_nchw = lambda t: jnp.transpose(t, (0, 3, 1, 2))
    return to_nchw(a), [to_nchw(h) for h in hiddens[:-1]]


# --------------------------------------------------------------------------- #
# Plain-JAX reference (same math as the PyTorch module)
# --------------------------------------------------------------------------- #
def _reference_forward(x_nchw, params):
    a = x_nchw.astype(jnp.float32)
    hiddens = []
    for li, prm in enumerate(params):
        if li > 0:
            a = jnp.where(a > 0, a, _NEG_SLOPE * a)
        ap = jnp.pad(a, ((0, 0), (0, 0), (1, 1), (1, 1)), mode="reflect")
        norm = jnp.sqrt(jnp.sum(prm["v"] ** 2, axis=(1, 2, 3), keepdims=True))
        w = prm["v"] * (prm["g"].reshape(-1, 1, 1, 1) / norm)
        a = jax.lax.conv_general_dilated(
            ap, w, window_strides=(prm["stride"], prm["stride"]), padding="VALID",
            dimension_numbers=("NCHW", "OIHW", "NCHW"),
            precision=jax.lax.Precision.HIGHEST)
        a = a + prm["b"].reshape(1, -1, 1, 1)
        hiddens.append(a)
    return a, hiddens[:-1]


if __name__ == "__main__":
    key = jax.random.PRNGKey(0)
    k_params, k_x = jax.random.split(key)

    in_channels, hidden_channels = 4, 64          # small example config
    params = init_params(k_params, in_channels, hidden_channels)
    x = jax.random.normal(k_x, (2, in_channels, 16, 16), jnp.float32)

    out, hiddens = frequence_discriminator_forward(x, params)
    jax.block_until_ready((out, hiddens))

    ref_out, ref_hiddens = _reference_forward(x, params)
    for got, want in list(zip(hiddens, ref_hiddens)) + [(out, ref_out)]:
        assert got.shape == want.shape, (got.shape, want.shape)
        assert jnp.allclose(got, want, rtol=5e-2, atol=5e-3), \
            float(jnp.max(jnp.abs(got - want)))

    print("KERNEL_OK")
</pallas_src>

<mosaic_0001>
module attributes {stable_mosaic.version = 11 : i64} {
  func.func @_conv3x3_layer_kernel(%arg0: i32, %arg1: memref<1x1x328x4xf32, #tpu.memory_space<vmem>>, %arg2: memref<9x4x2xf32, #tpu.memory_space<vmem>>, %arg3: memref<1x2xf32, #tpu.memory_space<vmem>>, %arg4: memref<1x288x2xf32, #tpu.memory_space<vmem>>, %arg5: memref<1x328x4xf32, #tpu.memory_space<vmem>>) attributes {dimension_semantics = [#tpu.dimension_semantics<parallel>], iteration_bounds = array<i64: 2>, scalar_prefetch = 0 : i64, scratch_operands = 1 : i64, tpu.core_type = #tpu.core_type<tc>, window_params = [{transform_indices = @transform_0, window_bounds = array<i64: 1, 1, 328, 4>}, {pipeline_mode = #tpu.pipeline_mode<synchronous>, transform_indices = @transform_1, window_bounds = array<i64: 9, 4, 2>}, {pipeline_mode = #tpu.pipeline_mode<synchronous>, transform_indices = @transform_2, window_bounds = array<i64: 1, 2>}, {transform_indices = @transform_3, window_bounds = array<i64: 1, 288, 2>}]} {
    %c0 = arith.constant 0 : index
    %c0_0 = arith.constant 0 : index
    %c0_1 = arith.constant 0 : index
    %c0_2 = arith.constant 0 : index
    %0 = vector.load %arg1[%c0, %c0_0, %c0_1, %c0_2] : memref<1x1x328x4xf32, #tpu.memory_space<vmem>>, vector<1x1x328x4xf32>
    %1 = vector.shape_cast %0 : vector<1x1x328x4xf32> to vector<1x328x4xf32>
    %c0_3 = arith.constant 0 : index
    %c0_4 = arith.constant 0 : index
    %c0_5 = arith.constant 0 : index
    %2 = vector.load %arg5[%c0_3, %c0_4, %c0_5] : memref<1x328x4xf32, #tpu.memory_space<vmem>>, vector<1x328x4xf32>
    tpu.vector_store %arg5[%c0_3, %c0_4, %c0_5], %1 {strides = array<i32>} : memref<1x328x4xf32, #tpu.memory_space<vmem>>, vector<1x328x4xf32>,
    %cst = arith.constant 0.000000e+00 : f32
    %3 = vector.broadcast %cst : f32 to vector<288x2xf32>
    %c0_6 = arith.constant 0 : index
    %c0_7 = arith.constant 0 : index
    %c0_8 = arith.constant 0 : index
    %4 = vector.load %arg5[%c0_6, %c0_7, %c0_8] : memref<1x328x4xf32, #tpu.memory_space<vmem>>, vector<1x288x4xf32>
    %5 = vector.shape_cast %4 : vector<1x288x4xf32> to vector<288x4xf32>
    %c0_9 = arith.constant 0 : index
    %c0_10 = arith.constant 0 : index
    %c0_11 = arith.constant 0 : index
    %6 = vector.load %arg2[%c0_9, %c0_10, %c0_11] : memref<9x4x2xf32, #tpu.memory_space<vmem>>, vector<1x4x2xf32>
    %7 = vector.shape_cast %6 : vector<1x4x2xf32> to vector<4x2xf32>
    %cst_12 = arith.constant dense<0.000000e+00> : vector<288x2xf32>
    %8 = tpu.matmul %5, %7, %cst_12 {dimension_numbers = #tpu.dot_dimension_numbers<[1], [0], [0], [1], [0, 0, 1, 1], [], []>} : vector<288x4xf32>, vector<4x2xf32>, vector<288x2xf32> -> vector<288x2xf32>
    %9 = arith.addf %3, %8 : vector<288x2xf32>
    %c0_13 = arith.constant 0 : index
    %c1 = arith.constant 1 : index
    %c0_14 = arith.constant 0 : index
    %10 = vector.load %arg5[%c0_13, %c1, %c0_14] : memref<1x328x4xf32, #tpu.memory_space<vmem>>, vector<1x288x4xf32>
    %11 = vector.shape_cast %10 : vector<1x288x4xf32> to vector<288x4xf32>
    %c1_15 = arith.constant 1 : index
    %c0_16 = arith.constant 0 : index
    %c0_17 = arith.constant 0 : index
    %12 = vector.load %arg2[%c1_15, %c0_16, %c0_17] : memref<9x4x2xf32, #tpu.memory_space<vmem>>, vector<1x4x2xf32>
    %13 = vector.shape_cast %12 : vector<1x4x2xf32> to vector<4x2xf32>
    %cst_18 = arith.constant dense<0.000000e+00> : vector<288x2xf32>
    %14 = tpu.matmul %11, %13, %cst_18 {dimension_numbers = #tpu.dot_dimension_numbers<[1], [0], [0], [1], [0, 0, 1, 1], [], []>} : vector<288x4xf32>, vector<4x2xf32>, vector<288x2xf32> -> vector<288x2xf32>
    %15 = arith.addf %9, %14 : vector<288x2xf32>
    %c0_19 = arith.constant 0 : index
    %c2 = arith.constant 2 : index
    %c0_20 = arith.constant 0 : index
    %16 = vector.load %arg5[%c0_19, %c2, %c0_20] : memref<1x328x4xf32, #tpu.memory_space<vmem>>, vector<1x288x4xf32>
    %17 = vector.shape_cast %16 : vector<1x288x4xf32> to vector<288x4xf32>
    %c2_21 = arith.constant 2 : index
    %c0_22 = arith.constant 0 : index
    %c0_23 = arith.constant 0 : index
    %18 = vector.load %arg2[%c2_21, %c0_22, %c0_23] : memref<9x4x2xf32, #tpu.memory_space<vmem>>, vector<1x4x2xf32>
    %19 = vector.shape_cast %18 : vector<1x4x2xf32> to vector<4x2xf32>
    %cst_24 = arith.constant dense<0.000000e+00> : vector<288x2xf32>
    %20 = tpu.matmul %17, %19, %cst_24 {dimension_numbers = #tpu.dot_dimension_numbers<[1], [0], [0], [1], [0, 0, 1, 1], [], []>} : vector<288x4xf32>, vector<4x2xf32>, vector<288x2xf32> -> vector<288x2xf32>
    %21 = arith.addf %15, %20 : vector<288x2xf32>
    %c0_25 = arith.constant 0 : index
    %c18 = arith.constant 18 : index
    %c0_26 = arith.constant 0 : index
    %22 = vector.load %arg5[%c0_25, %c18, %c0_26] : memref<1x328x4xf32, #tpu.memory_space<vmem>>, vector<1x288x4xf32>
    %23 = vector.shape_cast %22 : vector<1x288x4xf32> to vector<288x4xf32>
    %c3 = arith.constant 3 : index
    %c0_27 = arith.constant 0 : index
    %c0_28 = arith.constant 0 : index
    %24 = vector.load %arg2[%c3, %c0_27, %c0_28] : memref<9x4x2xf32, #tpu.memory_space<vmem>>, vector<1x4x2xf32>
    %25 = vector.shape_cast %24 : vector<1x4x2xf32> to vector<4x2xf32>
    %cst_29 = arith.constant dense<0.000000e+00> : vector<288x2xf32>
    %26 = tpu.matmul %23, %25, %cst_29 {dimension_numbers = #tpu.dot_dimension_numbers<[1], [0], [0], [1], [0, 0, 1, 1], [], []>} : vector<288x4xf32>, vector<4x2xf32>, vector<288x2xf32> -> vector<288x2xf32>
    %27 = arith.addf %21, %26 : vector<288x2xf32>
    %c0_30 = arith.constant 0 : index
    %c19 = arith.constant 19 : index
    %c0_31 = arith.constant 0 : index
    %28 = vector.load %arg5[%c0_30, %c19, %c0_31] : memref<1x328x4xf32, #tpu.memory_space<vmem>>, vector<1x288x4xf32>
    %29 = vector.shape_cast %28 : vector<1x288x4xf32> to vector<288x4xf32>
    %c4 = arith.constant 4 : index
    %c0_32 = arith.constant 0 : index
    %c0_33 = arith.constant 0 : index
    %30 = vector.load %arg2[%c4, %c0_32, %c0_33] : memref<9x4x2xf32, #tpu.memory_space<vmem>>, vector<1x4x2xf32>
    %31 = vector.shape_cast %30 : vector<1x4x2xf32> to vector<4x2xf32>
    %cst_34 = arith.constant dense<0.000000e+00> : vector<288x2xf32>
    %32 = tpu.matmul %29, %31, %cst_34 {dimension_numbers = #tpu.dot_dimension_numbers<[1], [0], [0], [1], [0, 0, 1, 1], [], []>} : vector<288x4xf32>, vector<4x2xf32>, vector<288x2xf32> -> vector<288x2xf32>
    %33 = arith.addf %27, %32 : vector<288x2xf32>
    %c0_35 = arith.constant 0 : index
    %c20 = arith.constant 20 : index
    %c0_36 = arith.constant 0 : index
    %34 = vector.load %arg5[%c0_35, %c20, %c0_36] : memref<1x328x4xf32, #tpu.memory_space<vmem>>, vector<1x288x4xf32>
    %35 = vector.shape_cast %34 : vector<1x288x4xf32> to vector<288x4xf32>
    %c5 = arith.constant 5 : index
    %c0_37 = arith.constant 0 : index
    %c0_38 = arith.constant 0 : index
    %36 = vector.load %arg2[%c5, %c0_37, %c0_38] : memref<9x4x2xf32, #tpu.memory_space<vmem>>, vector<1x4x2xf32>
    %37 = vector.shape_cast %36 : vector<1x4x2xf32> to vector<4x2xf32>
    %cst_39 = arith.constant dense<0.000000e+00> : vector<288x2xf32>
    %38 = tpu.matmul %35, %37, %cst_39 {dimension_numbers = #tpu.dot_dimension_numbers<[1], [0], [0], [1], [0, 0, 1, 1], [], []>} : vector<288x4xf32>, vector<4x2xf32>, vector<288x2xf32> -> vector<288x2xf32>
    %39 = arith.addf %33, %38 : vector<288x2xf32>
    %c0_40 = arith.constant 0 : index
    %c36 = arith.constant 36 : index
    %c0_41 = arith.constant 0 : index
    %40 = vector.load %arg5[%c0_40, %c36, %c0_41] : memref<1x328x4xf32, #tpu.memory_space<vmem>>, vector<1x288x4xf32>
    %41 = vector.shape_cast %40 : vector<1x288x4xf32> to vector<288x4xf32>
    %c6 = arith.constant 6 : index
    %c0_42 = arith.constant 0 : index
    %c0_43 = arith.constant 0 : index
    %42 = vector.load %arg2[%c6, %c0_42, %c0_43] : memref<9x4x2xf32, #tpu.memory_space<vmem>>, vector<1x4x2xf32>
    %43 = vector.shape_cast %42 : vector<1x4x2xf32> to vector<4x2xf32>
    %cst_44 = arith.constant dense<0.000000e+00> : vector<288x2xf32>
    %44 = tpu.matmul %41, %43, %cst_44 {dimension_numbers = #tpu.dot_dimension_numbers<[1], [0], [0], [1], [0, 0, 1, 1], [], []>} : vector<288x4xf32>, vector<4x2xf32>, vector<288x2xf32> -> vector<288x2xf32>
    %45 = arith.addf %39, %44 : vector<288x2xf32>
    %c0_45 = arith.constant 0 : index
    %c37 = arith.constant 37 : index
    %c0_46 = arith.constant 0 : index
    %46 = vector.load %arg5[%c0_45, %c37, %c0_46] : memref<1x328x4xf32, #tpu.memory_space<vmem>>, vector<1x288x4xf32>
    %47 = vector.shape_cast %46 : vector<1x288x4xf32> to vector<288x4xf32>
    %c7 = arith.constant 7 : index
    %c0_47 = arith.constant 0 : index
    %c0_48 = arith.constant 0 : index
    %48 = vector.load %arg2[%c7, %c0_47, %c0_48] : memref<9x4x2xf32, #tpu.memory_space<vmem>>, vector<1x4x2xf32>
    %49 = vector.shape_cast %48 : vector<1x4x2xf32> to vector<4x2xf32>
    %cst_49 = arith.constant dense<0.000000e+00> : vector<288x2xf32>
    %50 = tpu.matmul %47, %49, %cst_49 {dimension_numbers = #tpu.dot_dimension_numbers<[1], [0], [0], [1], [0, 0, 1, 1], [], []>} : vector<288x4xf32>, vector<4x2xf32>, vector<288x2xf32> -> vector<288x2xf32>
    %51 = arith.addf %45, %50 : vector<288x2xf32>
    %c0_50 = arith.constant 0 : index
    %c38 = arith.constant 38 : index
    %c0_51 = arith.constant 0 : index
    %52 = vector.load %arg5[%c0_50, %c38, %c0_51] : memref<1x328x4xf32, #tpu.memory_space<vmem>>, vector<1x288x4xf32>
    %53 = vector.shape_cast %52 : vector<1x288x4xf32> to vector<288x4xf32>
    %c8 = arith.constant 8 : index
    %c0_52 = arith.constant 0 : index
    %c0_53 = arith.constant 0 : index
    %54 = vector.load %arg2[%c8, %c0_52, %c0_53] : memref<9x4x2xf32, #tpu.memory_space<vmem>>, vector<1x4x2xf32>
    %55 = vector.shape_cast %54 : vector<1x4x2xf32> to vector<4x2xf32>
    %cst_54 = arith.constant dense<0.000000e+00> : vector<288x2xf32>
    %56 = tpu.matmul %53, %55, %cst_54 {dimension_numbers = #tpu.dot_dimension_numbers<[1], [0], [0], [1], [0, 0, 1, 1], [], []>} : vector<288x4xf32>, vector<4x2xf32>, vector<288x2xf32> -> vector<288x2xf32>
    %57 = arith.addf %51, %56 : vector<288x2xf32>
    %c0_55 = arith.constant 0 : index
    %c0_56 = arith.constant 0 : index
    %58 = vector.load %arg3[%c0_55, %c0_56] : memref<1x2xf32, #tpu.memory_space<vmem>>, vector<1x2xf32>
    %59 = vector.broadcast %58 : vector<1x2xf32> to vector<288x2xf32>
    %60 = arith.addf %57, %59 : vector<288x2xf32>
    %c0_57 = arith.constant 0 : index
    %c0_58 = arith.constant 0 : index
    %c0_59 = arith.constant 0 : index
    %61 = vector.load %arg4[%c0_57, %c0_58, %c0_59] : memref<1x288x2xf32, #tpu.memory_space<vmem>>, vector<1x288x2xf32>
    %62 = vector.shape_cast %61 : vector<1x288x2xf32> to vector<288x2xf32>
    %63 = vector.shape_cast %60 : vector<288x2xf32> to vector<1x288x2xf32>
    tpu.vector_store %arg4[%c0_57, %c0_58, %c0_59], %63 {strides = array<i32>} : memref<1x288x2xf32, #tpu.memory_space<vmem>>, vector<1x288x2xf32>,
    return
  }
  func.func @transform_0(%arg0: i32) -> (i32, i32, i32, i32) {
    %c0_i32 = arith.constant 0 : i32
    %c0_i32_0 = arith.constant 0 : i32
    %c0_i32_1 = arith.constant 0 : i32
    %c0_i32_2 = arith.constant 0 : i32
    return %arg0, %c0_i32, %c0_i32_0, %c0_i32_1 : i32, i32, i32, i32
  }
  func.func @transform_1(%arg0: i32) -> (i32, i32, i32) {
    %c0_i32 = arith.constant 0 : i32
    %c0_i32_0 = arith.constant 0 : i32
    %c0_i32_1 = arith.constant 0 : i32
    %c0_i32_2 = arith.constant 0 : i32
    return %c0_i32, %c0_i32_0, %c0_i32_1 : i32, i32, i32
  }
  func.func @transform_2(%arg0: i32) -> (i32, i32) {
    %c0_i32 = arith.constant 0 : i32
    %c0_i32_0 = arith.constant 0 : i32
    %c0_i32_1 = arith.constant 0 : i32
    return %c0_i32, %c0_i32_0 : i32, i32
  }
  func.func @transform_3(%arg0: i32) -> (i32, i32, i32) {
    %c0_i32 = arith.constant 0 : i32
    %c0_i32_0 = arith.constant 0 : i32
    %c0_i32_1 = arith.constant 0 : i32
    return %arg0, %c0_i32, %c0_i32_0 : i32, i32, i32
  }
}

</mosaic_0001>

<llo_original>
// kernel: tpu_custom_call.1
$region0: #{tpu_custom_call.1}
  #allocation0 [shape = 'u32[]', space=smem, size = 0x4, offset = 0x4, fixed_abs, tag = 'smem constant byte address 0x4 - core index']
  #allocation1 [shape = 'u32[144,128]{1,0:T(1,128)}', space=vmem, size = 0x12000, scoped, tag = 'internal scratch']
  #allocation2 [shape = 'f32[1,328,4]{2,1,0:T(8,128)}', space=vmem, size = 0x29000, scoped, tag = 'scratch operand']
  %s0 = inlined_call_operand.vmem [shape: f32[2,1,328,4], index: 0, kind: input, shape index: {}]
  %s1 = inlined_call_operand.vmem [shape: f32[9,4,2], index: 1, kind: input, shape index: {}]
  %s2 = inlined_call_operand.vmem [shape: f32[1,2], index: 2, kind: input, shape index: {}]
  %s3 = inlined_call_operand.vmem [shape: f32[2,288,2], index: 3, kind: output, shape index: {}]
  %s4 = sld [smem:[#allocation0]]
  $region45: #{tpu_custom_call.1} parent=0
    _
  %s6 = ssub.s32 1, %s4
  %s7 = scalar_select 0, %s6, %s4
  loop: start=0, step=1, limit=4
  $region2: #{tpu_custom_call.1} parent=0 // loop_pre_header
    _
  $region3: #{tpu_custom_call.1} parent=0 // loop_header
    %s9 = sphi 0, %s13
    %p10 = scmp.ge.s32.totalorder %s9, 4
    %s19 = sphi 0, %s21
    %s22 = sphi 0, %s19
    %s23 = sphi 0, %s22
    %s39 = sphi 0, %s23
    %s43 = sphi 0, %s43
    %s45 = sphi 0, %s43
    %s46 = sphi 0, %s45
    %s60 = sphi 0, %s46
    %s64 = sphi 0, %s64
    %s66 = sphi 0, %s64
    %s67 = sphi 0, %s66
    %s81 = sphi 0, %s67
    %s87 = sphi 0, %s89
    %s90 = sphi 0, %s87
    %s91 = sphi 0, %s90
    %s107 = sphi 0, %s91
  $region4: #{tpu_custom_call.1} parent=0 // loop_header_branch
    %12 = sbr.rel (%p10) target = $region8
  $region5: #{tpu_custom_call.1} parent=0 // loop_body
    %s14 = ssub.s32 %s9, 1
    %s15 = ssub.s32 %s9, 2
    %s16 = sadd.s32 %s9, 1
    %s17 = ssub.s32 %s9, %s16
    %p18 = scmp.eq.s32.totalorder %s17, 0
    %s20 = sadd.s32 %s19, 1
    %s21 = scalar_select %p18, %s19, %s20
    %p24 = pneg %p18
    %p25 = scmp.eq.s32.totalorder %s9, 1
    %p26 = por %p24, %p25
    %p27 = scmp.ne.s32.totalorder %s19, %s22
    %p28 = scmp.eq.s32.totalorder %s9, 0
    %p29 = por %p27, %p28
    %p30 = scmp.ne.s32.totalorder %s19, %s22
    %p31 = scmp.eq.s32.totalorder %s14, 1
    %p32 = por %p30, %p31
    %p33 = scmp.ne.s32.totalorder %s22, %s23
    %p34 = scmp.eq.s32.totalorder %s14, 0
    %p35 = por %p33, %p34
    %p36 = scmp.ne.s32.totalorder %s22, %s23
    %p37 = scmp.eq.s32.totalorder %s15, 1
    %p38 = por %p36, %p37
    %p40 = scmp.ne.s32.totalorder %s23, %s39
    %p41 = scmp.eq.s32.totalorder %s15, 0
    %p42 = por %p40, %p41
    %s44 = sadd.s32 %s43, 1
    %p47 = scmp.eq.s32.totalorder %s9, 1
    %p48 = scmp.ne.s32.totalorder %s43, %s45
    %p49 = scmp.eq.s32.totalorder %s9, 0
    %p50 = por %p48, %p49
    %p51 = scmp.ne.s32.totalorder %s43, %s45
    %p52 = scmp.eq.s32.totalorder %s14, 1
    %p53 = por %p51, %p52
    %p54 = scmp.ne.s32.totalorder %s45, %s46
    %p55 = scmp.eq.s32.totalorder %s14, 0
    %p56 = por %p54, %p55
    %p57 = scmp.ne.s32.totalorder %s45, %s46
    %p58 = scmp.eq.s32.totalorder %s15, 1
    %p59 = por %p57, %p58
    %p61 = scmp.ne.s32.totalorder %s46, %s60
    %p62 = scmp.eq.s32.totalorder %s15, 0
    %p63 = por %p61, %p62
    %s65 = sadd.s32 %s64, 1
    %p68 = scmp.eq.s32.totalorder %s9, 1
    %p69 = scmp.ne.s32.totalorder %s64, %s66
    %p70 = scmp.eq.s32.totalorder %s9, 0
    %p71 = por %p69, %p70
    %p72 = scmp.ne.s32.totalorder %s64, %s66
    %p73 = scmp.eq.s32.totalorder %s14, 1
    %p74 = por %p72, %p73
    %p75 = scmp.ne.s32.totalorder %s66, %s67
    %p76 = scmp.eq.s32.totalorder %s14, 0
    %p77 = por %p75, %p76
    %p78 = scmp.ne.s32.totalorder %s66, %s67
    %p79 = scmp.eq.s32.totalorder %s15, 1
    %p80 = por %p78, %p79
    %p82 = scmp.ne.s32.totalorder %s67, %s81
    %p83 = scmp.eq.s32.totalorder %s15, 0
    %p84 = por %p82, %p83
    %s85 = ssub.s32 %s9, %s16
    %p86 = scmp.eq.s32.totalorder %s85, 0
    %s88 = sadd.s32 %s87, 1
    %s89 = scalar_select %p86, %s87, %s88
    %p92 = pneg %p86
    %p93 = scmp.eq.s32.totalorder %s9, 1
    %p94 = por %p92, %p93
    %p95 = scmp.ne.s32.totalorder %s87, %s90
    %p96 = scmp.eq.s32.totalorder %s9, 0
    %p97 = por %p95, %p96
    %p98 = scmp.ne.s32.totalorder %s87, %s90
    %p99 = scmp.eq.s32.totalorder %s14, 1
    %p100 = por %p98, %p99
    %p101 = scmp.ne.s32.totalorder %s90, %s91
    %p102 = scmp.eq.s32.totalorder %s14, 0
    %p103 = por %p101, %p102
    %p104 = scmp.ne.s32.totalorder %s90, %s91
    %p105 = scmp.eq.s32.totalorder %s15, 1
    %p106 = por %p104, %p105
    %p108 = scmp.ne.s32.totalorder %s91, %s107
    %p109 = scmp.eq.s32.totalorder %s15, 0
    %p110 = por %p108, %p109
    %p111 = scmp.le.s32.totalorder 1, %s9
    %p112 = scmp.lt.s32.totalorder %s9, 3
    %p113 = pnand %p111, %p112
    %p114 = pneg %p113
    // Predicated region
    $region9: #{tpu_custom_call.1} parent=5 // pred_check
      _
    $region10: #{tpu_custom_call.1} parent=5 // pred_check_branch
      %116 = sbr.rel (%p113) target = $region12
    $region11: #{tpu_custom_call.1} parent=5 // pred_region
      %s117 = ssub.s32 %s9, 1
      // Predicated region
      $region13: #{tpu_custom_call.1} parent=11 // pred_check
        %p118 = pneg %p56
      $region14: #{tpu_custom_call.1} parent=11 // pred_check_branch
        %120 = sbr.rel (%p118) target = $region16
      $region15: #{tpu_custom_call.1} parent=11 // pred_region
        _
      $region16: #{tpu_custom_call.1} parent=11 // pred_fallthru
        _
      // Predicated region
      $region17: #{tpu_custom_call.1} parent=11 // pred_check
        %p121 = pneg %p77
      $region18: #{tpu_custom_call.1} parent=11 // pred_check_branch
        %123 = sbr.rel (%p121) target = $region20
      $region19: #{tpu_custom_call.1} parent=11 // pred_region
        _
      $region20: #{tpu_custom_call.1} parent=11 // pred_fallthru
        _
    $region12: #{tpu_custom_call.1} parent=5 // pred_fallthru
      _
    %p124 = scmp.lt.s32.totalorder %s9, 2
    // Predicated region
    $region21: #{tpu_custom_call.1} parent=5 // pred_check
      %p125 = pneg %p124
    $region22: #{tpu_custom_call.1} parent=5 // pred_check_branch
      %127 = sbr.rel (%p125) target = $region24
    $region23: #{tpu_custom_call.1} parent=5 // pred_region
      // Predicated region
      $region25: #{tpu_custom_call.1} parent=23 // pred_check
        %p128 = pneg %p29
      $region26: #{tpu_custom_call.1} parent=23 // pred_check_branch
        %130 = sbr.rel (%p128) target = $region28
      $region27: #{tpu_custom_call.1} parent=23 // pred_region
        %p131 = scmp.lt.s32.totalorder %s9, 1
        %s132 = scalar_select %p131, %s9, 1
        %s133 = smul.addr %s132, 41
        %s134 = smul.addr %s133, 8
        %s135 = scalar_lea.vmem %s0, %s134
      $region28: #{tpu_custom_call.1} parent=23 // pred_fallthru
        _
    $region24: #{tpu_custom_call.1} parent=5 // pred_fallthru
      _
    %p136 = scmp.le.s32.totalorder 1, %s9
    %p137 = scmp.lt.s32.totalorder %s9, 3
    %p138 = pnand %p136, %p137
    %p139 = pneg %p138
    // Predicated region
    $region29: #{tpu_custom_call.1} parent=5 // pred_check
      _
    $region30: #{tpu_custom_call.1} parent=5 // pred_check_branch
      %141 = sbr.rel (%p138) target = $region32
    $region31: #{tpu_custom_call.1} parent=5 // pred_region
      %s142 = ssub.s32 %s9, 1
      %p143 = scmp.lt.s32.totalorder %s14, 1
      %s144 = scalar_select %p143, %s14, 1
      %s145 = smul.addr %s144, 41
      %s146 = smul.addr %s145, 8
      %s147 = scalar_lea.vmem %s0, %s146
      %p148 = pneg %p35
      %p149 = pneg %p32
      %p150 = pneg %p56
      %p151 = pneg %p53
      %p152 = pneg %p77
      %p153 = pneg %p74
      %p154 = pneg %p103
      %p155 = pneg %p100
      %p156 = scmp.lt.s32.totalorder %s14, 1
      %s157 = scalar_select %p156, %s14, 1
      %s158 = smul.addr %s157, 36
      %s159 = smul.addr %s158, 8
      %s160 = scalar_lea.vmem %s3, %s159
      %p161 = scmp.lt.s32.totalorder %s14, 1
      %s162 = scalar_select %p161, %s14, 1
      %s163 = smul.addr %s162, 41
      %s164 = smul.addr %s163, 8
      %s165 = scalar_lea.vmem %s0, %s164
      %p166 = scmp.lt.s32.totalorder %s14, 1
      %s167 = scalar_select %p166, %s14, 1
      %s168 = smul.addr %s167, 36
      %s169 = smul.addr %s168, 8
      %s170 = scalar_lea.vmem %s3, %s169
      %v171 = vld [vmem:[%s165] sm:$0xff]
      %v172 = vld [vmem:[%s165 + $0x8] sm:$0xff]
      %v173 = vld [vmem:[%s165 + $0x10] sm:$0xff]
      %v174 = vld [vmem:[%s165 + $0x18] sm:$0xff]
      %v175 = vld [vmem:[%s165 + $0x20] sm:$0xff]
      %v176 = vld [vmem:[%s165 + $0x28] sm:$0xff]
      %v177 = vld [vmem:[%s165 + $0x30] sm:$0xff]
      %v178 = vld [vmem:[%s165 + $0x38] sm:$0xff]
      %v179 = vld [vmem:[%s165 + $0x40] sm:$0xff]
      %v180 = vld [vmem:[%s165 + $0x48] sm:$0xff]
      %v181 = vld [vmem:[%s165 + $0x50] sm:$0xff]
      %v182 = vld [vmem:[%s165 + $0x58] sm:$0xff]
      %v183 = vld [vmem:[%s165 + $0x60] sm:$0xff]
      %v184 = vld [vmem:[%s165 + $0x68] sm:$0xff]
      %v185 = vld [vmem:[%s165 + $0x70] sm:$0xff]
      %v186 = vld [vmem:[%s165 + $0x78] sm:$0xff]
      %v187 = vld [vmem:[%s165 + $0x80] sm:$0xff]
      %v188 = vld [vmem:[%s165 + $0x88] sm:$0xff]
      %v189 = vld [vmem:[%s165 + $0x90] sm:$0xff]
      %v190 = vld [vmem:[%s165 + $0x98] sm:$0xff]
      %v191 = vld [vmem:[%s165 + $0xa0] sm:$0xff]
      %v192 = vld [vmem:[%s165 + $0xa8] sm:$0xff]
      %v193 = vld [vmem:[%s165 + $0xb0] sm:$0xff]
      %v194 = vld [vmem:[%s165 + $0xb8] sm:$0xff]
      %v195 = vld [vmem:[%s165 + $0xc0] sm:$0xff]
      %v196 = vld [vmem:[%s165 + $0xc8] sm:$0xff]
      %v197 = vld [vmem:[%s165 + $0xd0] sm:$0xff]
      %v198 = vld [vmem:[%s165 + $0xd8] sm:$0xff]
      %v199 = vld [vmem:[%s165 + $0xe0] sm:$0xff]
      %v200 = vld [vmem:[%s165 + $0xe8] sm:$0xff]
      %v201 = vld [vmem:[%s165 + $0xf0] sm:$0xff]
      %v202 = vld [vmem:[%s165 + $0xf8] sm:$0xff]
      %v203 = vld [vmem:[%s165 + $0x100] sm:$0xff]
      %v204 = vld [vmem:[%s165 + $0x108] sm:$0xff]
      %v205 = vld [vmem:[%s165 + $0x110] sm:$0xff]
      %v206 = vld [vmem:[%s165 + $0x118] sm:$0xff]
      %v207 = vld [vmem:[%s165 + $0x120] sm:$0xff]
      %v208 = vld [vmem:[%s165 + $0x128] sm:$0xff]
      %v209 = vld [vmem:[%s165 + $0x130] sm:$0xff]
      %v210 = vld [vmem:[%s165 + $0x138] sm:$0xff]
      %v211 = vld [vmem:[%s165 + $0x140] sm:$0xff]
      %vm212 = vcmask 31744
      %213 = vst.msk [vmem:[#allocation2] sm:$0xff] %vm212, %v171
      %214 = vst.msk [vmem:[#allocation2 + $0x8] sm:$0xff] %vm212, %v172
      %215 = vst.msk [vmem:[#allocation2 + $0x10] sm:$0xff] %vm212, %v173
      %216 = vst.msk [vmem:[#allocation2 + $0x18] sm:$0xff] %vm212, %v174
      %217 = vst.msk [vmem:[#allocation2 + $0x20] sm:$0xff] %vm212, %v175
      %218 = vst.msk [vmem:[#allocation2 + $0x28] sm:$0xff] %vm212, %v176
      %219 = vst.msk [vmem:[#allocation2 + $0x30] sm:$0xff] %vm212, %v177
      %220 = vst.msk [vmem:[#allocation2 + $0x38] sm:$0xff] %vm212, %v178
      %221 = vst.msk [vmem:[#allocation2 + $0x40] sm:$0xff] %vm212, %v179
      %222 = vst.msk [vmem:[#allocation2 + $0x48] sm:$0xff] %vm212, %v180
      %223 = vst.msk [vmem:[#allocation2 + $0x50] sm:$0xff] %vm212, %v181
      %224 = vst.msk [vmem:[#allocation2 + $0x58] sm:$0xff] %vm212, %v182
      %225 = vst.msk [vmem:[#allocation2 + $0x60] sm:$0xff] %vm212, %v183
      %226 = vst.msk [vmem:[#allocation2 + $0x68] sm:$0xff] %vm212, %v184
      %227 = vst.msk [vmem:[#allocation2 + $0x70] sm:$0xff] %vm212, %v185
      %228 = vst.msk [vmem:[#allocation2 + $0x78] sm:$0xff] %vm212, %v186
      %229 = vst.msk [vmem:[#allocation2 + $0x80] sm:$0xff] %vm212, %v187
      %230 = vst.msk [vmem:[#allocation2 + $0x88] sm:$0xff] %vm212, %v188
      %231 = vst.msk [vmem:[#allocation2 + $0x90] sm:$0xff] %vm212, %v189
      %232 = vst.msk [vmem:[#allocation2 + $0x98] sm:$0xff] %vm212, %v190
      %233 = vst.msk [vmem:[#allocation2 + $0xa0] sm:$0xff] %vm212, %v191
      %234 = vst.msk [vmem:[#allocation2 + $0xa8] sm:$0xff] %vm212, %v192
      %235 = vst.msk [vmem:[#allocation2 + $0xb0] sm:$0xff] %vm212, %v193
      %236 = vst.msk [vmem:[#allocation2 + $0xb8] sm:$0xff] %vm212, %v194
      %237 = vst.msk [vmem:[#allocation2 + $0xc0] sm:$0xff] %vm212, %v195
      %238 = vst.msk [vmem:[#allocation2 + $0xc8] sm:$0xff] %vm212, %v196
      %239 = vst.msk [vmem:[#allocation2 + $0xd0] sm:$0xff] %vm212, %v197
      %240 = vst.msk [vmem:[#allocation2 + $0xd8] sm:$0xff] %vm212, %v198
      %241 = vst.msk [vmem:[#allocation2 + $0xe0] sm:$0xff] %vm212, %v199
      %242 = vst.msk [vmem:[#allocation2 + $0xe8] sm:$0xff] %vm212, %v200
      %243 = vst.msk [vmem:[#allocation2 + $0xf0] sm:$0xff] %vm212, %v201
      %244 = vst.msk [vmem:[#allocation2 + $0xf8] sm:$0xff] %vm212, %v202
      %245 = vst.msk [vmem:[#allocation2 + $0x100] sm:$0xff] %vm212, %v203
      %246 = vst.msk [vmem:[#allocation2 + $0x108] sm:$0xff] %vm212, %v204
      %247 = vst.msk [vmem:[#allocation2 + $0x110] sm:$0xff] %vm212, %v205
      %248 = vst.msk [vmem:[#allocation2 + $0x118] sm:$0xff] %vm212, %v206
      %249 = vst.msk [vmem:[#allocation2 + $0x120] sm:$0xff] %vm212, %v207
      %250 = vst.msk [vmem:[#allocation2 + $0x128] sm:$0xff] %vm212, %v208
      %251 = vst.msk [vmem:[#allocation2 + $0x130] sm:$0xff] %vm212, %v209
      %252 = vst.msk [vmem:[#allocation2 + $0x138] sm:$0xff] %vm212, %v210
      %253 = vst.msk [vmem:[#allocation2 + $0x140] sm:$0xff] %vm212, %v211
      %v254 = vld [vmem:[#allocation2] sm:$0xff]
      %v255 = vld [vmem:[#allocation2 + $0x8] sm:$0xff]
      %v256 = vld [vmem:[#allocation2 + $0x10] sm:$0xff]
      %v257 = vld [vmem:[#allocation2 + $0x18] sm:$0xff]
      %v258 = vld [vmem:[#allocation2 + $0x20] sm:$0xff]
      %v259 = vld [vmem:[#allocation2 + $0x28] sm:$0xff]
      %v260 = vld [vmem:[#allocation2 + $0x30] sm:$0xff]
      %v261 = vld [vmem:[#allocation2 + $0x38] sm:$0xff]
      %v262 = vld [vmem:[#allocation2 + $0x40] sm:$0xff]
      %v263 = vld [vmem:[#allocation2 + $0x48] sm:$0xff]
      %v264 = vld [vmem:[#allocation2 + $0x50] sm:$0xff]
      %v265 = vld [vmem:[#allocation2 + $0x58] sm:$0xff]
      %v266 = vld [vmem:[#allocation2 + $0x60] sm:$0xff]
      %v267 = vld [vmem:[#allocation2 + $0x68] sm:$0xff]
      %v268 = vld [vmem:[#allocation2 + $0x70] sm:$0xff]
      %v269 = vld [vmem:[#allocation2 + $0x78] sm:$0xff]
      %v270 = vld [vmem:[#allocation2 + $0x80] sm:$0xff]
      %v271 = vld [vmem:[#allocation2 + $0x88] sm:$0xff]
      %v272 = vld [vmem:[#allocation2 + $0x90] sm:$0xff]
      %v273 = vld [vmem:[#allocation2 + $0x98] sm:$0xff]
      %v274 = vld [vmem:[#allocation2 + $0xa0] sm:$0xff]
      %v275 = vld [vmem:[#allocation2 + $0xa8] sm:$0xff]
      %v276 = vld [vmem:[#allocation2 + $0xb0] sm:$0xff]
      %v277 = vld [vmem:[#allocation2 + $0xb8] sm:$0xff]
      %v278 = vld [vmem:[#allocation2 + $0xc0] sm:$0xff]
      %v279 = vld [vmem:[#allocation2 + $0xc8] sm:$0xff]
      %v280 = vld [vmem:[#allocation2 + $0xd0] sm:$0xff]
      %v281 = vld [vmem:[#allocation2 + $0xd8] sm:$0xff]
      %v282 = vld [vmem:[#allocation2 + $0xe0] sm:$0xff]
      %v283 = vld [vmem:[#allocation2 + $0xe8] sm:$0xff]
      %v284 = vld [vmem:[#allocation2 + $0xf0] sm:$0xff]
      %v285 = vld [vmem:[#allocation2 + $0xf8] sm:$0xff]
      %v286 = vld [vmem:[#allocation2 + $0x100] sm:$0xff]
      %v287 = vld [vmem:[#allocation2 + $0x108] sm:$0xff]
      %v288 = vld [vmem:[#allocation2 + $0x110] sm:$0xff]
      %v289 = vld [vmem:[#allocation2 + $0x118] sm:$0xff]
      %v290 = vld [vmem:[%s1] sm:$0xf]
      %v291 = vld [vmem:[#allocation2 + $0x1] sm:$0xff]
      %v292 = vld [vmem:[#allocation2 + $0x9] sm:$0xff]
      %v293 = vld [vmem:[#allocation2 + $0x11] sm:$0xff]
      %v294 = vld [vmem:[#allocation2 + $0x19] sm:$0xff]
      %v295 = vld [vmem:[#allocation2 + $0x21] sm:$0xff]
      %v296 = vld [vmem:[#allocation2 + $0x29] sm:$0xff]
      %v297 = vld [vmem:[#allocation2 + $0x31] sm:$0xff]
      %v298 = vld [vmem:[#allocation2 + $0x39] sm:$0xff]
      %v299 = vld [vmem:[#allocation2 + $0x41] sm:$0xff]
      %v300 = vld [vmem:[#allocation2 + $0x49] sm:$0xff]
      %v301 = vld [vmem:[#allocation2 + $0x51] sm:$0xff]
      %v302 = vld [vmem:[#allocation2 + $0x59] sm:$0xff]
      %v303 = vld [vmem:[#allocation2 + $0x61] sm:$0xff]
      %v304 = vld [vmem:[#allocation2 + $0x69] sm:$0xff]
      %v305 = vld [vmem:[#allocation2 + $0x71] sm:$0xff]
      %v306 = vld [vmem:[#allocation2 + $0x79] sm:$0xff]
      %v307 = vld [vmem:[#allocation2 + $0x81] sm:$0xff]
      %v308 = vld [vmem:[#allocation2 + $0x89] sm:$0xff]
      %v309 = vld [vmem:[#allocation2 + $0x91] sm:$0xff]
      %v310 = vld [vmem:[#allocation2 + $0x99] sm:$0xff]
      %v311 = vld [vmem:[#allocation2 + $0xa1] sm:$0xff]
      %v312 = vld [vmem:[#allocation2 + $0xa9] sm:$0xff]
      %v313 = vld [vmem:[#allocation2 + $0xb1] sm:$0xff]
      %v314 = vld [vmem:[#allocation2 + $0xb9] sm:$0xff]
      %v315 = vld [vmem:[#allocation2 + $0xc1] sm:$0xff]
      %v316 = vld [vmem:[#allocation2 + $0xc9] sm:$0xff]
      %v317 = vld [vmem:[#allocation2 + $0xd1] sm:$0xff]
      %v318 = vld [vmem:[#allocation2 + $0xd9] sm:$0xff]
      %v319 = vld [vmem:[#allocation2 + $0xe1] sm:$0xff]
      %v320 = vld [vmem:[#allocation2 + $0xe9] sm:$0xff]
      %v321 = vld [vmem:[#allocation2 + $0xf1] sm:$0xff]
      %v322 = vld [vmem:[#allocation2 + $0xf9] sm:$0xff]
      %v323 = vld [vmem:[#allocation2 + $0x101] sm:$0xff]
      %v324 = vld [vmem:[#allocation2 + $0x109] sm:$0xff]
      %v325 = vld [vmem:[#allocation2 + $0x111] sm:$0xff]
      %v326 = vld [vmem:[#allocation2 + $0x119] sm:$0xff]
      %s327 = scalar_lea.vmem %s1, 4
      %v328 = vld [vmem:[%s327] sm:$0xf]
      %v330 = vsel %vm212, %v291, 0
      %v333 = vsel %vm212, %v292, 0
      %v336 = vsel %vm212, %v293, 0
      %v339 = vsel %vm212, %v294, 0
      %v342 = vsel %vm212, %v295, 0
      %v345 = vsel %vm212, %v296, 0
      %v348 = vsel %vm212, %v297, 0
      %v351 = vsel %vm212, %v298, 0
      %v354 = vsel %vm212, %v299, 0
      %v357 = vsel %vm212, %v300, 0
      %v360 = vsel %vm212, %v301, 0
      %v363 = vsel %vm212, %v302, 0
      %v366 = vsel %vm212, %v303, 0
      %v369 = vsel %vm212, %v304, 0
      %v372 = vsel %vm212, %v305, 0
      %v375 = vsel %vm212, %v306, 0
      %v378 = vsel %vm212, %v307, 0
      %v381 = vsel %vm212, %v308, 0
      %v384 = vsel %vm212, %v309, 0
      %v387 = vsel %vm212, %v310, 0
      %v390 = vsel %vm212, %v311, 0
      %v393 = vsel %vm212, %v312, 0
      %v396 = vsel %vm212, %v313, 0
      %v399 = vsel %vm212, %v314, 0
      %v402 = vsel %vm212, %v315, 0
      %v405 = vsel %vm212, %v316, 0
      %v408 = vsel %vm212, %v317, 0
      %v411 = vsel %vm212, %v318, 0
      %v414 = vsel %vm212, %v319, 0
      %v417 = vsel %vm212, %v320, 0
      %v420 = vsel %vm212, %v321, 0
      %v423 = vsel %vm212, %v322, 0
      %v426 = vsel %vm212, %v323, 0
      %v429 = vsel %vm212, %v324, 0
      %v432 = vsel %vm212, %v325, 0
      %v435 = vsel %vm212, %v326, 0
      %vm437 = vcmask 1043456
      %v439 = vsel %vm437, %v328, 0
      %441 = vmatprep.subr.mxu0 0.0
      %442 = vmatpush1.msra.mxu0 %v439
      %443 = vmatprep.subr.mxu0 0.0
      %444 = vmatpush1.msra.mxu0 0.0
      %445 = vmatprep.subr.mxu0 0.0
      %446 = vmatpush1.msra.mxu0 0.0
      %447 = vmatprep.subr.mxu0 0.0
      %448 = vmatpush1.msra.mxu0 0.0
      %449 = vmatprep.subr.mxu0 0.0
      %450 = vmatpush1.msra.mxu0 0.0
      %451 = vmatprep.subr.mxu0 0.0
      %452 = vmatpush1.msra.mxu0 0.0
      %453 = vmatprep.subr.mxu0 0.0
      %454 = vmatpush1.msra.mxu0 0.0
      %455 = vmatprep.subr.mxu0 0.0
      %456 = vmatpush1.msra.mxu0 0.0
      %457 = vmatprep.subr.mxu0 0.0
      %458 = vmatpush1.msra.mxu0 0.0
      %459 = vmatprep.subr.mxu0 0.0
      %460 = vmatpush1.msra.mxu0 0.0
      %461 = vmatprep.subr.mxu0 0.0
      %462 = vmatpush1.msra.mxu0 0.0
      %463 = vmatprep.subr.mxu0 0.0
      %464 = vmatpush1.msra.mxu0 0.0
      %465 = vmatprep.subr.mxu0 0.0
      %466 = vmatpush1.msra.mxu0 0.0
      %467 = vmatprep.subr.mxu0 0.0
      %468 = vmatpush1.msra.mxu0 0.0
      %469 = vmatprep.subr.mxu0 0.0
      %470 = vmatpush1.msra.mxu0 0.0
      %471 = vmatprep.subr.mxu0 0.0
      %472 = vmatpush1.msra.mxu0 0.0
      %473 = vmatprep.subr.mxu0 0.0
      %474 = vmatpush1.msra.mxu0 0.0
      %475 = vmatprep.subr.mxu0 0.0
      %476 = vmatpush1.msra.mxu0 0.0
      %477 = vmatprep.subr.mxu0 0.0
      %478 = vmatpush1.msra.mxu0 0.0
      %479 = vmatprep.subr.mxu0 0.0
      %480 = vmatpush1.msra.mxu0 0.0
      %481 = vmatprep.subr.mxu0 0.0
      %482 = vmatpush1.msra.mxu0 0.0
      %483 = vmatprep.subr.mxu0 0.0
      %484 = vmatpush1.msra.mxu0 0.0
      %485 = vmatprep.subr.mxu0 0.0
      %486 = vmatpush1.msra.mxu0 0.0
      %487 = vmatprep.subr.mxu0 0.0
      %488 = vmatpush1.msra.mxu0 0.0
      %489 = vmatprep.subr.mxu0 0.0
      %490 = vmatpush1.msra.mxu0 0.0
      %491 = vmatprep.subr.mxu0 0.0
      %492 = vmatpush1.msra.mxu0 0.0
      %493 = vmatprep.subr.mxu0 0.0
      %494 = vmatpush1.msra.mxu0 0.0
      %495 = vmatprep.subr.mxu0 0.0
      %496 = vmatpush1.msra.mxu0 0.0
      %497 = vmatprep.subr.mxu0 0.0
      %498 = vmatpush1.msra.mxu0 0.0
      %499 = vmatprep.subr.mxu0 0.0
      %500 = vmatpush1.msra.mxu0 0.0
      %501 = vmatprep.subr.mxu0 0.0
      %502 = vmatpush1.msra.mxu0 0.0
      %503 = vmatprep.subr.mxu0 0.0
      %504 = vmatpush1.msra.mxu0 0.0
      %505 = vmatprep.mubr.f32.mxu0 0.0
      %506 = vmatmul.mubr.f32.gmra.mrb[0].mxu0 %v330
      %v507 = vpop.f32.mrb[0].mxu0
      %v508 = vadd.f32 0.0, %v507
      %v509 = vpop.f32.mrb[0].mxu0
      %510 = vmatprep.mubr.f32.mxu0 0.0
      %511 = vmatmul.mubr.f32.gmra.mrb[0].mxu0 %v333
      %v512 = vpop.f32.mrb[0].mxu0
      %v513 = vadd.f32 0.0, %v512
      %v514 = vpop.f32.mrb[0].mxu0
      %515 = vmatprep.mubr.f32.mxu0 0.0
      %516 = vmatmul.mubr.f32.gmra.mrb[0].mxu0 %v336
      %v517 = vpop.f32.mrb[0].mxu0
      %v518 = vadd.f32 0.0, %v517
      %v519 = vpop.f32.mrb[0].mxu0
      %520 = vmatprep.mubr.f32.mxu0 0.0
      %521 = vmatmul.mubr.f32.gmra.mrb[0].mxu0 %v339
      %v522 = vpop.f32.mrb[0].mxu0
      %v523 = vadd.f32 0.0, %v522
      %v524 = vpop.f32.mrb[0].mxu0
      %525 = vmatprep.mubr.f32.mxu0 0.0
      %526 = vmatmul.mubr.f32.gmra.mrb[0].mxu0 %v342
      %v527 = vpop.f32.mrb[0].mxu0
      %v528 = vadd.f32 0.0, %v527
      %v529 = vpop.f32.mrb[0].mxu0
      %530 = vmatprep.mubr.f32.mxu0 0.0
      %531 = vmatmul.mubr.f32.gmra.mrb[0].mxu0 %v345
      %v532 = vpop.f32.mrb[0].mxu0
      %v533 = vadd.f32 0.0, %v532
      %v534 = vpop.f32.mrb[0].mxu0
      %535 = vmatprep.mubr.f32.mxu0 0.0
      %536 = vmatmul.mubr.f32.gmra.mrb[0].mxu0 %v348
      %v537 = vpop.f32.mrb[0].mxu0
      %v538 = vadd.f32 0.0, %v537
      %v539 = vpop.f32.mrb[0].mxu0
      %540 = vmatprep.mubr.f32.mxu0 0.0
      %541 = vmatmul.mubr.f32.gmra.mrb[0].mxu0 %v351
      %v542 = vpop.f32.mrb[0].mxu0
      %v543 = vadd.f32 0.0, %v542
      %v544 = vpop.f32.mrb[0].mxu0
      %545 = vmatprep.mubr.f32.mxu0 0.0
      %546 = vmatmul.mubr.f32.gmra.mrb[0].mxu0 %v354
      %v547 = vpop.f32.mrb[0].mxu0
      %v548 = vadd.f32 0.0, %v547
      %v549 = vpop.f32.mrb[0].mxu0
      %550 = vmatprep.mubr.f32.mxu0 0.0
      %551 = vmatmul.mubr.f32.gmra.mrb[0].mxu0 %v357
      %v552 = vpop.f32.mrb[0].mxu0
      %v553 = vadd.f32 0.0, %v552
      %v554 = vpop.f32.mrb[0].mxu0
      %555 = vmatprep.mubr.f32.mxu0 0.0
      %556 = vmatmul.mubr.f32.gmra.mrb[0].mxu0 %v360
      %v557 = vpop.f32.mrb[0].mxu0
      %v558 = vadd.f32 0.0, %v557
      %v559 = vpop.f32.mrb[0].mxu0
      %560 = vmatprep.mubr.f32.mxu0 0.0
      %561 = vmatmul.mubr.f32.gmra.mrb[0].mxu0 %v363
      %v562 = vpop.f32.mrb[0].mxu0
      %v563 = vadd.f32 0.0, %v562
      %v564 = vpop.f32.mrb[0].mxu0
      %565 = vmatprep.mubr.f32.mxu0 0.0
      %566 = vmatmul.mubr.f32.gmra.mrb[0].mxu0 %v366
      %v567 = vpop.f32.mrb[0].mxu0
      %v568 = vadd.f32 0.0, %v567
      %v569 = vpop.f32.mrb[0].mxu0
      %570 = vmatprep.mubr.f32.mxu0 0.0
      %571 = vmatmul.mubr.f32.gmra.mrb[0].mxu0 %v369
      %v572 = vpop.f32.mrb[0].mxu0
      %v573 = vadd.f32 0.0, %v572
      %v574 = vpop.f32.mrb[0].mxu0
      %575 = vmatprep.mubr.f32.mxu0 0.0
      %576 = vmatmul.mubr.f32.gmra.mrb[0].mxu0 %v372
      %v577 = vpop.f32.mrb[0].mxu0
      %v578 = vadd.f32 0.0, %v577
      %v579 = vpop.f32.mrb[0].mxu0
      %580 = vmatprep.mubr.f32.mxu0 0.0
      %581 = vmatmul.mubr.f32.gmra.mrb[0].mxu0 %v375
      %v582 = vpop.f32.mrb[0].mxu0
      %v583 = vadd.f32 0.0, %v582
      %v584 = vpop.f32.mrb[0].mxu0
      %585 = vmatprep.mubr.f32.mxu0 0.0
      %586 = vmatmul.mubr.f32.gmra.mrb[0].mxu0 %v378
      %v587 = vpop.f32.mrb[0].mxu0
      %v588 = vadd.f32 0.0, %v587
      %v589 = vpop.f32.mrb[0].mxu0
      %590 = vmatprep.mubr.f32.mxu0 0.0
      %591 = vmatmul.mubr.f32.gmra.mrb[0].mxu0 %v381
      %v592 = vpop.f32.mrb[0].mxu0
      %v593 = vadd.f32 0.0, %v592
      %v594 = vpop.f32.mrb[0].mxu0
      %595 = vmatprep.mubr.f32.mxu0 0.0
      %596 = vmatmul.mubr.f32.gmra.mrb[0].mxu0 %v384
      %v597 = vpop.f32.mrb[0].mxu0
      %v598 = vadd.f32 0.0, %v597
      %v599 = vpop.f32.mrb[0].mxu0
      %600 = vmatprep.mubr.f32.mxu0 0.0
      %601 = vmatmul.mubr.f32.gmra.mrb[0].mxu0 %v387
      %v602 = vpop.f32.mrb[0].mxu0
      %v603 = vadd.f32 0.0, %v602
      %v604 = vpop.f32.mrb[0].mxu0
      %605 = vmatprep.mubr.f32.mxu0 0.0
      %606 = vmatmul.mubr.f32.gmra.mrb[0].mxu0 %v390
      %v607 = vpop.f32.mrb[0].mxu0
      %v608 = vadd.f32 0.0, %v607
      %v609 = vpop.f32.mrb[0].mxu0
      %610 = vmatprep.mubr.f32.mxu0 0.0
      %611 = vmatmul.mubr.f32.gmra.mrb[0].mxu0 %v393
      %v612 = vpop.f32.mrb[0].mxu0
      %v613 = vadd.f32 0.0, %v612
      %v614 = vpop.f32.mrb[0].mxu0
      %615 = vmatprep.mubr.f32.mxu0 0.0
      %616 = vmatmul.mubr.f32.gmra.mrb[0].mxu0 %v396
      %v617 = vpop.f32.mrb[0].mxu0
      %v618 = vadd.f32 0.0, %v617
      %v619 = vpop.f32.mrb[0].mxu0
      %620 = vmatprep.mubr.f32.mxu0 0.0
      %621 = vmatmul.mubr.f32.gmra.mrb[0].mxu0 %v399
      %v622 = vpop.f32.mrb[0].mxu0
      %v623 = vadd.f32 0.0, %v622
      %v624 = vpop.f32.mrb[0].mxu0
      %625 = vmatprep.mubr.f32.mxu0 0.0
      %626 = vmatmul.mubr.f32.gmra.mrb[0].mxu0 %v402
      %v627 = vpop.f32.mrb[0].mxu0
      %v628 = vadd.f32 0.0, %v627
      %v629 = vpop.f32.mrb[0].mxu0
      %630 = vmatprep.mubr.f32.mxu0 0.0
      %631 = vmatmul.mubr.f32.gmra.mrb[0].mxu0 %v405
      %v632 = vpop.f32.mrb[0].mxu0
      %v633 = vadd.f32 0.0, %v632
      %v634 = vpop.f32.mrb[0].mxu0
      %635 = vmatprep.mubr.f32.mxu0 0.0
      %636 = vmatmul.mubr.f32.gmra.mrb[0].mxu0 %v408
      %v637 = vpop.f32.mrb[0].mxu0
      %v638 = vadd.f32 0.0, %v637
      %v639 = vpop.f32.mrb[0].mxu0
      %640 = vmatprep.mubr.f32.mxu0 0.0
      %641 = vmatmul.mubr.f32.gmra.mrb[0].mxu0 %v411
      %v642 = vpop.f32.mrb[0].mxu0
      %v643 = vadd.f32 0.0, %v642
      %v644 = vpop.f32.mrb[0].mxu0
      %645 = vmatprep.mubr.f32.mxu0 0.0
      %646 = vmatmul.mubr.f32.gmra.mrb[0].mxu0 %v414
      %v647 = vpop.f32.mrb[0].mxu0
      %v648 = vadd.f32 0.0, %v647
      %v649 = vpop.f32.mrb[0].mxu0
      %650 = vmatprep.mubr.f32.mxu0 0.0
      %651 = vmatmul.mubr.f32.gmra.mrb[0].mxu0 %v417
      %v652 = vpop.f32.mrb[0].mxu0
      %v653 = vadd.f32 0.0, %v652
      %v654 = vpop.f32.mrb[0].mxu0
      %655 = vmatprep.mubr.f32.mxu0 0.0
      %656 = vmatmul.mubr.f32.gmra.mrb[0].mxu0 %v420
      %v657 = vpop.f32.mrb[0].mxu0
      %v658 = vadd.f32 0.0, %v657
      %v659 = vpop.f32.mrb[0].mxu0
      %660 = vmatprep.mubr.f32.mxu0 0.0
      %661 = vmatmul.mubr.f32.gmra.mrb[0].mxu0 %v423
      %v662 = vpop.f32.mrb[0].mxu0
      %v663 = vadd.f32 0.0, %v662
      %v664 = vpop.f32.mrb[0].mxu0
      %665 = vmatprep.mubr.f32.mxu0 0.0
      %666 = vmatmul.mubr.f32.gmra.mrb[0].mxu0 %v426
      %v667 = vpop.f32.mrb[0].mxu0
      %v668 = vadd.f32 0.0, %v667
      %v669 = vpop.f32.mrb[0].mxu0
      %670 = vmatprep.mubr.f32.mxu0 0.0
      %671 = vmatmul.mubr.f32.gmra.mrb[0].mxu0 %v429
      %v672 = vpop.f32.mrb[0].mxu0
      %v673 = vadd.f32 0.0, %v672
      %v674 = vpop.f32.mrb[0].mxu0
      %675 = vmatprep.mubr.f32.mxu0 0.0
      %676 = vmatmul.mubr.f32.gmra.mrb[0].mxu0 %v432
      %v677 = vpop.f32.mrb[0].mxu0
      %v678 = vadd.f32 0.0, %v677
      %v679 = vpop.f32.mrb[0].mxu0
      %680 = vmatprep.mubr.f32.mxu0 0.0
      %681 = vmatmul.mubr.f32.gmra.mrb[0].mxu0 %v435
      %v682 = vpop.f32.mrb[0].mxu0
      %v683 = vadd.f32 0.0, %v682
      %v684 = vpop.f32.mrb[0].mxu0
      %685 = vdwg.mxu0
      %v687 = vsel %vm212, %v254, 0
      %v690 = vsel %vm212, %v255, 0
      %v693 = vsel %vm212, %v256, 0
      %v696 = vsel %vm212, %v257, 0
      %v699 = vsel %vm212, %v258, 0
      %v702 = vsel %vm212, %v259, 0
      %v705 = vsel %vm212, %v260, 0
      %v708 = vsel %vm212, %v261, 0
      %v711 = vsel %vm212, %v262, 0
      %v714 = vsel %vm212, %v263, 0
      %v717 = vsel %vm212, %v264, 0
      %v720 = vsel %vm212, %v265, 0
      %v723 = vsel %vm212, %v266, 0
      %v726 = vsel %vm212, %v267, 0
      %v729 = vsel %vm212, %v268, 0
      %v732 = vsel %vm212, %v269, 0
      %v735 = vsel %vm212, %v270, 0
      %v738 = vsel %vm212, %v271, 0
      %v741 = vsel %vm212, %v272, 0
      %v744 = vsel %vm212, %v273, 0
      %v747 = vsel %vm212, %v274, 0
      %v750 = vsel %vm212, %v275, 0
      %v753 = vsel %vm212, %v276, 0
      %v756 = vsel %vm212, %v277, 0
      %v759 = vsel %vm212, %v278, 0
      %v762 = vsel %vm212, %v279, 0
      %v765 = vsel %vm212, %v280, 0
      %v768 = vsel %vm212, %v281, 0
      %v771 = vsel %vm212, %v282, 0
      %v774 = vsel %vm212, %v283, 0
      %v777 = vsel %vm212, %v284, 0
      %v780 = vsel %vm212, %v285, 0
      %v783 = vsel %vm212, %v286, 0
      %v786 = vsel %vm212, %v287, 0
      %v789 = vsel %vm212, %v288, 0
      %v792 = vsel %vm212, %v289, 0
      %v795 = vsel %vm437, %v290, 0
      %797 = vmatprep.subr.mxu0 0.0
      %798 = vmatpush1.msra.mxu0 %v795
      %799 = vmatprep.subr.mxu0 0.0
      %800 = vmatpush1.msra.mxu0 0.0
      %801 = vmatprep.subr.mxu0 0.0
      %802 = vmatpush1.msra.mxu0 0.0
      %803 = vmatprep.subr.mxu0 0.0
      %804 = vmatpush1.msra.mxu0 0.0
      %805 = vmatprep.subr.mxu0 0.0
      %806 = vmatpush1.msra.mxu0 0.0
      %807 = vmatprep.subr.mxu0 0.0
      %808 = vmatpush1.msra.mxu0 0.0
      %809 = vmatprep.subr.mxu0 0.0
      %810 = vmatpush1.msra.mxu0 0.0
      %811 = vmatprep.subr.mxu0 0.0
      %812 = vmatpush1.msra.mxu0 0.0
      %813 = vmatprep.subr.mxu0 0.0
      %814 = vmatpush1.msra.mxu0 0.0
      %815 = vmatprep.subr.mxu0 0.0
      %816 = vmatpush1.msra.mxu0 0.0
      %817 = vmatprep.subr.mxu0 0.0
      %818 = vmatpush1.msra.mxu0 0.0
      %819 = vmatprep.subr.mxu0 0.0
      %820 = vmatpush1.msra.mxu0 0.0
      %821 = vmatprep.subr.mxu0 0.0
      %822 = vmatpush1.msra.mxu0 0.0
      %823 = vmatprep.subr.mxu0 0.0
      %824 = vmatpush1.msra.mxu0 0.0
      %825 = vmatprep.subr.mxu0 0.0
      %826 = vmatpush1.msra.mxu0 0.0
      %827 = vmatprep.subr.mxu0 0.0
      %828 = vmatpush1.msra.mxu0 0.0
      %829 = vmatprep.subr.mxu0 0.0
      %830 = vmatpush1.msra.mxu0 0.0
      %831 = vmatprep.subr.mxu0 0.0
      %832 = vmatpush1.msra.mxu0 0.0
      %833 = vmatprep.subr.mxu0 0.0
      %834 = vmatpush1.msra.mxu0 0.0
      %835 = vmatprep.subr.mxu0 0.0
      %836 = vmatpush1.msra.mxu0 0.0
      %837 = vmatprep.subr.mxu0 0.0
      %838 = vmatpush1.msra.mxu0 0.0
      %839 = vmatprep.subr.mxu0 0.0
      %840 = vmatpush1.msra.mxu0 0.0
      %841 = vmatprep.subr.mxu0 0.0
      %842 = vmatpush1.msra.mxu0 0.0
      %843 = vmatprep.subr.mxu0 0.0
      %844 = vmatpush1.msra.mxu0 0.0
      %845 = vmatprep.subr.mxu0 0.0
      %846 = vmatpush1.msra.mxu0 0.0
      %847 = vmatprep.subr.mxu0 0.0
      %848 = vmatpush1.msra.mxu0 0.0
      %849 = vmatprep.subr.mxu0 0.0
      %850 = vmatpush1.msra.mxu0 0.0
      %851 = vmatprep.subr.mxu0 0.0
      %852 = vmatpush1.msra.mxu0 0.0
      %853 = vmatprep.subr.mxu0 0.0
      %854 = vmatpush1.msra.mxu0 0.0
      %855 = vmatprep.subr.mxu0 0.0
      %856 = vmatpush1.msra.mxu0 0.0
      %857 = vmatprep.subr.mxu0 0.0
      %858 = vmatpush1.msra.mxu0 0.0
      %859 = vmatprep.subr.mxu0 0.0
      %860 = vmatpush1.msra.mxu0 0.0
      %861 = vmatprep.mubr.f32.mxu0 0.0
      %862 = vmatmul.mubr.f32.gmra.mrb[0].mxu0 %v687
      %v863 = vpop.f32.mrb[0].mxu0
      %v864 = vadd.f32 %v508, %v863
      %v865 = vpop.f32.mrb[0].mxu0
      %866 = vmatprep.mubr.f32.mxu0 0.0
      %867 = vmatmul.mubr.f32.gmra.mrb[0].mxu0 %v690
      %v868 = vpop.f32.mrb[0].mxu0
      %v869 = vadd.f32 %v513, %v868
      %v870 = vpop.f32.mrb[0].mxu0
      %871 = vmatprep.mubr.f32.mxu0 0.0
      %872 = vmatmul.mubr.f32.gmra.mrb[0].mxu0 %v693
      %v873 = vpop.f32.mrb[0].mxu0
      %v874 = vadd.f32 %v518, %v873
      %v875 = vpop.f32.mrb[0].mxu0
      %876 = vmatprep.mubr.f32.mxu0 0.0
      %877 = vmatmul.mubr.f32.gmra.mrb[0].mxu0 %v696
      %v878 = vpop.f32.mrb[0].mxu0
      %v879 = vadd.f32 %v523, %v878
      %v880 = vpop.f32.mrb[0].mxu0
      %881 = vmatprep.mubr.f32.mxu0 0.0
      %882 = vmatmul.mubr.f32.gmra.mrb[0].mxu0 %v699
      %v883 = vpop.f32.mrb[0].mxu0
      %v884 = vadd.f32 %v528, %v883
      %v885 = vpop.f32.mrb[0].mxu0
      %886 = vmatprep.mubr.f32.mxu0 0.0
      %887 = vmatmul.mubr.f32.gmra.mrb[0].mxu0 %v702
      %v888 = vpop.f32.mrb[0].mxu0
      %v889 = vadd.f32 %v533, %v888
      %v890 = vpop.f32.mrb[0].mxu0
      %891 = vmatprep.mubr.f32.mxu0 0.0
      %892 = vmatmul.mubr.f32.gmra.mrb[0].mxu0 %v705
      %v893 = vpop.f32.mrb[0].mxu0
      %v894 = vadd.f32 %v538, %v893
      %v895 = vpop.f32.mrb[0].mxu0
      %896 = vmatprep.mubr.f32.mxu0 0.0
      %897 = vmatmul.mubr.f32.gmra.mrb[0].mxu0 %v708
      %v898 = vpop.f32.mrb[0].mxu0
      %v899 = vadd.f32 %v543, %v898
      %v900 = vpop.f32.mrb[0].mxu0
      %901 = vmatprep.mubr.f32.mxu0 0.0
      %902 = vmatmul.mubr.f32.gmra.mrb[0].mxu0 %v711
      %v903 = vpop.f32.mrb[0].mxu0
      %v904 = vadd.f32 %v548, %v903
      %v905 = vpop.f32.mrb[0].mxu0
      %906 = vmatprep.mubr.f32.mxu0 0.0
      %907 = vmatmul.mubr.f32.gmra.mrb[0].mxu0 %v714
      %v908 = vpop.f32.mrb[0].mxu0
      %v909 = vadd.f32 %v553, %v908
      %v910 = vpop.f32.mrb[0].mxu0
      %911 = vmatprep.mubr.f32.mxu0 0.0
      %912 = vmatmul.mubr.f32.gmra.mrb[0].mxu0 %v717
      %v913 = vpop.f32.mrb[0].mxu0
      %v914 = vadd.f32 %v558, %v913
      %v915 = vpop.f32.mrb[0].mxu0
      %916 = vmatprep.mubr.f32.mxu0 0.0
      %917 = vmatmul.mubr.f32.gmra.mrb[0].mxu0 %v720
      %v918 = vpop.f32.mrb[0].mxu0
      %v919 = vadd.f32 %v563, %v918
      %v920 = vpop.f32.mrb[0].mxu0
      %921 = vmatprep.mubr.f32.mxu0 0.0
      %922 = vmatmul.mubr.f32.gmra.mrb[0].mxu0 %v723
      %v923 = vpop.f32.mrb[0].mxu0
      %v924 = vadd.f32 %v568, %v923
      %v925 = vpop.f32.mrb[0].mxu0
      %926 = vmatprep.mubr.f32.mxu0 0.0
      %927 = vmatmul.mubr.f32.gmra.mrb[0].mxu0 %v726
      %v928 = vpop.f32.mrb[0].mxu0
      %v929 = vadd.f32 %v573, %v928
      %v930 = vpop.f32.mrb[0].mxu0
      %931 = vmatprep.mubr.f32.mxu0 0.0
      %932 = vmatmul.mubr.f32.gmra.mrb[0].mxu0 %v729
      %v933 = vpop.f32.mrb[0].mxu0
      %v934 = vadd.f32 %v578, %v933
      %v935 = vpop.f32.mrb[0].mxu0
      %936 = vmatprep.mubr.f32.mxu0 0.0
      %937 = vmatmul.mubr.f32.gmra.mrb[0].mxu0 %v732
      %v938 = vpop.f32.mrb[0].mxu0
      %v939 = vadd.f32 %v583, %v938
      %v940 = vpop.f32.mrb[0].mxu0
      %941 = vmatprep.mubr.f32.mxu0 0.0
      %942 = vmatmul.mubr.f32.gmra.mrb[0].mxu0 %v735
      %v943 = vpop.f32.mrb[0].mxu0
      %v944 = vadd.f32 %v588, %v943
      %v945 = vpop.f32.mrb[0].mxu0
      %946 = vmatprep.mubr.f32.mxu0 0.0
      %947 = vmatmul.mubr.f32.gmra.mrb[0].mxu0 %v738
      %v948 = vpop.f32.mrb[0].mxu0
      %v949 = vadd.f32 %v593, %v948
      %v950 = vpop.f32.mrb[0].mxu0
      %951 = vmatprep.mubr.f32.mxu0 0.0
      %952 = vmatmul.mubr.f32.gmra.mrb[0].mxu0 %v741
      %v953 = vpop.f32.mrb[0].mxu0
      %v954 = vadd.f32 %v598, %v953
      %v955 = vpop.f32.mrb[0].mxu0
      %956 = vmatprep.mubr.f32.mxu0 0.0
      %957 = vmatmul.mubr.f32.gmra.mrb[0].mxu0 %v744
      %v958 = vpop.f32.mrb[0].mxu0
      %v959 = vadd.f32 %v603, %v958
      %v960 = vpop.f32.mrb[0].mxu0
      %961 = vmatprep.mubr.f32.mxu0 0.0
      %962 = vmatmul.mubr.f32.gmra.mrb[0].mxu0 %v747
      %v963 = vpop.f32.mrb[0].mxu0
      %v964 = vadd.f32 %v608, %v963
      %v965 = vpop.f32.mrb[0].mxu0
      %966 = vmatprep.mubr.f32.mxu0 0.0
      %967 = vmatmul.mubr.f32.gmra.mrb[0].mxu0 %v750
      %v968 = vpop.f32.mrb[0].mxu0
      %v969 = vadd.f32 %v613, %v968
      %v970 = vpop.f32.mrb[0].mxu0
      %971 = vmatprep.mubr.f32.mxu0 0.0
      %972 = vmatmul.mubr.f32.gmra.mrb[0].mxu0 %v753
      %v973 = vpop.f32.mrb[0].mxu0
      %v974 = vadd.f32 %v618, %v973
      %v975 = vpop.f32.mrb[0].mxu0
      %976 = vmatprep.mubr.f32.mxu0 0.0
      %977 = vmatmul.mubr.f32.gmra.mrb[0].mxu0 %v756
      %v978 = vpop.f32.mrb[0].mxu0
      %v979 = vadd.f32 %v623, %v978
      %v980 = vpop.f32.mrb[0].mxu0
      %981 = vmatprep.mubr.f32.mxu0 0.0
      %982 = vmatmul.mubr.f32.gmra.mrb[0].mxu0 %v759
      %v983 = vpop.f32.mrb[0].mxu0
      %v984 = vadd.f32 %v628, %v983
      %v985 = vpop.f32.mrb[0].mxu0
      %986 = vmatprep.mubr.f32.mxu0 0.0
      %987 = vmatmul.mubr.f32.gmra.mrb[0].mxu0 %v762
      %v988 = vpop.f32.mrb[0].mxu0
      %v989 = vadd.f32 %v633, %v988
      %v990 = vpop.f32.mrb[0].mxu0
      %991 = vmatprep.mubr.f32.mxu0 0.0
      %992 = vmatmul.mubr.f32.gmra.mrb[0].mxu0 %v765
      %v993 = vpop.f32.mrb[0].mxu0
      %v994 = vadd.f32 %v638, %v993
      %v995 = vpop.f32.mrb[0].mxu0
      %996 = vmatprep.mubr.f32.mxu0 0.0
      %997 = vmatmul.mubr.f32.gmra.mrb[0].mxu0 %v768
      %v998 = vpop.f32.mrb[0].mxu0
      %v999 = vadd.f32 %v643, %v998
      %v1000 = vpop.f32.mrb[0].mxu0
      %1001 = vmatprep.mubr.f32.mxu0 0.0
      %1002 = vmatmul.mubr.f32.gmra.mrb[0].mxu0 %v771
      %v1003 = vpop.f32.mrb[0].mxu0
      %v1004 = vadd.f32 %v648, %v1003
      %v1005 = vpop.f32.mrb[0].mxu0
      %1006 = vmatprep.mubr.f32.mxu0 0.0
      %1007 = vmatmul.mubr.f32.gmra.mrb[0].mxu0 %v774
      %v1008 = vpop.f32.mrb[0].mxu0
      %v1009 = vadd.f32 %v653, %v1008
      %v1010 = vpop.f32.mrb[0].mxu0
      %1011 = vmatprep.mubr.f32.mxu0 0.0
      %1012 = vmatmul.mubr.f32.gmra.mrb[0].mxu0 %v777
      %v1013 = vpop.f32.mrb[0].mxu0
      %v1014 = vadd.f32 %v658, %v1013
      %v1015 = vpop.f32.mrb[0].mxu0
      %1016 = vmatprep.mubr.f32.mxu0 0.0
      %1017 = vmatmul.mubr.f32.gmra.mrb[0].mxu0 %v780
      %v1018 = vpop.f32.mrb[0].mxu0
      %v1019 = vadd.f32 %v663, %v1018
      %v1020 = vpop.f32.mrb[0].mxu0
      %1021 = vmatprep.mubr.f32.mxu0 0.0
      %1022 = vmatmul.mubr.f32.gmra.mrb[0].mxu0 %v783
      %v1023 = vpop.f32.mrb[0].mxu0
      %v1024 = vadd.f32 %v668, %v1023
      %v1025 = vpop.f32.mrb[0].mxu0
      %1026 = vmatprep.mubr.f32.mxu0 0.0
      %1027 = vmatmul.mubr.f32.gmra.mrb[0].mxu0 %v786
      %v1028 = vpop.f32.mrb[0].mxu0
      %v1029 = vadd.f32 %v673, %v1028
      %v1030 = vpop.f32.mrb[0].mxu0
      %1031 = vmatprep.mubr.f32.mxu0 0.0
      %1032 = vmatmul.mubr.f32.gmra.mrb[0].mxu0 %v789
      %v1033 = vpop.f32.mrb[0].mxu0
      %v1034 = vadd.f32 %v678, %v1033
      %v1035 = vpop.f32.mrb[0].mxu0
      %1036 = vmatprep.mubr.f32.mxu0 0.0
      %1037 = vmatmul.mubr.f32.gmra.mrb[0].mxu0 %v792
      %v1038 = vpop.f32.mrb[0].mxu0
      %v1039 = vadd.f32 %v683, %v1038
      %v1040 = vpop.f32.mrb[0].mxu0
      %1041 = vdwg.mxu0
      %v1042 = vld [vmem:[#allocation2 + $0x2] sm:$0xff]
      %v1043 = vld [vmem:[#allocation2 + $0xa] sm:$0xff]
      %v1044 = vld [vmem:[#allocation2 + $0x12] sm:$0xff]
      %v1045 = vld [vmem:[#allocation2 + $0x1a] sm:$0xff]
      %v1046 = vld [vmem:[#allocation2 + $0x22] sm:$0xff]
      %v1047 = vld [vmem:[#allocation2 + $0x2a] sm:$0xff]
      %v1048 = vld [vmem:[#allocation2 + $0x32] sm:$0xff]
      %v1049 = vld [vmem:[#allocation2 + $0x3a] sm:$0xff]
      %v1050 = vld [vmem:[#allocation2 + $0x42] sm:$0xff]
      %v1051 = vld [vmem:[#allocation2 + $0x4a] sm:$0xff]
      %v1052 = vld [vmem:[#allocation2 + $0x52] sm:$0xff]
      %v1053 = vld [vmem:[#allocation2 + $0x5a] sm:$0xff]
      %v1054 = vld [vmem:[#allocation2 + $0x62] sm:$0xff]
      %v1055 = vld [vmem:[#allocation2 + $0x6a] sm:$0xff]
      %v1056 = vld [vmem:[#allocation2 + $0x72] sm:$0xff]
      %v1057 = vld [vmem:[#allocation2 + $0x7a] sm:$0xff]
      %v1058 = vld [vmem:[#allocation2 + $0x82] sm:$0xff]
      %v1059 = vld [vmem:[#allocation2 + $0x8a] sm:$0xff]
      %v1060 = vld [vmem:[#allocation2 + $0x92] sm:$0xff]
      %v1061 = vld [vmem:[#allocation2 + $0x9a] sm:$0xff]
      %v1062 = vld [vmem:[#allocation2 + $0xa2] sm:$0xff]
      %v1063 = vld [vmem:[#allocation2 + $0xaa] sm:$0xff]
      %v1064 = vld [vmem:[#allocation2 + $0xb2] sm:$0xff]
      %v1065 = vld [vmem:[#allocation2 + $0xba] sm:$0xff]
      %v1066 = vld [vmem:[#allocation2 + $0xc2] sm:$0xff]
      %v1067 = vld [vmem:[#allocation2 + $0xca] sm:$0xff]
      %v1068 = vld [vmem:[#allocation2 + $0xd2] sm:$0xff]
      %v1069 = vld [vmem:[#allocation2 + $0xda] sm:$0xff]
      %v1070 = vld [vmem:[#allocation2 + $0xe2] sm:$0xff]
      %v1071 = vld [vmem:[#allocation2 + $0xea] sm:$0xff]
      %v1072 = vld [vmem:[#allocation2 + $0xf2] sm:$0xff]
      %v1073 = vld [vmem:[#allocation2 + $0xfa] sm:$0xff]
      %v1074 = vld [vmem:[#allocation2 + $0x102] sm:$0xff]
      %v1075 = vld [vmem:[#allocation2 + $0x10a] sm:$0xff]
      %v1076 = vld [vmem:[#allocation2 + $0x112] sm:$0xff]
      %v1077 = vld [vmem:[#allocation2 + $0x11a] sm:$0xff]
      %s1078 = scalar_lea.vmem %s1, 8
      %v1079 = vld [vmem:[%s1078] sm:$0xf]
      %v1081 = vsel %vm212, %v1042, 0
      %v1084 = vsel %vm212, %v1043, 0
      %v1087 = vsel %vm212, %v1044, 0
      %v1090 = vsel %vm212, %v1045, 0
      %v1093 = vsel %vm212, %v1046, 0
      %v1096 = vsel %vm212, %v1047, 0
      %v1099 = vsel %vm212, %v1048, 0
      %v1102 = vsel %vm212, %v1049, 0
      %v1105 = vsel %vm212, %v1050, 0
      %v1108 = vsel %vm212, %v1051, 0
      %v1111 = vsel %vm212, %v1052, 0
      %v1114 = vsel %vm212, %v1053, 0
      %v1117 = vsel %vm212, %v1054, 0
      %v1120 = vsel %vm212, %v1055, 0
      %v1123 = vsel %vm212, %v1056, 0
      %v1126 = vsel %vm212, %v1057, 0
      %v1129 = vsel %vm212, %v1058, 0
      %v1132 = vsel %vm212, %v1059, 0
      %v1135 = vsel %vm212, %v1060, 0
      %v1138 = vsel %vm212, %v1061, 0
      %v1141 = vsel %vm212, %v1062, 0
      %v1144 = vsel %vm212, %v1063, 0
      %v1147 = vsel %vm212, %v1064, 0
      %v1150 = vsel %vm212, %v1065, 0
      %v1153 = vsel %vm212, %v1066, 0
      %v1156 = vsel %vm212, %v1067, 0
      %v1159 = vsel %vm212, %v1068, 0
      %v1162 = vsel %vm212, %v1069, 0
      %v1165 = vsel %vm212, %v1070, 0
      %v1168 = vsel %vm212, %v1071, 0
      %v1171 = vsel %vm212, %v1072, 0
      %v1174 = vsel %vm212, %v1073, 0
      %v1177 = vsel %vm212, %v1074, 0
      %v1180 = vsel %vm212, %v1075, 0
      %v1183 = vsel %vm212, %v1076, 0
      %v1186 = vsel %vm212, %v1077, 0
      %v1189 = vsel %vm437, %v1079, 0
      %1191 = vmatprep.subr.mxu0 0.0
      %1192 = vmatpush1.msra.mxu0 %v1189
      %1193 = vmatprep.subr.mxu0 0.0
      %1194 = vmatpush1.msra.mxu0 0.0
      %1195 = vmatprep.subr.mxu0 0.0
      %1196 = vmatpush1.msra.mxu0 0.0
      %1197 = vmatprep.subr.mxu0 0.0
      %1198 = vmatpush1.msra.mxu0 0.0
      %1199 = vmatprep.subr.mxu0 0.0
      %1200 = vmatpush1.msra.mxu0 0.0
      %1201 = vmatprep.subr.mxu0 0.0
      %1202 = vmatpush1.msra.mxu0 0.0
      %1203 = vmatprep.subr.mxu0 0.0
      %1204 = vmatpush1.msra.mxu0 0.0
      %1205 = vmatprep.subr.mxu0 0.0
      %1206 = vmatpush1.msra.mxu0 0.0
      %1207 = vmatprep.subr.mxu0 0.0
      %1208 = vmatpush1.msra.mxu0 0.0
      %1209 = vmatprep.subr.mxu0 0.0
      %1210 = vmatpush1.msra.mxu0 0.0
      %1211 = vmatprep.subr.mxu0 0.0
      %1212 = vmatpush1.msra.mxu0 0.0
      %1213 = vmatprep.subr.mxu0 0.0
      %1214 = vmatpush1.msra.mxu0 0.0
      %1215 = vmatprep.subr.mxu0 0.0
      %1216 = vmatpush1.msra.mxu0 0.0
      %1217 = vmatprep.subr.mxu0 0.0
      %1218 = vmatpush1.msra.mxu0 0.0
      %1219 = vmatprep.subr.mxu0 0.0
      %1220 = vmatpush1.msra.mxu0 0.0
      %1221 = vmatprep.subr.mxu0 0.0
      %1222 = vmatpush1.msra.mxu0 0.0
      %1223 = vmatprep.subr.mxu0 0.0
      %1224 = vmatpush1.msra.mxu0 0.0
      %1225 = vmatprep.subr.mxu0 0.0
      %1226 = vmatpush1.msra.mxu0 0.0
      %1227 = vmatprep.subr.mxu0 0.0
      %1228 = vmatpush1.msra.mxu0 0.0
      %1229 = vmatprep.subr.mxu0 0.0
      %1230 = vmatpush1.msra.mxu0 0.0
      %1231 = vmatprep.subr.mxu0 0.0
      %1232 = vmatpush1.msra.mxu0 0.0
      %1233 = vmatprep.subr.mxu0 0.0
      %1234 = vmatpush1.msra.mxu0 0.0
      %1235 = vmatprep.subr.mxu0 0.0
      %1236 = vmatpush1.msra.mxu0 0.0
      %1237 = vmatprep.subr.mxu0 0.0
      %1238 = vmatpush1.msra.mxu0 0.0
      %1239 = vmatprep.subr.mxu0 0.0
      %1240 = vmatpush1.msra.mxu0 0.0
      %1241 = vmatprep.subr.mxu0 0.0
      %1242 = vmatpush1.msra.mxu0 0.0
      %1243 = vmatprep.subr.mxu0 0.0
      %1244 = vmatpush1.msra.mxu0 0.0
      %1245 = vmatprep.subr.mxu0 0.0
      %1246 = vmatpush1.msra.mxu0 0.0
      %1247 = vmatprep.subr.mxu0 0.0
      %1248 = vmatpush1.msra.mxu0 0.0
      %1249 = vmatprep.subr.mxu0 0.0
      %1250 = vmatpush1.msra.mxu0 0.0
      %1251 = vmatprep.subr.mxu0 0.0
      %1252 = vmatpush1.msra.mxu0 0.0
      %1253 = vmatprep.subr.mxu0 0.0
      %1254 = vmatpush1.msra.mxu0 0.0
      %1255 = vmatprep.mubr.f32.mxu0 0.0
      %1256 = vmatmul.mubr.f32.gmra.mrb[0].mxu0 %v1081
      %v1257 = vpop.f32.mrb[0].mxu0
      %v1258 = vadd.f32 0.0, %v1257
      %v1259 = vpop.f32.mrb[0].mxu0
      %1260 = vmatprep.mubr.f32.mxu0 0.0
      %1261 = vmatmul.mubr.f32.gmra.mrb[0].mxu0 %v1084
      %v1262 = vpop.f32.mrb[0].mxu0
      %v1263 = vadd.f32 0.0, %v1262
      %v1264 = vpop.f32.mrb[0].mxu0
      %1265 = vmatprep.mubr.f32.mxu0 0.0
      %1266 = vmatmul.mubr.f32.gmra.mrb[0].mxu0 %v1087
      %v1267 = vpop.f32.mrb[0].mxu0
      %v1268 = vadd.f32 0.0, %v1267
      %v1269 = vpop.f32.mrb[0].mxu0
      %1270 = vmatprep.mubr.f32.mxu0 0.0
      %1271 = vmatmul.mubr.f32.gmra.mrb[0].mxu0 %v1090
      %v1272 = vpop.f32.mrb[0].mxu0
      %v1273 = vadd.f32 0.0, %v1272
      %v1274 = vpop.f32.mrb[0].mxu0
      %1275 = vmatprep.mubr.f32.mxu0 0.0
      %1276 = vmatmul.mubr.f32.gmra.mrb[0].mxu0 %v1093
      %v1277 = vpop.f32.mrb[0].mxu0
      %v1278 = vadd.f32 0.0, %v1277
      %v1279 = vpop.f32.mrb[0].mxu0
      %1280 = vmatprep.mubr.f32.mxu0 0.0
      %1281 = vmatmul.mubr.f32.gmra.mrb[0].mxu0 %v1096
      %v1282 = vpop.f32.mrb[0].mxu0
      %v1283 = vadd.f32 0.0, %v1282
      %v1284 = vpop.f32.mrb[0].mxu0
      %1285 = vmatprep.mubr.f32.mxu0 0.0
      %1286 = vmatmul.mubr.f32.gmra.mrb[0].mxu0 %v1099
      %v1287 = vpop.f32.mrb[0].mxu0
      %v1288 = vadd.f32 0.0, %v1287
      %v1289 = vpop.f32.mrb[0].mxu0
      %1290 = vmatprep.mubr.f32.mxu0 0.0
      %1291 = vmatmul.mubr.f32.gmra.mrb[0].mxu0 %v1102
      %v1292 = vpop.f32.mrb[0].mxu0
      %v1293 = vadd.f32 0.0, %v1292
      %v1294 = vpop.f32.mrb[0].mxu0
      %1295 = vmatprep.mubr.f32.mxu0 0.0
      %1296 = vmatmul.mubr.f32.gmra.mrb[0].mxu0 %v1105
      %v1297 = vpop.f32.mrb[0].mxu0
      %v1298 = vadd.f32 0.0, %v1297
      %v1299 = vpop.f32.mrb[0].mxu0
      %1300 = vmatprep.mubr.f32.mxu0 0.0
      %1301 = vmatmul.mubr.f32.gmra.mrb[0].mxu0 %v1108
      %v1302 = vpop.f32.mrb[0].mxu0
      %v1303 = vadd.f32 0.0, %v1302
      %v1304 = vpop.f32.mrb[0].mxu0
      %1305 = vmatprep.mubr.f32.mxu0 0.0
      %1306 = vmatmul.mubr.f32.gmra.mrb[0].mxu0 %v1111
      %v1307 = vpop.f32.mrb[0].mxu0
      %v1308 = vadd.f32 0.0, %v1307
      %v1309 = vpop.f32.mrb[0].mxu0
      %1310 = vmatprep.mubr.f32.mxu0 0.0
      %1311 = vmatmul.mubr.f32.gmra.mrb[0].mxu0 %v1114
      %v1312 = vpop.f32.mrb[0].mxu0
      %v1313 = vadd.f32 0.0, %v1312
      %v1314 = vpop.f32.mrb[0].mxu0
      %1315 = vmatprep.mubr.f32.mxu0 0.0
      %1316 = vmatmul.mubr.f32.gmra.mrb[0].mxu0 %v1117
      %v1317 = vpop.f32.mrb[0].mxu0
      %v1318 = vadd.f32 0.0, %v1317
      %v1319 = vpop.f32.mrb[0].mxu0
      %1320 = vmatprep.mubr.f32.mxu0 0.0
      %1321 = vmatmul.mubr.f32.gmra.mrb[0].mxu0 %v1120
      %v1322 = vpop.f32.mrb[0].mxu0
      %v1323 = vadd.f32 0.0, %v1322
      %v1324 = vpop.f32.mrb[0].mxu0
      %1325 = vmatprep.mubr.f32.mxu0 0.0
      %1326 = vmatmul.mubr.f32.gmra.mrb[0].mxu0 %v1123
      %v1327 = vpop.f32.mrb[0].mxu0
      %v1328 = vadd.f32 0.0, %v1327
      %v1329 = vpop.f32.mrb[0].mxu0
      %1330 = vmatprep.mubr.f32.mxu0 0.0
      %1331 = vmatmul.mubr.f32.gmra.mrb[0].mxu0 %v1126
      %v1332 = vpop.f32.mrb[0].mxu0
      %v1333 = vadd.f32 0.0, %v1332
      %v1334 = vpop.f32.mrb[0].mxu0
      %1335 = vmatprep.mubr.f32.mxu0 0.0
      %1336 = vmatmul.mubr.f32.gmra.mrb[0].mxu0 %v1129
      %v1337 = vpop.f32.mrb[0].mxu0
      %v1338 = vadd.f32 0.0, %v1337
      %v1339 = vpop.f32.mrb[0].mxu0
      %1340 = vmatprep.mubr.f32.mxu0 0.0
      %1341 = vmatmul.mubr.f32.gmra.mrb[0].mxu0 %v1132
      %v1342 = vpop.f32.mrb[0].mxu0
      %v1343 = vadd.f32 0.0, %v1342
      %v1344 = vpop.f32.mrb[0].mxu0
      %1345 = vmatprep.mubr.f32.mxu0 0.0
      %1346 = vmatmul.mubr.f32.gmra.mrb[0].mxu0 %v1135
      %v1347 = vpop.f32.mrb[0].mxu0
      %v1348 = vadd.f32 0.0, %v1347
      %v1349 = vpop.f32.mrb[0].mxu0
      %1350 = vmatprep.mubr.f32.mxu0 0.0
      %1351 = vmatmul.mubr.f32.gmra.mrb[0].mxu0 %v1138
      %v1352 = vpop.f32.mrb[0].mxu0
      %v1353 = vadd.f32 0.0, %v1352
      %v1354 = vpop.f32.mrb[0].mxu0
      %1355 = vmatprep.mubr.f32.mxu0 0.0
      %1356 = vmatmul.mubr.f32.gmra.mrb[0].mxu0 %v1141
      %v1357 = vpop.f32.mrb[0].mxu0
      %v1358 = vadd.f32 0.0, %v1357
      %v1359 = vpop.f32.mrb[0].mxu0
      %1360 = vmatprep.mubr.f32.mxu0 0.0
      %1361 = vmatmul.mubr.f32.gmra.mrb[0].mxu0 %v1144
      %v1362 = vpop.f32.mrb[0].mxu0
      %v1363 = vadd.f32 0.0, %v1362
      %v1364 = vpop.f32.mrb[0].mxu0
      %1365 = vmatprep.mubr.f32.mxu0 0.0
      %1366 = vmatmul.mubr.f32.gmra.mrb[0].mxu0 %v1147
      %v1367 = vpop.f32.mrb[0].mxu0
      %v1368 = vadd.f32 0.0, %v1367
      %v1369 = vpop.f32.mrb[0].mxu0
      %1370 = vmatprep.mubr.f32.mxu0 0.0
      %1371 = vmatmul.mubr.f32.gmra.mrb[0].mxu0 %v1150
      %v1372 = vpop.f32.mrb[0].mxu0
      %v1373 = vadd.f32 0.0, %v1372
      %v1374 = vpop.f32.mrb[0].mxu0
      %1375 = vmatprep.mubr.f32.mxu0 0.0
      %1376 = vmatmul.mubr.f32.gmra.mrb[0].mxu0 %v1153
      %v1377 = vpop.f32.mrb[0].mxu0
      %v1378 = vadd.f32 0.0, %v1377
      %v1379 = vpop.f32.mrb[0].mxu0
      %1380 = vmatprep.mubr.f32.mxu0 0.0
      %1381 = vmatmul.mubr.f32.gmra.mrb[0].mxu0 %v1156
      %v1382 = vpop.f32.mrb[0].mxu0
      %v1383 = vadd.f32 0.0, %v1382
      %v1384 = vpop.f32.mrb[0].mxu0
      %1385 = vmatprep.mubr.f32.mxu0 0.0
      %1386 = vmatmul.mubr.f32.gmra.mrb[0].mxu0 %v1159
      %v1387 = vpop.f32.mrb[0].mxu0
      %v1388 = vadd.f32 0.0, %v1387
      %v1389 = vpop.f32.mrb[0].mxu0
      %1390 = vmatprep.mubr.f32.mxu0 0.0
      %1391 = vmatmul.mubr.f32.gmra.mrb[0].mxu0 %v1162
      %v1392 = vpop.f32.mrb[0].mxu0
      %v1393 = vadd.f32 0.0, %v1392
      %v1394 = vpop.f32.mrb[0].mxu0
      %1395 = vmatprep.mubr.f32.mxu0 0.0
      %1396 = vmatmul.mubr.f32.gmra.mrb[0].mxu0 %v1165
      %v1397 = vpop.f32.mrb[0].mxu0
      %v1398 = vadd.f32 0.0, %v1397
      %v1399 = vpop.f32.mrb[0].mxu0
      %1400 = vmatprep.mubr.f32.mxu0 0.0
      %1401 = vmatmul.mubr.f32.gmra.mrb[0].mxu0 %v1168
      %v1402 = vpop.f32.mrb[0].mxu0
      %v1403 = vadd.f32 0.0, %v1402
      %v1404 = vpop.f32.mrb[0].mxu0
      %1405 = vmatprep.mubr.f32.mxu0 0.0
      %1406 = vmatmul.mubr.f32.gmra.mrb[0].mxu0 %v1171
      %v1407 = vpop.f32.mrb[0].mxu0
      %v1408 = vadd.f32 0.0, %v1407
      %v1409 = vpop.f32.mrb[0].mxu0
      %1410 = vmatprep.mubr.f32.mxu0 0.0
      %1411 = vmatmul.mubr.f32.gmra.mrb[0].mxu0 %v1174
      %v1412 = vpop.f32.mrb[0].mxu0
      %v1413 = vadd.f32 0.0, %v1412
      %v1414 = vpop.f32.mrb[0].mxu0
      %1415 = vmatprep.mubr.f32.mxu0 0.0
      %1416 = vmatmul.mubr.f32.gmra.mrb[0].mxu0 %v1177
      %v1417 = vpop.f32.mrb[0].mxu0
      %v1418 = vadd.f32 0.0, %v1417
      %v1419 = vpop.f32.mrb[0].mxu0
      %1420 = vmatprep.mubr.f32.mxu0 0.0
      %1421 = vmatmul.mubr.f32.gmra.mrb[0].mxu0 %v1180
      %v1422 = vpop.f32.mrb[0].mxu0
      %v1423 = vadd.f32 0.0, %v1422
      %v1424 = vpop.f32.mrb[0].mxu0
      %1425 = vmatprep.mubr.f32.mxu0 0.0
      %1426 = vmatmul.mubr.f32.gmra.mrb[0].mxu0 %v1183
      %v1427 = vpop.f32.mrb[0].mxu0
      %v1428 = vadd.f32 0.0, %v1427
      %v1429 = vpop.f32.mrb[0].mxu0
      %1430 = vmatprep.mubr.f32.mxu0 0.0
      %1431 = vmatmul.mubr.f32.gmra.mrb[0].mxu0 %v1186
      %v1432 = vpop.f32.mrb[0].mxu0
      %v1433 = vadd.f32 0.0, %v1432
      %v1434 = vpop.f32.mrb[0].mxu0
      %1435 = vdwg.mxu0
      %v1436 = vadd.f32 %v864, %v1258
      %v1437 = vadd.f32 %v869, %v1263
      %v1438 = vadd.f32 %v874, %v1268
      %v1439 = vadd.f32 %v879, %v1273
      %v1440 = vadd.f32 %v884, %v1278
      %v1441 = vadd.f32 %v889, %v1283
      %v1442 = vadd.f32 %v894, %v1288
      %v1443 = vadd.f32 %v899, %v1293
      %v1444 = vadd.f32 %v904, %v1298
      %v1445 = vadd.f32 %v909, %v1303
      %v1446 = vadd.f32 %v914, %v1308
      %v1447 = vadd.f32 %v919, %v1313
      %v1448 = vadd.f32 %v924, %v1318
      %v1449 = vadd.f32 %v929, %v1323
      %v1450 = vadd.f32 %v934, %v1328
      %v1451 = vadd.f32 %v939, %v1333
      %v1452 = vadd.f32 %v944, %v1338
      %v1453 = vadd.f32 %v949, %v1343
      %v1454 = vadd.f32 %v954, %v1348
      %v1455 = vadd.f32 %v959, %v1353
      %v1456 = vadd.f32 %v964, %v1358
      %v1457 = vadd.f32 %v969, %v1363
      %v1458 = vadd.f32 %v974, %v1368
      %v1459 = vadd.f32 %v979, %v1373
      %v1460 = vadd.f32 %v984, %v1378
      %v1461 = vadd.f32 %v989, %v1383
      %v1462 = vadd.f32 %v994, %v1388
      %v1463 = vadd.f32 %v999, %v1393
      %v1464 = vadd.f32 %v1004, %v1398
      %v1465 = vadd.f32 %v1009, %v1403
      %v1466 = vadd.f32 %v1014, %v1408
      %v1467 = vadd.f32 %v1019, %v1413
      %v1468 = vadd.f32 %v1024, %v1418
      %v1469 = vadd.f32 %v1029, %v1423
      %v1470 = vadd.f32 %v1034, %v1428
      %v1471 = vadd.f32 %v1039, %v1433
      %v1472 = vld [vmem:[#allocation2 + $0x12] sm:$0xff]
      %v1473 = vld [vmem:[#allocation2 + $0x1a] sm:$0xff]
      %v1474 = vld [vmem:[#allocation2 + $0x22] sm:$0xff]
      %v1475 = vld [vmem:[#allocation2 + $0x2a] sm:$0xff]
      %v1476 = vld [vmem:[#allocation2 + $0x32] sm:$0xff]
      %v1477 = vld [vmem:[#allocation2 + $0x3a] sm:$0xff]
      %v1478 = vld [vmem:[#allocation2 + $0x42] sm:$0xff]
      %v1479 = vld [vmem:[#allocation2 + $0x4a] sm:$0xff]
      %v1480 = vld [vmem:[#allocation2 + $0x52] sm:$0xff]
      %v1481 = vld [vmem:[#allocation2 + $0x5a] sm:$0xff]
      %v1482 = vld [vmem:[#allocation2 + $0x62] sm:$0xff]
      %v1483 = vld [vmem:[#allocation2 + $0x6a] sm:$0xff]
      %v1484 = vld [vmem:[#allocation2 + $0x72] sm:$0xff]
      %v1485 = vld [vmem:[#allocation2 + $0x7a] sm:$0xff]
      %v1486 = vld [vmem:[#allocation2 + $0x82] sm:$0xff]
      %v1487 = vld [vmem:[#allocation2 + $0x8a] sm:$0xff]
      %v1488 = vld [vmem:[#allocation2 + $0x92] sm:$0xff]
      %v1489 = vld [vmem:[#allocation2 + $0x9a] sm:$0xff]
      %v1490 = vld [vmem:[#allocation2 + $0xa2] sm:$0xff]
      %v1491 = vld [vmem:[#allocation2 + $0xaa] sm:$0xff]
      %v1492 = vld [vmem:[#allocation2 + $0xb2] sm:$0xff]
      %v1493 = vld [vmem:[#allocation2 + $0xba] sm:$0xff]
      %v1494 = vld [vmem:[#allocation2 + $0xc2] sm:$0xff]
      %v1495 = vld [vmem:[#allocation2 + $0xca] sm:$0xff]
      %v1496 = vld [vmem:[#allocation2 + $0xd2] sm:$0xff]
      %v1497 = vld [vmem:[#allocation2 + $0xda] sm:$0xff]
      %v1498 = vld [vmem:[#allocation2 + $0xe2] sm:$0xff]
      %v1499 = vld [vmem:[#allocation2 + $0xea] sm:$0xff]
      %v1500 = vld [vmem:[#allocation2 + $0xf2] sm:$0xff]
      %v1501 = vld [vmem:[#allocation2 + $0xfa] sm:$0xff]
      %v1502 = vld [vmem:[#allocation2 + $0x102] sm:$0xff]
      %v1503 = vld [vmem:[#allocation2 + $0x10a] sm:$0xff]
      %v1504 = vld [vmem:[#allocation2 + $0x112] sm:$0xff]
      %v1505 = vld [vmem:[#allocation2 + $0x11a] sm:$0xff]
      %v1506 = vld [vmem:[#allocation2 + $0x122] sm:$0xff]
      %v1507 = vld [vmem:[#allocation2 + $0x12a] sm:$0xff]
      %s1508 = scalar_lea.vmem %s1, 12
      %v1509 = vld [vmem:[%s1508] sm:$0xf]
      %v1511 = vsel %vm212, %v1472, 0
      %v1514 = vsel %vm212, %v1473, 0
      %v1517 = vsel %vm212, %v1474, 0
      %v1520 = vsel %vm212, %v1475, 0
      %v1523 = vsel %vm212, %v1476, 0
      %v1526 = vsel %vm212, %v1477, 0
      %v1529 = vsel %vm212, %v1478, 0
      %v1532 = vsel %vm212, %v1479, 0
      %v1535 = vsel %vm212, %v1480, 0
      %v1538 = vsel %vm212, %v1481, 0
      %v1541 = vsel %vm212, %v1482, 0
      %v1544 = vsel %vm212, %v1483, 0
      %v1547 = vsel %vm212, %v1484, 0
      %v1550 = vsel %vm212, %v1485, 0
      %v1553 = vsel %vm212, %v1486, 0
      %v1556 = vsel %vm212, %v1487, 0
      %v1559 = vsel %vm212, %v1488, 0
      %v1562 = vsel %vm212, %v1489, 0
      %v1565 = vsel %vm212, %v1490, 0
      %v1568 = vsel %vm212, %v1491, 0
      %v1571 = vsel %vm212, %v1492, 0
      %v1574 = vsel %vm212, %v1493, 0
      %v1577 = vsel %vm212, %v1494, 0
      %v1580 = vsel %vm212, %v1495, 0
      %v1583 = vsel %vm212, %v1496, 0
      %v1586 = vsel %vm212, %v1497, 0
      %v1589 = vsel %vm212, %v1498, 0
      %v1592 = vsel %vm212, %v1499, 0
      %v1595 = vsel %vm212, %v1500, 0
      %v1598 = vsel %vm212, %v1501, 0
      %v1601 = vsel %vm212, %v1502, 0
      %v1604 = vsel %vm212, %v1503, 0
      %v1607 = vsel %vm212, %v1504, 0
      %v1610 = vsel %vm212, %v1505, 0
      %v1613 = vsel %vm212, %v1506, 0
      %v1616 = vsel %vm212, %v1507, 0
      %v1619 = vsel %vm437, %v1509, 0
      %1621 = vmatprep.subr.mxu0 0.0
      %1622 = vmatpush1.msra.mxu0 %v1619
      %1623 = vmatprep.subr.mxu0 0.0
      %1624 = vmatpush1.msra.mxu0 0.0
      %1625 = vmatprep.subr.mxu0 0.0
      %1626 = vmatpush1.msra.mxu0 0.0
      %1627 = vmatprep.subr.mxu0 0.0
      %1628 = vmatpush1.msra.mxu0 0.0
      %1629 = vmatprep.subr.mxu0 0.0
      %1630 = vmatpush1.msra.mxu0 0.0
      %1631 = vmatprep.subr.mxu0 0.0
      %1632 = vmatpush1.msra.mxu0 0.0
      %1633 = vmatprep.subr.mxu0 0.0
      %1634 = vmatpush1.msra.mxu0 0.0
      %1635 = vmatprep.subr.mxu0 0.0
      %1636 = vmatpush1.msra.mxu0 0.0
      %1637 = vmatprep.subr.mxu0 0.0
      %1638 = vmatpush1.msra.mxu0 0.0
      %1639 = vmatprep.subr.mxu0 0.0
      %1640 = vmatpush1.msra.mxu0 0.0
      %1641 = vmatprep.subr.mxu0 0.0
      %1642 = vmatpush1.msra.mxu0 0.0
      %1643 = vmatprep.subr.mxu0 0.0
      %1644 = vmatpush1.msra.mxu0 0.0
      %1645 = vmatprep.subr.mxu0 0.0
      %1646 = vmatpush1.msra.mxu0 0.0
      %1647 = vmatprep.subr.mxu0 0.0
      %1648 = vmatpush1.msra.mxu0 0.0
      %1649 = vmatprep.subr.mxu0 0.0
      %1650 = vmatpush1.msra.mxu0 0.0
      %1651 = vmatprep.subr.mxu0 0.0
      %1652 = vmatpush1.msra.mxu0 0.0
      %1653 = vmatprep.subr.mxu0 0.0
      %1654 = vmatpush1.msra.mxu0 0.0
      %1655 = vmatprep.subr.mxu0 0.0
      %1656 = vmatpush1.msra.mxu0 0.0
      %1657 = vmatprep.subr.mxu0 0.0
      %1658 = vmatpush1.msra.mxu0 0.0
      %1659 = vmatprep.subr.mxu0 0.0
      %1660 = vmatpush1.msra.mxu0 0.0
      %1661 = vmatprep.subr.mxu0 0.0
      %1662 = vmatpush1.msra.mxu0 0.0
      %1663 = vmatprep.subr.mxu0 0.0
      %1664 = vmatpush1.msra.mxu0 0.0
      %1665 = vmatprep.subr.mxu0 0.0
      %1666 = vmatpush1.msra.mxu0 0.0
      %1667 = vmatprep.subr.mxu0 0.0
      %1668 = vmatpush1.msra.mxu0 0.0
      %1669 = vmatprep.subr.mxu0 0.0
      %1670 = vmatpush1.msra.mxu0 0.0
      %1671 = vmatprep.subr.mxu0 0.0
      %1672 = vmatpush1.msra.mxu0 0.0
      %1673 = vmatprep.subr.mxu0 0.0
      %1674 = vmatpush1.msra.mxu0 0.0
      %1675 = vmatprep.subr.mxu0 0.0
      %1676 = vmatpush1.msra.mxu0 0.0
      %1677 = vmatprep.subr.mxu0 0.0
      %1678 = vmatpush1.msra.mxu0 0.0
      %1679 = vmatprep.subr.mxu0 0.0
      %1680 = vmatpush1.msra.mxu0 0.0
      %1681 = vmatprep.subr.mxu0 0.0
      %1682 = vmatpush1.msra.mxu0 0.0
      %1683 = vmatprep.subr.mxu0 0.0
      %1684 = vmatpush1.msra.mxu0 0.0
      %1685 = vmatprep.mubr.f32.mxu0 0.0
      %1686 = vmatmul.mubr.f32.gmra.mrb[0].mxu0 %v1511
      %v1687 = vpop.f32.mrb[0].mxu0
      %v1688 = vadd.f32 0.0, %v1687
      %v1689 = vpop.f32.mrb[0].mxu0
      %1690 = vmatprep.mubr.f32.mxu0 0.0
      %1691 = vmatmul.mubr.f32.gmra.mrb[0].mxu0 %v1514
      %v1692 = vpop.f32.mrb[0].mxu0
      %v1693 = vadd.f32 0.0, %v1692
      %v1694 = vpop.f32.mrb[0].mxu0
      %1695 = vmatprep.mubr.f32.mxu0 0.0
      %1696 = vmatmul.mubr.f32.gmra.mrb[0].mxu0 %v1517
      %v1697 = vpop.f32.mrb[0].mxu0
      %v1698 = vadd.f32 0.0, %v1697
      %v1699 = vpop.f32.mrb[0].mxu0
      %1700 = vmatprep.mubr.f32.mxu0 0.0
      %1701 = vmatmul.mubr.f32.gmra.mrb[0].mxu0 %v1520
      %v1702 = vpop.f32.mrb[0].mxu0
      %v1703 = vadd.f32 0.0, %v1702
      %v1704 = vpop.f32.mrb[0].mxu0
      %1705 = vmatprep.mubr.f32.mxu0 0.0
      %1706 = vmatmul.mubr.f32.gmra.mrb[0].mxu0 %v1523
      %v1707 = vpop.f32.mrb[0].mxu0
      %v1708 = vadd.f32 0.0, %v1707
      %v1709 = vpop.f32.mrb[0].mxu0
      %1710 = vmatprep.mubr.f32.mxu0 0.0
      %1711 = vmatmul.mubr.f32.gmra.mrb[0].mxu0 %v1526
      %v1712 = vpop.f32.mrb[0].mxu0
      %v1713 = vadd.f32 0.0, %v1712
      %v1714 = vpop.f32.mrb[0].mxu0
      %1715 = vmatprep.mubr.f32.mxu0 0.0
      %1716 = vmatmul.mubr.f32.gmra.mrb[0].mxu0 %v1529
      %v1717 = vpop.f32.mrb[0].mxu0
      %v1718 = vadd.f32 0.0, %v1717
      %v1719 = vpop.f32.mrb[0].mxu0
      %1720 = vmatprep.mubr.f32.mxu0 0.0
      %1721 = vmatmul.mubr.f32.gmra.mrb[0].mxu0 %v1532
      %v1722 = vpop.f32.mrb[0].mxu0
      %v1723 = vadd.f32 0.0, %v1722
      %v1724 = vpop.f32.mrb[0].mxu0
      %1725 = vmatprep.mubr.f32.mxu0 0.0
      %1726 = vmatmul.mubr.f32.gmra.mrb[0].mxu0 %v1535
      %v1727 = vpop.f32.mrb[0].mxu0
      %v1728 = vadd.f32 0.0, %v1727
      %v1729 = vpop.f32.mrb[0].mxu0
      %1730 = vmatprep.mubr.f32.mxu0 0.0
      %1731 = vmatmul.mubr.f32.gmra.mrb[0].mxu0 %v1538
      %v1732 = vpop.f32.mrb[0].mxu0
      %v1733 = vadd.f32 0.0, %v1732
      %v1734 = vpop.f32.mrb[0].mxu0
      %1735 = vmatprep.mubr.f32.mxu0 0.0
      %1736 = vmatmul.mubr.f32.gmra.mrb[0].mxu0 %v1541
      %v1737 = vpop.f32.mrb[0].mxu0
      %v1738 = vadd.f32 0.0, %v1737
      %v1739 = vpop.f32.mrb[0].mxu0
      %1740 = vmatprep.mubr.f32.mxu0 0.0
      %1741 = vmatmul.mubr.f32.gmra.mrb[0].mxu0 %v1544
      %v1742 = vpop.f32.mrb[0].mxu0
      %v1743 = vadd.f32 0.0, %v1742
      %v1744 = vpop.f32.mrb[0].mxu0
      %1745 = vmatprep.mubr.f32.mxu0 0.0
      %1746 = vmatmul.mubr.f32.gmra.mrb[0].mxu0 %v1547
      %v1747 = vpop.f32.mrb[0].mxu0
      %v1748 = vadd.f32 0.0, %v1747
      %v1749 = vpop.f32.mrb[0].mxu0
      %1750 = vmatprep.mubr.f32.mxu0 0.0
      %1751 = vmatmul.mubr.f32.gmra.mrb[0].mxu0 %v1550
      %v1752 = vpop.f32.mrb[0].mxu0
      %v1753 = vadd.f32 0.0, %v1752
      %v1754 = vpop.f32.mrb[0].mxu0
      %1755 = vmatprep.mubr.f32.mxu0 0.0
      %1756 = vmatmul.mubr.f32.gmra.mrb[0].mxu0 %v1553
      %v1757 = vpop.f32.mrb[0].mxu0
      %v1758 = vadd.f32 0.0, %v1757
      %v1759 = vpop.f32.mrb[0].mxu0
      %1760 = vmatprep.mubr.f32.mxu0 0.0
      %1761 = vmatmul.mubr.f32.gmra.mrb[0].mxu0 %v1556
      %v1762 = vpop.f32.mrb[0].mxu0
      %v1763 = vadd.f32 0.0, %v1762
      %v1764 = vpop.f32.mrb[0].mxu0
      %1765 = vmatprep.mubr.f32.mxu0 0.0
      %1766 = vmatmul.mubr.f32.gmra.mrb[0].mxu0 %v1559
      %v1767 = vpop.f32.mrb[0].mxu0
      %v1768 = vadd.f32 0.0, %v1767
      %v1769 = vpop.f32.mrb[0].mxu0
      %1770 = vmatprep.mubr.f32.mxu0 0.0
      %1771 = vmatmul.mubr.f32.gmra.mrb[0].mxu0 %v1562
      %v1772 = vpop.f32.mrb[0].mxu0
      %v1773 = vadd.f32 0.0, %v1772
      %v1774 = vpop.f32.mrb[0].mxu0
      %1775 = vmatprep.mubr.f32.mxu0 0.0
      %1776 = vmatmul.mubr.f32.gmra.mrb[0].mxu0 %v1565
      %v1777 = vpop.f32.mrb[0].mxu0
      %v1778 = vadd.f32 0.0, %v1777
      %v1779 = vpop.f32.mrb[0].mxu0
      %1780 = vmatprep.mubr.f32.mxu0 0.0
      %1781 = vmatmul.mubr.f32.gmra.mrb[0].mxu0 %v1568
      %v1782 = vpop.f32.mrb[0].mxu0
      %v1783 = vadd.f32 0.0, %v1782
      %v1784 = vpop.f32.mrb[0].mxu0
      %1785 = vmatprep.mubr.f32.mxu0 0.0
      %1786 = vmatmul.mubr.f32.gmra.mrb[0].mxu0 %v1571
      %v1787 = vpop.f32.mrb[0].mxu0
      %v1788 = vadd.f32 0.0, %v1787
      %v1789 = vpop.f32.mrb[0].mxu0
      %1790 = vmatprep.mubr.f32.mxu0 0.0
      %1791 = vmatmul.mubr.f32.gmra.mrb[0].mxu0 %v1574
      %v1792 = vpop.f32.mrb[0].mxu0
      %v1793 = vadd.f32 0.0, %v1792
      %v1794 = vpop.f32.mrb[0].mxu0
      %1795 = vmatprep.mubr.f32.mxu0 0.0
      %1796 = vmatmul.mubr.f32.gmra.mrb[0].mxu0 %v1577
      %v1797 = vpop.f32.mrb[0].mxu0
      %v1798 = vadd.f32 0.0, %v1797
      %v1799 = vpop.f32.mrb[0].mxu0
      %1800 = vmatprep.mubr.f32.mxu0 0.0
      %1801 = vmatmul.mubr.f32.gmra.mrb[0].mxu0 %v1580
      %v1802 = vpop.f32.mrb[0].mxu0
      %v1803 = vadd.f32 0.0, %v1802
      %v1804 = vpop.f32.mrb[0].mxu0
      %1805 = vmatprep.mubr.f32.mxu0 0.0
      %1806 = vmatmul.mubr.f32.gmra.mrb[0].mxu0 %v1583
      %v1807 = vpop.f32.mrb[0].mxu0
      %v1808 = vadd.f32 0.0, %v1807
      %v1809 = vpop.f32.mrb[0].mxu0
      %1810 = vmatprep.mubr.f32.mxu0 0.0
      %1811 = vmatmul.mubr.f32.gmra.mrb[0].mxu0 %v1586
      %v1812 = vpop.f32.mrb[0].mxu0
      %v1813 = vadd.f32 0.0, %v1812
      %v1814 = vpop.f32.mrb[0].mxu0
      %1815 = vmatprep.mubr.f32.mxu0 0.0
      %1816 = vmatmul.mubr.f32.gmra.mrb[0].mxu0 %v1589
      %v1817 = vpop.f32.mrb[0].mxu0
      %v1818 = vadd.f32 0.0, %v1817
      %v1819 = vpop.f32.mrb[0].mxu0
      %1820 = vmatprep.mubr.f32.mxu0 0.0
      %1821 = vmatmul.mubr.f32.gmra.mrb[0].mxu0 %v1592
      %v1822 = vpop.f32.mrb[0].mxu0
      %v1823 = vadd.f32 0.0, %v1822
      %v1824 = vpop.f32.mrb[0].mxu0
      %1825 = vmatprep.mubr.f32.mxu0 0.0
      %1826 = vmatmul.mubr.f32.gmra.mrb[0].mxu0 %v1595
      %v1827 = vpop.f32.mrb[0].mxu0
      %v1828 = vadd.f32 0.0, %v1827
      %v1829 = vpop.f32.mrb[0].mxu0
      %1830 = vmatprep.mubr.f32.mxu0 0.0
      %1831 = vmatmul.mubr.f32.gmra.mrb[0].mxu0 %v1598
      %v1832 = vpop.f32.mrb[0].mxu0
      %v1833 = vadd.f32 0.0, %v1832
      %v1834 = vpop.f32.mrb[0].mxu0
      %1835 = vmatprep.mubr.f32.mxu0 0.0
      %1836 = vmatmul.mubr.f32.gmra.mrb[0].mxu0 %v1601
      %v1837 = vpop.f32.mrb[0].mxu0
      %v1838 = vadd.f32 0.0, %v1837
      %v1839 = vpop.f32.mrb[0].mxu0
      %1840 = vmatprep.mubr.f32.mxu0 0.0
      %1841 = vmatmul.mubr.f32.gmra.mrb[0].mxu0 %v1604
      %v1842 = vpop.f32.mrb[0].mxu0
      %v1843 = vadd.f32 0.0, %v1842
      %v1844 = vpop.f32.mrb[0].mxu0
      %1845 = vmatprep.mubr.f32.mxu0 0.0
      %1846 = vmatmul.mubr.f32.gmra.mrb[0].mxu0 %v1607
      %v1847 = vpop.f32.mrb[0].mxu0
      %v1848 = vadd.f32 0.0, %v1847
      %v1849 = vpop.f32.mrb[0].mxu0
      %1850 = vmatprep.mubr.f32.mxu0 0.0
      %1851 = vmatmul.mubr.f32.gmra.mrb[0].mxu0 %v1610
      %v1852 = vpop.f32.mrb[0].mxu0
      %v1853 = vadd.f32 0.0, %v1852
      %v1854 = vpop.f32.mrb[0].mxu0
      %1855 = vmatprep.mubr.f32.mxu0 0.0
      %1856 = vmatmul.mubr.f32.gmra.mrb[0].mxu0 %v1613
      %v1857 = vpop.f32.mrb[0].mxu0
      %v1858 = vadd.f32 0.0, %v1857
      %v1859 = vpop.f32.mrb[0].mxu0
      %1860 = vmatprep.mubr.f32.mxu0 0.0
      %1861 = vmatmul.mubr.f32.gmra.mrb[0].mxu0 %v1616
      %v1862 = vpop.f32.mrb[0].mxu0
      %v1863 = vadd.f32 0.0, %v1862
      %v1864 = vpop.f32.mrb[0].mxu0
      %1865 = vdwg.mxu0
      %v1866 = vadd.f32 %v1436, %v1688
      %v1867 = vadd.f32 %v1437, %v1693
      %v1868 = vadd.f32 %v1438, %v1698
      %v1869 = vadd.f32 %v1439, %v1703
      %v1870 = vadd.f32 %v1440, %v1708
      %v1871 = vadd.f32 %v1441, %v1713
      %v1872 = vadd.f32 %v1442, %v1718
      %v1873 = vadd.f32 %v1443, %v1723
      %v1874 = vadd.f32 %v1444, %v1728
      %v1875 = vadd.f32 %v1445, %v1733
      %v1876 = vadd.f32 %v1446, %v1738
      %v1877 = vadd.f32 %v1447, %v1743
      %v1878 = vadd.f32 %v1448, %v1748
      %v1879 = vadd.f32 %v1449, %v1753
      %v1880 = vadd.f32 %v1450, %v1758
      %v1881 = vadd.f32 %v1451, %v1763
      %v1882 = vadd.f32 %v1452, %v1768
      %v1883 = vadd.f32 %v1453, %v1773
      %v1884 = vadd.f32 %v1454, %v1778
      %v1885 = vadd.f32 %v1455, %v1783
      %v1886 = vadd.f32 %v1456, %v1788
      %v1887 = vadd.f32 %v1457, %v1793
      %v1888 = vadd.f32 %v1458, %v1798
      %v1889 = vadd.f32 %v1459, %v1803
      %v1890 = vadd.f32 %v1460, %v1808
      %v1891 = vadd.f32 %v1461, %v1813
      %v1892 = vadd.f32 %v1462, %v1818
      %v1893 = vadd.f32 %v1463, %v1823
      %v1894 = vadd.f32 %v1464, %v1828
      %v1895 = vadd.f32 %v1465, %v1833
      %v1896 = vadd.f32 %v1466, %v1838
      %v1897 = vadd.f32 %v1467, %v1843
      %v1898 = vadd.f32 %v1468, %v1848
      %v1899 = vadd.f32 %v1469, %v1853
      %v1900 = vadd.f32 %v1470, %v1858
      %v1901 = vadd.f32 %v1471, %v1863
      %v1902 = vld [vmem:[#allocation2 + $0x13] sm:$0xff]
      %v1903 = vld [vmem:[#allocation2 + $0x1b] sm:$0xff]
      %v1904 = vld [vmem:[#allocation2 + $0x23] sm:$0xff]
      %v1905 = vld [vmem:[#allocation2 + $0x2b] sm:$0xff]
      %v1906 = vld [vmem:[#allocation2 + $0x33] sm:$0xff]
      %v1907 = vld [vmem:[#allocation2 + $0x3b] sm:$0xff]
      %v1908 = vld [vmem:[#allocation2 + $0x43] sm:$0xff]
      %v1909 = vld [vmem:[#allocation2 + $0x4b] sm:$0xff]
      %v1910 = vld [vmem:[#allocation2 + $0x53] sm:$0xff]
      %v1911 = vld [vmem:[#allocation2 + $0x5b] sm:$0xff]
      %v1912 = vld [vmem:[#allocation2 + $0x63] sm:$0xff]
      %v1913 = vld [vmem:[#allocation2 + $0x6b] sm:$0xff]
      %v1914 = vld [vmem:[#allocation2 + $0x73] sm:$0xff]
      %v1915 = vld [vmem:[#allocation2 + $0x7b] sm:$0xff]
      %v1916 = vld [vmem:[#allocation2 + $0x83] sm:$0xff]
      %v1917 = vld [vmem:[#allocation2 + $0x8b] sm:$0xff]
      %v1918 = vld [vmem:[#allocation2 + $0x93] sm:$0xff]
      %v1919 = vld [vmem:[#allocation2 + $0x9b] sm:$0xff]
      %v1920 = vld [vmem:[#allocation2 + $0xa3] sm:$0xff]
      %v1921 = vld [vmem:[#allocation2 + $0xab] sm:$0xff]
      %v1922 = vld [vmem:[#allocation2 + $0xb3] sm:$0xff]
      %v1923 = vld [vmem:[#allocation2 + $0xbb] sm:$0xff]
      %v1924 = vld [vmem:[#allocation2 + $0xc3] sm:$0xff]
      %v1925 = vld [vmem:[#allocation2 + $0xcb] sm:$0xff]
      %v1926 = vld [vmem:[#allocation2 + $0xd3] sm:$0xff]
      %v1927 = vld [vmem:[#allocation2 + $0xdb] sm:$0xff]
      %v1928 = vld [vmem:[#allocation2 + $0xe3] sm:$0xff]
      %v1929 = vld [vmem:[#allocation2 + $0xeb] sm:$0xff]
      %v1930 = vld [vmem:[#allocation2 + $0xf3] sm:$0xff]
      %v1931 = vld [vmem:[#allocation2 + $0xfb] sm:$0xff]
      %v1932 = vld [vmem:[#allocation2 + $0x103] sm:$0xff]
      %v1933 = vld [vmem:[#allocation2 + $0x10b] sm:$0xff]
      %v1934 = vld [vmem:[#allocation2 + $0x113] sm:$0xff]
      %v1935 = vld [vmem:[#allocation2 + $0x11b] sm:$0xff]
      %v1936 = vld [vmem:[#allocation2 + $0x123] sm:$0xff]
      %v1937 = vld [vmem:[#allocation2 + $0x12b] sm:$0xff]
      %s1938 = scalar_lea.vmem %s1, 16
      %v1939 = vld [vmem:[%s1938] sm:$0xf]
      %v1941 = vsel %vm212, %v1902, 0
      %v1944 = vsel %vm212, %v1903, 0
      %v1947 = vsel %vm212, %v1904, 0
      %v1950 = vsel %vm212, %v1905, 0
      %v1953 = vsel %vm212, %v1906, 0
      %v1956 = vsel %vm212, %v1907, 0
      %v1959 = vsel %vm212, %v1908, 0
      %v1962 = vsel %vm212, %v1909, 0
      %v1965 = vsel %vm212, %v1910, 0
      %v1968 = vsel %vm212, %v1911, 0
      %v1971 = vsel %vm212, %v1912, 0
      %v1974 = vsel %vm212, %v1913, 0
      %v1977 = vsel %vm212, %v1914, 0
      %v1980 = vsel %vm212, %v1915, 0
      %v1983 = vsel %vm212, %v1916, 0
      %v1986 = vsel %vm212, %v1917, 0
      %v1989 = vsel %vm212, %v1918, 0
      %v1992 = vsel %vm212, %v1919, 0
      %v1995 = vsel %vm212, %v1920, 0
      %v1998 = vsel %vm212, %v1921, 0
      %v2001 = vsel %vm212, %v1922, 0
      %v2004 = vsel %vm212, %v1923, 0
      %v2007 = vsel %vm212, %v1924, 0
      %v2010 = vsel %vm212, %v1925, 0
      %v2013 = vsel %vm212, %v1926, 0
      %v2016 = vsel %vm212, %v1927, 0
      %v2019 = vsel %vm212, %v1928, 0
      %v2022 = vsel %vm212, %v1929, 0
      %v2025 = vsel %vm212, %v1930, 0
      %v2028 = vsel %vm212, %v1931, 0
      %v2031 = vsel %vm212, %v1932, 0
      %v2034 = vsel %vm212, %v1933, 0
      %v2037 = vsel %vm212, %v1934, 0
      %v2040 = vsel %vm212, %v1935, 0
      %v2043 = vsel %vm212, %v1936, 0
      %v2046 = vsel %vm212, %v1937, 0
      %v2049 = vsel %vm437, %v1939, 0
      %2051 = vmatprep.subr.mxu0 0.0
      %2052 = vmatpush1.msra.mxu0 %v2049
      %2053 = vmatprep.subr.mxu0 0.0
      %2054 = vmatpush1.msra.mxu0 0.0
      %2055 = vmatprep.subr.mxu0 0.0
      %2056 = vmatpush1.msra.mxu0 0.0
      %2057 = vmatprep.subr.mxu0 0.0
      %2058 = vmatpush1.msra.mxu0 0.0
      %2059 = vmatprep.subr.mxu0 0.0
      %2060 = vmatpush1.msra.mxu0 0.0
      %2061 = vmatprep.subr.mxu0 0.0
      %2062 = vmatpush1.msra.mxu0 0.0
      %2063 = vmatprep.subr.mxu0 0.0
      %2064 = vmatpush1.msra.mxu0 0.0
      %2065 = vmatprep.subr.mxu0 0.0
      %2066 = vmatpush1.msra.mxu0 0.0
      %2067 = vmatprep.subr.mxu0 0.0
      %2068 = vmatpush1.msra.mxu0 0.0
      %2069 = vmatprep.subr.mxu0 0.0
      %2070 = vmatpush1.msra.mxu0 0.0
      %2071 = vmatprep.subr.mxu0 0.0
      %2072 = vmatpush1.msra.mxu0 0.0
      %2073 = vmatprep.subr.mxu0 0.0
      %2074 = vmatpush1.msra.mxu0 0.0
      %2075 = vmatprep.subr.mxu0 0.0
      %2076 = vmatpush1.msra.mxu0 0.0
      %2077 = vmatprep.subr.mxu0 0.0
      %2078 = vmatpush1.msra.mxu0 0.0
      %2079 = vmatprep.subr.mxu0 0.0
      %2080 = vmatpush1.msra.mxu0 0.0
      %2081 = vmatprep.subr.mxu0 0.0
      %2082 = vmatpush1.msra.mxu0 0.0
      %2083 = vmatprep.subr.mxu0 0.0
      %2084 = vmatpush1.msra.mxu0 0.0
      %2085 = vmatprep.subr.mxu0 0.0
      %2086 = vmatpush1.msra.mxu0 0.0
      %2087 = vmatprep.subr.mxu0 0.0
      %2088 = vmatpush1.msra.mxu0 0.0
      %2089 = vmatprep.subr.mxu0 0.0
      %2090 = vmatpush1.msra.mxu0 0.0
      %2091 = vmatprep.subr.mxu0 0.0
      %2092 = vmatpush1.msra.mxu0 0.0
      %2093 = vmatprep.subr.mxu0 0.0
      %2094 = vmatpush1.msra.mxu0 0.0
      %2095 = vmatprep.subr.mxu0 0.0
      %2096 = vmatpush1.msra.mxu0 0.0
      %2097 = vmatprep.subr.mxu0 0.0
      %2098 = vmatpush1.msra.mxu0 0.0
      %2099 = vmatprep.subr.mxu0 0.0
      %2100 = vmatpush1.msra.mxu0 0.0
      %2101 = vmatprep.subr.mxu0 0.0
      %2102 = vmatpush1.msra.mxu0 0.0
      %2103 = vmatprep.subr.mxu0 0.0
      %2104 = vmatpush1.msra.mxu0 0.0
      %2105 = vmatprep.subr.mxu0 0.0
      %2106 = vmatpush1.msra.mxu0 0.0
      %2107 = vmatprep.subr.mxu0 0.0
      %2108 = vmatpush1.msra.mxu0 0.0
      %2109 = vmatprep.subr.mxu0 0.0
      %2110 = vmatpush1.msra.mxu0 0.0
      %2111 = vmatprep.subr.mxu0 0.0
      %2112 = vmatpush1.msra.mxu0 0.0
      %2113 = vmatprep.subr.mxu0 0.0
      %2114 = vmatpush1.msra.mxu0 0.0
      %2115 = vmatprep.mubr.f32.mxu0 0.0
      %2116 = vmatmul.mubr.f32.gmra.mrb[0].mxu0 %v1941
      %v2117 = vpop.f32.mrb[0].mxu0
      %v2118 = vadd.f32 0.0, %v2117
      %v2119 = vpop.f32.mrb[0].mxu0
      %2120 = vmatprep.mubr.f32.mxu0 0.0
      %2121 = vmatmul.mubr.f32.gmra.mrb[0].mxu0 %v1944
      %v2122 = vpop.f32.mrb[0].mxu0
      %v2123 = vadd.f32 0.0, %v2122
      %v2124 = vpop.f32.mrb[0].mxu0
      %2125 = vmatprep.mubr.f32.mxu0 0.0
      %2126 = vmatmul.mubr.f32.gmra.mrb[0].mxu0 %v1947
      %v2127 = vpop.f32.mrb[0].mxu0
      %v2128 = vadd.f32 0.0, %v2127
      %v2129 = vpop.f32.mrb[0].mxu0
      %2130 = vmatprep.mubr.f32.mxu0 0.0
      %2131 = vmatmul.mubr.f32.gmra.mrb[0].mxu0 %v1950
      %v2132 = vpop.f32.mrb[0].mxu0
      %v2133 = vadd.f32 0.0, %v2132
      %v2134 = vpop.f32.mrb[0].mxu0
      %2135 = vmatprep.mubr.f32.mxu0 0.0
      %2136 = vmatmul.mubr.f32.gmra.mrb[0].mxu0 %v1953
      %v2137 = vpop.f32.mrb[0].mxu0
      %v2138 = vadd.f32 0.0, %v2137
      %v2139 = vpop.f32.mrb[0].mxu0
      %2140 = vmatprep.mubr.f32.mxu0 0.0
      %2141 = vmatmul.mubr.f32.gmra.mrb[0].mxu0 %v1956
      %v2142 = vpop.f32.mrb[0].mxu0
      %v2143 = vadd.f32 0.0, %v2142
      %v2144 = vpop.f32.mrb[0].mxu0
      %2145 = vmatprep.mubr.f32.mxu0 0.0
      %2146 = vmatmul.mubr.f32.gmra.mrb[0].mxu0 %v1959
      %v2147 = vpop.f32.mrb[0].mxu0
      %v2148 = vadd.f32 0.0, %v2147
      %v2149 = vpop.f32.mrb[0].mxu0
      %2150 = vmatprep.mubr.f32.mxu0 0.0
      %2151 = vmatmul.mubr.f32.gmra.mrb[0].mxu0 %v1962
      %v2152 = vpop.f32.mrb[0].mxu0
      %v2153 = vadd.f32 0.0, %v2152
      %v2154 = vpop.f32.mrb[0].mxu0
      %2155 = vmatprep.mubr.f32.mxu0 0.0
      %2156 = vmatmul.mubr.f32.gmra.mrb[0].mxu0 %v1965
      %v2157 = vpop.f32.mrb[0].mxu0
      %v2158 = vadd.f32 0.0, %v2157
      %v2159 = vpop.f32.mrb[0].mxu0
      %2160 = vmatprep.mubr.f32.mxu0 0.0
      %2161 = vmatmul.mubr.f32.gmra.mrb[0].mxu0 %v1968
      %v2162 = vpop.f32.mrb[0].mxu0
      %v2163 = vadd.f32 0.0, %v2162
      %v2164 = vpop.f32.mrb[0].mxu0
      %2165 = vmatprep.mubr.f32.mxu0 0.0
      %2166 = vmatmul.mubr.f32.gmra.mrb[0].mxu0 %v1971
      %v2167 = vpop.f32.mrb[0].mxu0
      %v2168 = vadd.f32 0.0, %v2167
      %v2169 = vpop.f32.mrb[0].mxu0
      %2170 = vmatprep.mubr.f32.mxu0 0.0
      %2171 = vmatmul.mubr.f32.gmra.mrb[0].mxu0 %v1974
      %v2172 = vpop.f32.mrb[0].mxu0
      %v2173 = vadd.f32 0.0, %v2172
      %v2174 = vpop.f32.mrb[0].mxu0
      %2175 = vmatprep.mubr.f32.mxu0 0.0
      %2176 = vmatmul.mubr.f32.gmra.mrb[0].mxu0 %v1977
      %v2177 = vpop.f32.mrb[0].mxu0
      %v2178 = vadd.f32 0.0, %v2177
      %v2179 = vpop.f32.mrb[0].mxu0
      %2180 = vmatprep.mubr.f32.mxu0 0.0
      %2181 = vmatmul.mubr.f32.gmra.mrb[0].mxu0 %v1980
      %v2182 = vpop.f32.mrb[0].mxu0
      %v2183 = vadd.f32 0.0, %v2182
      %v2184 = vpop.f32.mrb[0].mxu0
      %2185 = vmatprep.mubr.f32.mxu0 0.0
      %2186 = vmatmul.mubr.f32.gmra.mrb[0].mxu0 %v1983
      %v2187 = vpop.f32.mrb[0].mxu0
      %v2188 = vadd.f32 0.0, %v2187
      %v2189 = vpop.f32.mrb[0].mxu0
      %2190 = vmatprep.mubr.f32.mxu0 0.0
      %2191 = vmatmul.mubr.f32.gmra.mrb[0].mxu0 %v1986
      %v2192 = vpop.f32.mrb[0].mxu0
      %v2193 = vadd.f32 0.0, %v2192
      %v2194 = vpop.f32.mrb[0].mxu0
      %2195 = vmatprep.mubr.f32.mxu0 0.0
      %2196 = vmatmul.mubr.f32.gmra.mrb[0].mxu0 %v1989
      %v2197 = vpop.f32.mrb[0].mxu0
      %v2198 = vadd.f32 0.0, %v2197
      %v2199 = vpop.f32.mrb[0].mxu0
      %2200 = vmatprep.mubr.f32.mxu0 0.0
      %2201 = vmatmul.mubr.f32.gmra.mrb[0].mxu0 %v1992
      %v2202 = vpop.f32.mrb[0].mxu0
      %v2203 = vadd.f32 0.0, %v2202
      %v2204 = vpop.f32.mrb[0].mxu0
      %2205 = vmatprep.mubr.f32.mxu0 0.0
      %2206 = vmatmul.mubr.f32.gmra.mrb[0].mxu0 %v1995
      %v2207 = vpop.f32.mrb[0].mxu0
      %v2208 = vadd.f32 0.0, %v2207
      %v2209 = vpop.f32.mrb[0].mxu0
      %2210 = vmatprep.mubr.f32.mxu0 0.0
      %2211 = vmatmul.mubr.f32.gmra.mrb[0].mxu0 %v1998
      %v2212 = vpop.f32.mrb[0].mxu0
      %v2213 = vadd.f32 0.0, %v2212
      %v2214 = vpop.f32.mrb[0].mxu0
      %2215 = vmatprep.mubr.f32.mxu0 0.0
      %2216 = vmatmul.mubr.f32.gmra.mrb[0].mxu0 %v2001
      %v2217 = vpop.f32.mrb[0].mxu0
      %v2218 = vadd.f32 0.0, %v2217
      %v2219 = vpop.f32.mrb[0].mxu0
      %2220 = vmatprep.mubr.f32.mxu0 0.0
      %2221 = vmatmul.mubr.f32.gmra.mrb[0].mxu0 %v2004
      %v2222 = vpop.f32.mrb[0].mxu0
      %v2223 = vadd.f32 0.0, %v2222
      %v2224 = vpop.f32.mrb[0].mxu0
      %2225 = vmatprep.mubr.f32.mxu0 0.0
      %2226 = vmatmul.mubr.f32.gmra.mrb[0].mxu0 %v2007
      %v2227 = vpop.f32.mrb[0].mxu0
      %v2228 = vadd.f32 0.0, %v2227
      %v2229 = vpop.f32.mrb[0].mxu0
      %2230 = vmatprep.mubr.f32.mxu0 0.0
      %2231 = vmatmul.mubr.f32.gmra.mrb[0].mxu0 %v2010
      %v2232 = vpop.f32.mrb[0].mxu0
      %v2233 = vadd.f32 0.0, %v2232
      %v2234 = vpop.f32.mrb[0].mxu0
      %2235 = vmatprep.mubr.f32.mxu0 0.0
      %2236 = vmatmul.mubr.f32.gmra.mrb[0].mxu0 %v2013
      %v2237 = vpop.f32.mrb[0].mxu0
      %v2238 = vadd.f32 0.0, %v2237
      %v2239 = vpop.f32.mrb[0].mxu0
      %2240 = vmatprep.mubr.f32.mxu0 0.0
      %2241 = vmatmul.mubr.f32.gmra.mrb[0].mxu0 %v2016
      %v2242 = vpop.f32.mrb[0].mxu0
      %v2243 = vadd.f32 0.0, %v2242
      %v2244 = vpop.f32.mrb[0].mxu0
      %2245 = vmatprep.mubr.f32.mxu0 0.0
      %2246 = vmatmul.mubr.f32.gmra.mrb[0].mxu0 %v2019
      %v2247 = vpop.f32.mrb[0].mxu0
      %v2248 = vadd.f32 0.0, %v2247
      %v2249 = vpop.f32.mrb[0].mxu0
      %2250 = vmatprep.mubr.f32.mxu0 0.0
      %2251 = vmatmul.mubr.f32.gmra.mrb[0].mxu0 %v2022
      %v2252 = vpop.f32.mrb[0].mxu0
      %v2253 = vadd.f32 0.0, %v2252
      %v2254 = vpop.f32.mrb[0].mxu0
      %2255 = vmatprep.mubr.f32.mxu0 0.0
      %2256 = vmatmul.mubr.f32.gmra.mrb[0].mxu0 %v2025
      %v2257 = vpop.f32.mrb[0].mxu0
      %v2258 = vadd.f32 0.0, %v2257
      %v2259 = vpop.f32.mrb[0].mxu0
      %2260 = vmatprep.mubr.f32.mxu0 0.0
      %2261 = vmatmul.mubr.f32.gmra.mrb[0].mxu0 %v2028
      %v2262 = vpop.f32.mrb[0].mxu0
      %v2263 = vadd.f32 0.0, %v2262
      %v2264 = vpop.f32.mrb[0].mxu0
      %2265 = vmatprep.mubr.f32.mxu0 0.0
      %2266 = vmatmul.mubr.f32.gmra.mrb[0].mxu0 %v2031
      %v2267 = vpop.f32.mrb[0].mxu0
      %v2268 = vadd.f32 0.0, %v2267
      %v2269 = vpop.f32.mrb[0].mxu0
      %2270 = vmatprep.mubr.f32.mxu0 0.0
      %2271 = vmatmul.mubr.f32.gmra.mrb[0].mxu0 %v2034
      %v2272 = vpop.f32.mrb[0].mxu0
      %v2273 = vadd.f32 0.0, %v2272
      %v2274 = vpop.f32.mrb[0].mxu0
      %2275 = vmatprep.mubr.f32.mxu0 0.0
      %2276 = vmatmul.mubr.f32.gmra.mrb[0].mxu0 %v2037
      %v2277 = vpop.f32.mrb[0].mxu0
      %v2278 = vadd.f32 0.0, %v2277
      %v2279 = vpop.f32.mrb[0].mxu0
      %2280 = vmatprep.mubr.f32.mxu0 0.0
      %2281 = vmatmul.mubr.f32.gmra.mrb[0].mxu0 %v2040
      %v2282 = vpop.f32.mrb[0].mxu0
      %v2283 = vadd.f32 0.0, %v2282
      %v2284 = vpop.f32.mrb[0].mxu0
      %2285 = vmatprep.mubr.f32.mxu0 0.0
      %2286 = vmatmul.mubr.f32.gmra.mrb[0].mxu0 %v2043
      %v2287 = vpop.f32.mrb[0].mxu0
      %v2288 = vadd.f32 0.0, %v2287
      %v2289 = vpop.f32.mrb[0].mxu0
      %2290 = vmatprep.mubr.f32.mxu0 0.0
      %2291 = vmatmul.mubr.f32.gmra.mrb[0].mxu0 %v2046
      %v2292 = vpop.f32.mrb[0].mxu0
      %v2293 = vadd.f32 0.0, %v2292
      %v2294 = vpop.f32.mrb[0].mxu0
      %2295 = vdwg.mxu0
      %v2296 = vadd.f32 %v1866, %v2118
      %v2297 = vadd.f32 %v1867, %v2123
      %v2298 = vadd.f32 %v1868, %v2128
      %v2299 = vadd.f32 %v1869, %v2133
      %v2300 = vadd.f32 %v1870, %v2138
      %v2301 = vadd.f32 %v1871, %v2143
      %v2302 = vadd.f32 %v1872, %v2148
      %v2303 = vadd.f32 %v1873, %v2153
      %v2304 = vadd.f32 %v1874, %v2158
      %v2305 = vadd.f32 %v1875, %v2163
      %v2306 = vadd.f32 %v1876, %v2168
      %v2307 = vadd.f32 %v1877, %v2173
      %v2308 = vadd.f32 %v1878, %v2178
      %v2309 = vadd.f32 %v1879, %v2183
      %v2310 = vadd.f32 %v1880, %v2188
      %v2311 = vadd.f32 %v1881, %v2193
      %v2312 = vadd.f32 %v1882, %v2198
      %v2313 = vadd.f32 %v1883, %v2203
      %v2314 = vadd.f32 %v1884, %v2208
      %v2315 = vadd.f32 %v1885, %v2213
      %v2316 = vadd.f32 %v1886, %v2218
      %v2317 = vadd.f32 %v1887, %v2223
      %v2318 = vadd.f32 %v1888, %v2228
      %v2319 = vadd.f32 %v1889, %v2233
      %v2320 = vadd.f32 %v1890, %v2238
      %v2321 = vadd.f32 %v1891, %v2243
      %v2322 = vadd.f32 %v1892, %v2248
      %v2323 = vadd.f32 %v1893, %v2253
      %v2324 = vadd.f32 %v1894, %v2258
      %v2325 = vadd.f32 %v1895, %v2263
      %v2326 = vadd.f32 %v1896, %v2268
      %v2327 = vadd.f32 %v1897, %v2273
      %v2328 = vadd.f32 %v1898, %v2278
      %v2329 = vadd.f32 %v1899, %v2283
      %v2330 = vadd.f32 %v1900, %v2288
      %v2331 = vadd.f32 %v1901, %v2293
      %v2332 = vld [vmem:[#allocation2 + $0x14] sm:$0xff]
      %v2333 = vld [vmem:[#allocation2 + $0x1c] sm:$0xff]
      %v2334 = vld [vmem:[#allocation2 + $0x24] sm:$0xff]
      %v2335 = vld [vmem:[#allocation2 + $0x2c] sm:$0xff]
      %v2336 = vld [vmem:[#allocation2 + $0x34] sm:$0xff]
      %v2337 = vld [vmem:[#allocation2 + $0x3c] sm:$0xff]
      %v2338 = vld [vmem:[#allocation2 + $0x44] sm:$0xff]
      %v2339 = vld [vmem:[#allocation2 + $0x4c] sm:$0xff]
      %v2340 = vld [vmem:[#allocation2 + $0x54] sm:$0xff]
      %v2341 = vld [vmem:[#allocation2 + $0x5c] sm:$0xff]
      %v2342 = vld [vmem:[#allocation2 + $0x64] sm:$0xff]
      %v2343 = vld [vmem:[#allocation2 + $0x6c] sm:$0xff]
      %v2344 = vld [vmem:[#allocation2 + $0x74] sm:$0xff]
      %v2345 = vld [vmem:[#allocation2 + $0x7c] sm:$0xff]
      %v2346 = vld [vmem:[#allocation2 + $0x84] sm:$0xff]
      %v2347 = vld [vmem:[#allocation2 + $0x8c] sm:$0xff]
      %v2348 = vld [vmem:[#allocation2 + $0x94] sm:$0xff]
      %v2349 = vld [vmem:[#allocation2 + $0x9c] sm:$0xff]
      %v2350 = vld [vmem:[#allocation2 + $0xa4] sm:$0xff]
      %v2351 = vld [vmem:[#allocation2 + $0xac] sm:$0xff]
      %v2352 = vld [vmem:[#allocation2 + $0xb4] sm:$0xff]
      %v2353 = vld [vmem:[#allocation2 + $0xbc] sm:$0xff]
      %v2354 = vld [vmem:[#allocation2 + $0xc4] sm:$0xff]
      %v2355 = vld [vmem:[#allocation2 + $0xcc] sm:$0xff]
      %v2356 = vld [vmem:[#allocation2 + $0xd4] sm:$0xff]
      %v2357 = vld [vmem:[#allocation2 + $0xdc] sm:$0xff]
      %v2358 = vld [vmem:[#allocation2 + $0xe4] sm:$0xff]
      %v2359 = vld [vmem:[#allocation2 + $0xec] sm:$0xff]
      %v2360 = vld [vmem:[#allocation2 + $0xf4] sm:$0xff]
      %v2361 = vld [vmem:[#allocation2 + $0xfc] sm:$0xff]
      %v2362 = vld [vmem:[#allocation2 + $0x104] sm:$0xff]
      %v2363 = vld [vmem:[#allocation2 + $0x10c] sm:$0xff]
      %v2364 = vld [vmem:[#allocation2 + $0x114] sm:$0xff]
      %v2365 = vld [vmem:[#allocation2 + $0x11c] sm:$0xff]
      %v2366 = vld [vmem:[#allocation2 + $0x124] sm:$0xff]
      %v2367 = vld [vmem:[#allocation2 + $0x12c] sm:$0xff]
      %s2368 = scalar_lea.vmem %s1, 20
      %v2369 = vld [vmem:[%s2368] sm:$0xf]
      %v2371 = vsel %vm212, %v2332, 0
      %v2374 = vsel %vm212, %v2333, 0
      %v2377 = vsel %vm212, %v2334, 0
      %v2380 = vsel %vm212, %v2335, 0
      %v2383 = vsel %vm212, %v2336, 0
      %v2386 = vsel %vm212, %v2337, 0
      %v2389 = vsel %vm212, %v2338, 0
      %v2392 = vsel %vm212, %v2339, 0
      %v2395 = vsel %vm212, %v2340, 0
      %v2398 = vsel %vm212, %v2341, 0
      %v2401 = vsel %vm212, %v2342, 0
      %v2404 = vsel %vm212, %v2343, 0
      %v2407 = vsel %vm212, %v2344, 0
      %v2410 = vsel %vm212, %v2345, 0
      %v2413 = vsel %vm212, %v2346, 0
      %v2416 = vsel %vm212, %v2347, 0
      %v2419 = vsel %vm212, %v2348, 0
      %v2422 = vsel %vm212, %v2349, 0
      %v2425 = vsel %vm212, %v2350, 0
      %v2428 = vsel %vm212, %v2351, 0
      %v2431 = vsel %vm212, %v2352, 0
      %v2434 = vsel %vm212, %v2353, 0
      %v2437 = vsel %vm212, %v2354, 0
      %v2440 = vsel %vm212, %v2355, 0
      %v2443 = vsel %vm212, %v2356, 0
      %v2446 = vsel %vm212, %v2357, 0
      %v2449 = vsel %vm212, %v2358, 0
      %v2452 = vsel %vm212, %v2359, 0
      %v2455 = vsel %vm212, %v2360, 0
      %v2458 = vsel %vm212, %v2361, 0
      %v2461 = vsel %vm212, %v2362, 0
      %v2464 = vsel %vm212, %v2363, 0
      %v2467 = vsel %vm212, %v2364, 0
      %v2470 = vsel %vm212, %v2365, 0
      %v2473 = vsel %vm212, %v2366, 0
      %v2476 = vsel %vm212, %v2367, 0
      %v2479 = vsel %vm437, %v2369, 0
      %2481 = vmatprep.subr.mxu0 0.0
      %2482 = vmatpush1.msra.mxu0 %v2479
      %2483 = vmatprep.subr.mxu0 0.0
      %2484 = vmatpush1.msra.mxu0 0.0
      %2485 = vmatprep.subr.mxu0 0.0
      %2486 = vmatpush1.msra.mxu0 0.0
      %2487 = vmatprep.subr.mxu0 0.0
      %2488 = vmatpush1.msra.mxu0 0.0
      %2489 = vmatprep.subr.mxu0 0.0
      %2490 = vmatpush1.msra.mxu0 0.0
      %2491 = vmatprep.subr.mxu0 0.0
      %2492 = vmatpush1.msra.mxu0 0.0
      %2493 = vmatprep.subr.mxu0 0.0
      %2494 = vmatpush1.msra.mxu0 0.0
      %2495 = vmatprep.subr.mxu0 0.0
      %2496 = vmatpush1.msra.mxu0 0.0
      %2497 = vmatprep.subr.mxu0 0.0
      %2498 = vmatpush1.msra.mxu0 0.0
      %2499 = vmatprep.subr.mxu0 0.0
      %2500 = vmatpush1.msra.mxu0 0.0
      %2501 = vmatprep.subr.mxu0 0.0
      %2502 = vmatpush1.msra.mxu0 0.0
      %2503 = vmatprep.subr.mxu0 0.0
      %2504 = vmatpush1.msra.mxu0 0.0
      %2505 = vmatprep.subr.mxu0 0.0
      %2506 = vmatpush1.msra.mxu0 0.0
      %2507 = vmatprep.subr.mxu0 0.0
      %2508 = vmatpush1.msra.mxu0 0.0
      %2509 = vmatprep.subr.mxu0 0.0
      %2510 = vmatpush1.msra.mxu0 0.0
      %2511 = vmatprep.subr.mxu0 0.0
      %2512 = vmatpush1.msra.mxu0 0.0
      %2513 = vmatprep.subr.mxu0 0.0
      %2514 = vmatpush1.msra.mxu0 0.0
      %2515 = vmatprep.subr.mxu0 0.0
      %2516 = vmatpush1.msra.mxu0 0.0
      %2517 = vmatprep.subr.mxu0 0.0
      %2518 = vmatpush1.msra.mxu0 0.0
      %2519 = vmatprep.subr.mxu0 0.0
      %2520 = vmatpush1.msra.mxu0 0.0
      %2521 = vmatprep.subr.mxu0 0.0
      %2522 = vmatpush1.msra.mxu0 0.0
      %2523 = vmatprep.subr.mxu0 0.0
      %2524 = vmatpush1.msra.mxu0 0.0
      %2525 = vmatprep.subr.mxu0 0.0
      %2526 = vmatpush1.msra.mxu0 0.0
      %2527 = vmatprep.subr.mxu0 0.0
      %2528 = vmatpush1.msra.mxu0 0.0
      %2529 = vmatprep.subr.mxu0 0.0
      %2530 = vmatpush1.msra.mxu0 0.0
      %2531 = vmatprep.subr.mxu0 0.0
      %2532 = vmatpush1.msra.mxu0 0.0
      %2533 = vmatprep.subr.mxu0 0.0
      %2534 = vmatpush1.msra.mxu0 0.0
      %2535 = vmatprep.subr.mxu0 0.0
      %2536 = vmatpush1.msra.mxu0 0.0
      %2537 = vmatprep.subr.mxu0 0.0
      %2538 = vmatpush1.msra.mxu0 0.0
      %2539 = vmatprep.subr.mxu0 0.0
      %2540 = vmatpush1.msra.mxu0 0.0
      %2541 = vmatprep.subr.mxu0 0.0
      %2542 = vmatpush1.msra.mxu0 0.0
      %2543 = vmatprep.subr.mxu0 0.0
      %2544 = vmatpush1.msra.mxu0 0.0
      %2545 = vmatprep.mubr.f32.mxu0 0.0
      %2546 = vmatmul.mubr.f32.gmra.mrb[0].mxu0 %v2371
      %v2547 = vpop.f32.mrb[0].mxu0
      %v2548 = vadd.f32 0.0, %v2547
      %v2549 = vpop.f32.mrb[0].mxu0
      %2550 = vmatprep.mubr.f32.mxu0 0.0
      %2551 = vmatmul.mubr.f32.gmra.mrb[0].mxu0 %v2374
      %v2552 = vpop.f32.mrb[0].mxu0
      %v2553 = vadd.f32 0.0, %v2552
      %v2554 = vpop.f32.mrb[0].mxu0
      %2555 = vmatprep.mubr.f32.mxu0 0.0
      %2556 = vmatmul.mubr.f32.gmra.mrb[0].mxu0 %v2377
      %v2557 = vpop.f32.mrb[0].mxu0
      %v2558 = vadd.f32 0.0, %v2557
      %v2559 = vpop.f32.mrb[0].mxu0
      %2560 = vmatprep.mubr.f32.mxu0 0.0
      %2561 = vmatmul.mubr.f32.gmra.mrb[0].mxu0 %v2380
      %v2562 = vpop.f32.mrb[0].mxu0
      %v2563 = vadd.f32 0.0, %v2562
      %v2564 = vpop.f32.mrb[0].mxu0
      %2565 = vmatprep.mubr.f32.mxu0 0.0
      %2566 = vmatmul.mubr.f32.gmra.mrb[0].mxu0 %v2383
      %v2567 = vpop.f32.mrb[0].mxu0
      %v2568 = vadd.f32 0.0, %v2567
      %v2569 = vpop.f32.mrb[0].mxu0
      %2570 = vmatprep.mubr.f32.mxu0 0.0
      %2571 = vmatmul.mubr.f32.gmra.mrb[0].mxu0 %v2386
      %v2572 = vpop.f32.mrb[0].mxu0
      %v2573 = vadd.f32 0.0, %v2572
      %v2574 = vpop.f32.mrb[0].mxu0
      %2575 = vmatprep.mubr.f32.mxu0 0.0
      %2576 = vmatmul.mubr.f32.gmra.mrb[0].mxu0 %v2389
      %v2577 = vpop.f32.mrb[0].mxu0
      %v2578 = vadd.f32 0.0, %v2577
      %v2579 = vpop.f32.mrb[0].mxu0
      %2580 = vmatprep.mubr.f32.mxu0 0.0
      %2581 = vmatmul.mubr.f32.gmra.mrb[0].mxu0 %v2392
      %v2582 = vpop.f32.mrb[0].mxu0
      %v2583 = vadd.f32 0.0, %v2582
      %v2584 = vpop.f32.mrb[0].mxu0
      %2585 = vmatprep.mubr.f32.mxu0 0.0
      %2586 = vmatmul.mubr.f32.gmra.mrb[0].mxu0 %v2395
      %v2587 = vpop.f32.mrb[0].mxu0
      %v2588 = vadd.f32 0.0, %v2587
      %v2589 = vpop.f32.mrb[0].mxu0
      %2590 = vmatprep.mubr.f32.mxu0 0.0
      %2591 = vmatmul.mubr.f32.gmra.mrb[0].mxu0 %v2398
      %v2592 = vpop.f32.mrb[0].mxu0
      %v2593 = vadd.f32 0.0, %v2592
      %v2594 = vpop.f32.mrb[0].mxu0
      %2595 = vmatprep.mubr.f32.mxu0 0.0
      %2596 = vmatmul.mubr.f32.gmra.mrb[0].mxu0 %v2401
      %v2597 = vpop.f32.mrb[0].mxu0
      %v2598 = vadd.f32 0.0, %v2597
      %v2599 = vpop.f32.mrb[0].mxu0
      %2600 = vmatprep.mubr.f32.mxu0 0.0
      %2601 = vmatmul.mubr.f32.gmra.mrb[0].mxu0 %v2404
      %v2602 = vpop.f32.mrb[0].mxu0
      %v2603 = vadd.f32 0.0, %v2602
      %v2604 = vpop.f32.mrb[0].mxu0
      %2605 = vmatprep.mubr.f32.mxu0 0.0
      %2606 = vmatmul.mubr.f32.gmra.mrb[0].mxu0 %v2407
      %v2607 = vpop.f32.mrb[0].mxu0
      %v2608 = vadd.f32 0.0, %v2607
      %v2609 = vpop.f32.mrb[0].mxu0
      %2610 = vmatprep.mubr.f32.mxu0 0.0
      %2611 = vmatmul.mubr.f32.gmra.mrb[0].mxu0 %v2410
      %v2612 = vpop.f32.mrb[0].mxu0
      %v2613 = vadd.f32 0.0, %v2612
      %v2614 = vpop.f32.mrb[0].mxu0
      %2615 = vmatprep.mubr.f32.mxu0 0.0
      %2616 = vmatmul.mubr.f32.gmra.mrb[0].mxu0 %v2413
      %v2617 = vpop.f32.mrb[0].mxu0
      %v2618 = vadd.f32 0.0, %v2617
      %v2619 = vpop.f32.mrb[0].mxu0
      %2620 = vmatprep.mubr.f32.mxu0 0.0
      %2621 = vmatmul.mubr.f32.gmra.mrb[0].mxu0 %v2416
      %v2622 = vpop.f32.mrb[0].mxu0
      %v2623 = vadd.f32 0.0, %v2622
      %v2624 = vpop.f32.mrb[0].mxu0
      %2625 = vmatprep.mubr.f32.mxu0 0.0
      %2626 = vmatmul.mubr.f32.gmra.mrb[0].mxu0 %v2419
      %v2627 = vpop.f32.mrb[0].mxu0
      %v2628 = vadd.f32 0.0, %v2627
      %v2629 = vpop.f32.mrb[0].mxu0
      %2630 = vmatprep.mubr.f32.mxu0 0.0
      %2631 = vmatmul.mubr.f32.gmra.mrb[0].mxu0 %v2422
      %v2632 = vpop.f32.mrb[0].mxu0
      %v2633 = vadd.f32 0.0, %v2632
      %v2634 = vpop.f32.mrb[0].mxu0
      %2635 = vmatprep.mubr.f32.mxu0 0.0
      %2636 = vmatmul.mubr.f32.gmra.mrb[0].mxu0 %v2425
      %v2637 = vpop.f32.mrb[0].mxu0
      %v2638 = vadd.f32 0.0, %v2637
      %v2639 = vpop.f32.mrb[0].mxu0
      %2640 = vmatprep.mubr.f32.mxu0 0.0
      %2641 = vmatmul.mubr.f32.gmra.mrb[0].mxu0 %v2428
      %v2642 = vpop.f32.mrb[0].mxu0
      %v2643 = vadd.f32 0.0, %v2642
      %v2644 = vpop.f32.mrb[0].mxu0
      %2645 = vmatprep.mubr.f32.mxu0 0.0
      %2646 = vmatmul.mubr.f32.gmra.mrb[0].mxu0 %v2431
      %v2647 = vpop.f32.mrb[0].mxu0
      %v2648 = vadd.f32 0.0, %v2647
      %v2649 = vpop.f32.mrb[0].mxu0
      %2650 = vmatprep.mubr.f32.mxu0 0.0
      %2651 = vmatmul.mubr.f32.gmra.mrb[0].mxu0 %v2434
      %v2652 = vpop.f32.mrb[0].mxu0
      %v2653 = vadd.f32 0.0, %v2652
      %v2654 = vpop.f32.mrb[0].mxu0
      %2655 = vmatprep.mubr.f32.mxu0 0.0
      %2656 = vmatmul.mubr.f32.gmra.mrb[0].mxu0 %v2437
      %v2657 = vpop.f32.mrb[0].mxu0
      %v2658 = vadd.f32 0.0, %v2657
      %v2659 = vpop.f32.mrb[0].mxu0
      %2660 = vmatprep.mubr.f32.mxu0 0.0
      %2661 = vmatmul.mubr.f32.gmra.mrb[0].mxu0 %v2440
      %v2662 = vpop.f32.mrb[0].mxu0
      %v2663 = vadd.f32 0.0, %v2662
      %v2664 = vpop.f32.mrb[0].mxu0
      %2665 = vmatprep.mubr.f32.mxu0 0.0
      %2666 = vmatmul.mubr.f32.gmra.mrb[0].mxu0 %v2443
      %v2667 = vpop.f32.mrb[0].mxu0
      %v2668 = vadd.f32 0.0, %v2667
      %v2669 = vpop.f32.mrb[0].mxu0
      %2670 = vmatprep.mubr.f32.mxu0 0.0
      %2671 = vmatmul.mubr.f32.gmra.mrb[0].mxu0 %v2446
      %v2672 = vpop.f32.mrb[0].mxu0
      %v2673 = vadd.f32 0.0, %v2672
      %v2674 = vpop.f32.mrb[0].mxu0
      %2675 = vmatprep.mubr.f32.mxu0 0.0
      %2676 = vmatmul.mubr.f32.gmra.mrb[0].mxu0 %v2449
      %v2677 = vpop.f32.mrb[0].mxu0
      %v2678 = vadd.f32 0.0, %v2677
      %v2679 = vpop.f32.mrb[0].mxu0
      %2680 = vmatprep.mubr.f32.mxu0 0.0
      %2681 = vmatmul.mubr.f32.gmra.mrb[0].mxu0 %v2452
      %v2682 = vpop.f32.mrb[0].mxu0
      %v2683 = vadd.f32 0.0, %v2682
      %v2684 = vpop.f32.mrb[0].mxu0
      %2685 = vmatprep.mubr.f32.mxu0 0.0
      %2686 = vmatmul.mubr.f32.gmra.mrb[0].mxu0 %v2455
      %v2687 = vpop.f32.mrb[0].mxu0
      %v2688 = vadd.f32 0.0, %v2687
      %v2689 = vpop.f32.mrb[0].mxu0
      %2690 = vmatprep.mubr.f32.mxu0 0.0
      %2691 = vmatmul.mubr.f32.gmra.mrb[0].mxu0 %v2458
      %v2692 = vpop.f32.mrb[0].mxu0
      %v2693 = vadd.f32 0.0, %v2692
      %v2694 = vpop.f32.mrb[0].mxu0
      %2695 = vmatprep.mubr.f32.mxu0 0.0
      %2696 = vmatmul.mubr.f32.gmra.mrb[0].mxu0 %v2461
      %v2697 = vpop.f32.mrb[0].mxu0
      %v2698 = vadd.f32 0.0, %v2697
      %v2699 = vpop.f32.mrb[0].mxu0
      %2700 = vmatprep.mubr.f32.mxu0 0.0
      %2701 = vmatmul.mubr.f32.gmra.mrb[0].mxu0 %v2464
      %v2702 = vpop.f32.mrb[0].mxu0
      %v2703 = vadd.f32 0.0, %v2702
      %v2704 = vpop.f32.mrb[0].mxu0
      %2705 = vmatprep.mubr.f32.mxu0 0.0
      %2706 = vmatmul.mubr.f32.gmra.mrb[0].mxu0 %v2467
      %v2707 = vpop.f32.mrb[0].mxu0
      %v2708 = vadd.f32 0.0, %v2707
      %v2709 = vpop.f32.mrb[0].mxu0
      %2710 = vmatprep.mubr.f32.mxu0 0.0
      %2711 = vmatmul.mubr.f32.gmra.mrb[0].mxu0 %v2470
      %v2712 = vpop.f32.mrb[0].mxu0
      %v2713 = vadd.f32 0.0, %v2712
      %v2714 = vpop.f32.mrb[0].mxu0
      %2715 = vmatprep.mubr.f32.mxu0 0.0
      %2716 = vmatmul.mubr.f32.gmra.mrb[0].mxu0 %v2473
      %v2717 = vpop.f32.mrb[0].mxu0
      %v2718 = vadd.f32 0.0, %v2717
      %v2719 = vpop.f32.mrb[0].mxu0
      %2720 = vmatprep.mubr.f32.mxu0 0.0
      %2721 = vmatmul.mubr.f32.gmra.mrb[0].mxu0 %v2476
      %v2722 = vpop.f32.mrb[0].mxu0
      %v2723 = vadd.f32 0.0, %v2722
      %v2724 = vpop.f32.mrb[0].mxu0
      %2725 = vdwg.mxu0
      %v2726 = vadd.f32 %v2296, %v2548
      %v2727 = vadd.f32 %v2297, %v2553
      %v2728 = vadd.f32 %v2298, %v2558
      %v2729 = vadd.f32 %v2299, %v2563
      %v2730 = vadd.f32 %v2300, %v2568
      %v2731 = vadd.f32 %v2301, %v2573
      %v2732 = vadd.f32 %v2302, %v2578
      %v2733 = vadd.f32 %v2303, %v2583
      %v2734 = vadd.f32 %v2304, %v2588
      %v2735 = vadd.f32 %v2305, %v2593
      %v2736 = vadd.f32 %v2306, %v2598
      %v2737 = vadd.f32 %v2307, %v2603
      %v2738 = vadd.f32 %v2308, %v2608
      %v2739 = vadd.f32 %v2309, %v2613
      %v2740 = vadd.f32 %v2310, %v2618
      %v2741 = vadd.f32 %v2311, %v2623
      %v2742 = vadd.f32 %v2312, %v2628
      %v2743 = vadd.f32 %v2313, %v2633
      %v2744 = vadd.f32 %v2314, %v2638
      %v2745 = vadd.f32 %v2315, %v2643
      %v2746 = vadd.f32 %v2316, %v2648
      %v2747 = vadd.f32 %v2317, %v2653
      %v2748 = vadd.f32 %v2318, %v2658
      %v2749 = vadd.f32 %v2319, %v2663
      %v2750 = vadd.f32 %v2320, %v2668
      %v2751 = vadd.f32 %v2321, %v2673
      %v2752 = vadd.f32 %v2322, %v2678
      %v2753 = vadd.f32 %v2323, %v2683
      %v2754 = vadd.f32 %v2324, %v2688
      %v2755 = vadd.f32 %v2325, %v2693
      %v2756 = vadd.f32 %v2326, %v2698
      %v2757 = vadd.f32 %v2327, %v2703
      %v2758 = vadd.f32 %v2328, %v2708
      %v2759 = vadd.f32 %v2329, %v2713
      %v2760 = vadd.f32 %v2330, %v2718
      %v2761 = vadd.f32 %v2331, %v2723
      %v2762 = vld [vmem:[#allocation2 + $0x24] sm:$0xff]
      %v2763 = vld [vmem:[#allocation2 + $0x2c] sm:$0xff]
      %v2764 = vld [vmem:[#allocation2 + $0x34] sm:$0xff]
      %v2765 = vld [vmem:[#allocation2 + $0x3c] sm:$0xff]
      %v2766 = vld [vmem:[#allocation2 + $0x44] sm:$0xff]
      %v2767 = vld [vmem:[#allocation2 + $0x4c] sm:$0xff]
      %v2768 = vld [vmem:[#allocation2 + $0x54] sm:$0xff]
      %v2769 = vld [vmem:[#allocation2 + $0x5c] sm:$0xff]
      %v2770 = vld [vmem:[#allocation2 + $0x64] sm:$0xff]
      %v2771 = vld [vmem:[#allocation2 + $0x6c] sm:$0xff]
      %v2772 = vld [vmem:[#allocation2 + $0x74] sm:$0xff]
      %v2773 = vld [vmem:[#allocation2 + $0x7c] sm:$0xff]
      %v2774 = vld [vmem:[#allocation2 + $0x84] sm:$0xff]
      %v2775 = vld [vmem:[#allocation2 + $0x8c] sm:$0xff]
      %v2776 = vld [vmem:[#allocation2 + $0x94] sm:$0xff]
      %v2777 = vld [vmem:[#allocation2 + $0x9c] sm:$0xff]
      %v2778 = vld [vmem:[#allocation2 + $0xa4] sm:$0xff]
      %v2779 = vld [vmem:[#allocation2 + $0xac] sm:$0xff]
      %v2780 = vld [vmem:[#allocation2 + $0xb4] sm:$0xff]
      %v2781 = vld [vmem:[#allocation2 + $0xbc] sm:$0xff]
      %v2782 = vld [vmem:[#allocation2 + $0xc4] sm:$0xff]
      %v2783 = vld [vmem:[#allocation2 + $0xcc] sm:$0xff]
      %v2784 = vld [vmem:[#allocation2 + $0xd4] sm:$0xff]
      %v2785 = vld [vmem:[#allocation2 + $0xdc] sm:$0xff]
      %v2786 = vld [vmem:[#allocation2 + $0xe4] sm:$0xff]
      %v2787 = vld [vmem:[#allocation2 + $0xec] sm:$0xff]
      %v2788 = vld [vmem:[#allocation2 + $0xf4] sm:$0xff]
      %v2789 = vld [vmem:[#allocation2 + $0xfc] sm:$0xff]
      %v2790 = vld [vmem:[#allocation2 + $0x104] sm:$0xff]
      %v2791 = vld [vmem:[#allocation2 + $0x10c] sm:$0xff]
      %v2792 = vld [vmem:[#allocation2 + $0x114] sm:$0xff]
      %v2793 = vld [vmem:[#allocation2 + $0x11c] sm:$0xff]
      %v2794 = vld [vmem:[#allocation2 + $0x124] sm:$0xff]
      %v2795 = vld [vmem:[#allocation2 + $0x12c] sm:$0xff]
      %v2796 = vld [vmem:[#allocation2 + $0x134] sm:$0xff]
      %v2797 = vld [vmem:[#allocation2 + $0x13c] sm:$0xff]
      %s2798 = scalar_lea.vmem %s1, 24
      %v2799 = vld [vmem:[%s2798] sm:$0xf]
      %v2801 = vsel %vm212, %v2762, 0
      %v2804 = vsel %vm212, %v2763, 0
      %v2807 = vsel %vm212, %v2764, 0
      %v2810 = vsel %vm212, %v2765, 0
      %v2813 = vsel %vm212, %v2766, 0
      %v2816 = vsel %vm212, %v2767, 0
      %v2819 = vsel %vm212, %v2768, 0
      %v2822 = vsel %vm212, %v2769, 0
      %v2825 = vsel %vm212, %v2770, 0
      %v2828 = vsel %vm212, %v2771, 0
      %v2831 = vsel %vm212, %v2772, 0
      %v2834 = vsel %vm212, %v2773, 0
      %v2837 = vsel %vm212, %v2774, 0
      %v2840 = vsel %vm212, %v2775, 0
      %v2843 = vsel %vm212, %v2776, 0
      %v2846 = vsel %vm212, %v2777, 0
      %v2849 = vsel %vm212, %v2778, 0
      %v2852 = vsel %vm212, %v2779, 0
      %v2855 = vsel %vm212, %v2780, 0
      %v2858 = vsel %vm212, %v2781, 0
      %v2861 = vsel %vm212, %v2782, 0
      %v2864 = vsel %vm212, %v2783, 0
      %v2867 = vsel %vm212, %v2784, 0
      %v2870 = vsel %vm212, %v2785, 0
      %v2873 = vsel %vm212, %v2786, 0
      %v2876 = vsel %vm212, %v2787, 0
      %v2879 = vsel %vm212, %v2788, 0
      %v2882 = vsel %vm212, %v2789, 0
      %v2885 = vsel %vm212, %v2790, 0
      %v2888 = vsel %vm212, %v2791, 0
      %v2891 = vsel %vm212, %v2792, 0
      %v2894 = vsel %vm212, %v2793, 0
      %v2897 = vsel %vm212, %v2794, 0
      %v2900 = vsel %vm212, %v2795, 0
      %v2903 = vsel %vm212, %v2796, 0
      %v2906 = vsel %vm212, %v2797, 0
      %v2909 = vsel %vm437, %v2799, 0
      %2911 = vmatprep.subr.mxu0 0.0
      %2912 = vmatpush1.msra.mxu0 %v2909
      %2913 = vmatprep.subr.mxu0 0.0
      %2914 = vmatpush1.msra.mxu0 0.0
      %2915 = vmatprep.subr.mxu0 0.0
      %2916 = vmatpush1.msra.mxu0 0.0
      %2917 = vmatprep.subr.mxu0 0.0
      %2918 = vmatpush1.msra.mxu0 0.0
      %2919 = vmatprep.subr.mxu0 0.0
      %2920 = vmatpush1.msra.mxu0 0.0
      %2921 = vmatprep.subr.mxu0 0.0
      %2922 = vmatpush1.msra.mxu0 0.0
      %2923 = vmatprep.subr.mxu0 0.0
      %2924 = vmatpush1.msra.mxu0 0.0
      %2925 = vmatprep.subr.mxu0 0.0
      %2926 = vmatpush1.msra.mxu0 0.0
      %2927 = vmatprep.subr.mxu0 0.0
      %2928 = vmatpush1.msra.mxu0 0.0
      %2929 = vmatprep.subr.mxu0 0.0
      %2930 = vmatpush1.msra.mxu0 0.0
      %2931 = vmatprep.subr.mxu0 0.0
      %2932 = vmatpush1.msra.mxu0 0.0
      %2933 = vmatprep.subr.mxu0 0.0
      %2934 = vmatpush1.msra.mxu0 0.0
      %2935 = vmatprep.subr.mxu0 0.0
      %2936 = vmatpush1.msra.mxu0 0.0
      %2937 = vmatprep.subr.mxu0 0.0
      %2938 = vmatpush1.msra.mxu0 0.0
      %2939 = vmatprep.subr.mxu0 0.0
      %2940 = vmatpush1.msra.mxu0 0.0
      %2941 = vmatprep.subr.mxu0 0.0
      %2942 = vmatpush1.msra.mxu0 0.0
      %2943 = vmatprep.subr.mxu0 0.0
      %2944 = vmatpush1.msra.mxu0 0.0
      %2945 = vmatprep.subr.mxu0 0.0
      %2946 = vmatpush1.msra.mxu0 0.0
      %2947 = vmatprep.subr.mxu0 0.0
      %2948 = vmatpush1.msra.mxu0 0.0
      %2949 = vmatprep.subr.mxu0 0.0
      %2950 = vmatpush1.msra.mxu0 0.0
      %2951 = vmatprep.subr.mxu0 0.0
      %2952 = vmatpush1.msra.mxu0 0.0
      %2953 = vmatprep.subr.mxu0 0.0
      %2954 = vmatpush1.msra.mxu0 0.0
      %2955 = vmatprep.subr.mxu0 0.0
      %2956 = vmatpush1.msra.mxu0 0.0
      %2957 = vmatprep.subr.mxu0 0.0
      %2958 = vmatpush1.msra.mxu0 0.0
      %2959 = vmatprep.subr.mxu0 0.0
      %2960 = vmatpush1.msra.mxu0 0.0
      %2961 = vmatprep.subr.mxu0 0.0
      %2962 = vmatpush1.msra.mxu0 0.0
      %2963 = vmatprep.subr.mxu0 0.0
      %2964 = vmatpush1.msra.mxu0 0.0
      %2965 = vmatprep.subr.mxu0 0.0
      %2966 = vmatpush1.msra.mxu0 0.0
      %2967 = vmatprep.subr.mxu0 0.0
      %2968 = vmatpush1.msra.mxu0 0.0
      %2969 = vmatprep.subr.mxu0 0.0
      %2970 = vmatpush1.msra.mxu0 0.0
      %2971 = vmatprep.subr.mxu0 0.0
      %2972 = vmatpush1.msra.mxu0 0.0
      %2973 = vmatprep.subr.mxu0 0.0
      %2974 = vmatpush1.msra.mxu0 0.0
      %2975 = vmatprep.mubr.f32.mxu0 0.0
      %2976 = vmatmul.mubr.f32.gmra.mrb[0].mxu0 %v2801
      %v2977 = vpop.f32.mrb[0].mxu0
      %v2978 = vadd.f32 0.0, %v2977
      %v2979 = vpop.f32.mrb[0].mxu0
      %2980 = vmatprep.mubr.f32.mxu0 0.0
      %2981 = vmatmul.mubr.f32.gmra.mrb[0].mxu0 %v2804
      %v2982 = vpop.f32.mrb[0].mxu0
      %v2983 = vadd.f32 0.0, %v2982
      %v2984 = vpop.f32.mrb[0].mxu0
      %2985 = vmatprep.mubr.f32.mxu0 0.0
      %2986 = vmatmul.mubr.f32.gmra.mrb[0].mxu0 %v2807
      %v2987 = vpop.f32.mrb[0].mxu0
      %v2988 = vadd.f32 0.0, %v2987
      %v2989 = vpop.f32.mrb[0].mxu0
      %2990 = vmatprep.mubr.f32.mxu0 0.0
      %2991 = vmatmul.mubr.f32.gmra.mrb[0].mxu0 %v2810
      %v2992 = vpop.f32.mrb[0].mxu0
      %v2993 = vadd.f32 0.0, %v2992
      %v2994 = vpop.f32.mrb[0].mxu0
      %2995 = vmatprep.mubr.f32.mxu0 0.0
      %2996 = vmatmul.mubr.f32.gmra.mrb[0].mxu0 %v2813
      %v2997 = vpop.f32.mrb[0].mxu0
      %v2998 = vadd.f32 0.0, %v2997
      %v2999 = vpop.f32.mrb[0].mxu0
      %3000 = vmatprep.mubr.f32.mxu0 0.0
      %3001 = vmatmul.mubr.f32.gmra.mrb[0].mxu0 %v2816
      %v3002 = vpop.f32.mrb[0].mxu0
      %v3003 = vadd.f32 0.0, %v3002
      %v3004 = vpop.f32.mrb[0].mxu0
      %3005 = vmatprep.mubr.f32.mxu0 0.0
      %3006 = vmatmul.mubr.f32.gmra.mrb[0].mxu0 %v2819
      %v3007 = vpop.f32.mrb[0].mxu0
      %v3008 = vadd.f32 0.0, %v3007
      %v3009 = vpop.f32.mrb[0].mxu0
      %3010 = vmatprep.mubr.f32.mxu0 0.0
      %3011 = vmatmul.mubr.f32.gmra.mrb[0].mxu0 %v2822
      %v3012 = vpop.f32.mrb[0].mxu0
      %v3013 = vadd.f32 0.0, %v3012
      %v3014 = vpop.f32.mrb[0].mxu0
      %3015 = vmatprep.mubr.f32.mxu0 0.0
      %3016 = vmatmul.mubr.f32.gmra.mrb[0].mxu0 %v2825
      %v3017 = vpop.f32.mrb[0].mxu0
      %v3018 = vadd.f32 0.0, %v3017
      %v3019 = vpop.f32.mrb[0].mxu0
      %3020 = vmatprep.mubr.f32.mxu0 0.0
      %3021 = vmatmul.mubr.f32.gmra.mrb[0].mxu0 %v2828
      %v3022 = vpop.f32.mrb[0].mxu0
      %v3023 = vadd.f32 0.0, %v3022
      %v3024 = vpop.f32.mrb[0].mxu0
      %3025 = vmatprep.mubr.f32.mxu0 0.0
      %3026 = vmatmul.mubr.f32.gmra.mrb[0].mxu0 %v2831
      %v3027 = vpop.f32.mrb[0].mxu0
      %v3028 = vadd.f32 0.0, %v3027
      %v3029 = vpop.f32.mrb[0].mxu0
      %3030 = vmatprep.mubr.f32.mxu0 0.0
      %3031 = vmatmul.mubr.f32.gmra.mrb[0].mxu0 %v2834
      %v3032 = vpop.f32.mrb[0].mxu0
      %v3033 = vadd.f32 0.0, %v3032
      %v3034 = vpop.f32.mrb[0].mxu0
      %3035 = vmatprep.mubr.f32.mxu0 0.0
      %3036 = vmatmul.mubr.f32.gmra.mrb[0].mxu0 %v2837
      %v3037 = vpop.f32.mrb[0].mxu0
      %v3038 = vadd.f32 0.0, %v3037
      %v3039 = vpop.f32.mrb[0].mxu0
      %3040 = vmatprep.mubr.f32.mxu0 0.0
      %3041 = vmatmul.mubr.f32.gmra.mrb[0].mxu0 %v2840
      %v3042 = vpop.f32.mrb[0].mxu0
      %v3043 = vadd.f32 0.0, %v3042
      %v3044 = vpop.f32.mrb[0].mxu0
      %3045 = vmatprep.mubr.f32.mxu0 0.0
      %3046 = vmatmul.mubr.f32.gmra.mrb[0].mxu0 %v2843
      %v3047 = vpop.f32.mrb[0].mxu0
      %v3048 = vadd.f32 0.0, %v3047
      %v3049 = vpop.f32.mrb[0].mxu0
      %3050 = vmatprep.mubr.f32.mxu0 0.0
      %3051 = vmatmul.mubr.f32.gmra.mrb[0].mxu0 %v2846
      %v3052 = vpop.f32.mrb[0].mxu0
      %v3053 = vadd.f32 0.0, %v3052
      %v3054 = vpop.f32.mrb[0].mxu0
      %3055 = vmatprep.mubr.f32.mxu0 0.0
      %3056 = vmatmul.mubr.f32.gmra.mrb[0].mxu0 %v2849
      %v3057 = vpop.f32.mrb[0].mxu0
      %v3058 = vadd.f32 0.0, %v3057
      %v3059 = vpop.f32.mrb[0].mxu0
      %3060 = vmatprep.mubr.f32.mxu0 0.0
      %3061 = vmatmul.mubr.f32.gmra.mrb[0].mxu0 %v2852
      %v3062 = vpop.f32.mrb[0].mxu0
      %v3063 = vadd.f32 0.0, %v3062
      %v3064 = vpop.f32.mrb[0].mxu0
      %3065 = vmatprep.mubr.f32.mxu0 0.0
      %3066 = vmatmul.mubr.f32.gmra.mrb[0].mxu0 %v2855
      %v3067 = vpop.f32.mrb[0].mxu0
      %v3068 = vadd.f32 0.0, %v3067
      %v3069 = vpop.f32.mrb[0].mxu0
      %3070 = vmatprep.mubr.f32.mxu0 0.0
      %3071 = vmatmul.mubr.f32.gmra.mrb[0].mxu0 %v2858
      %v3072 = vpop.f32.mrb[0].mxu0
      %v3073 = vadd.f32 0.0, %v3072
      %v3074 = vpop.f32.mrb[0].mxu0
      %3075 = vmatprep.mubr.f32.mxu0 0.0
      %3076 = vmatmul.mubr.f32.gmra.mrb[0].mxu0 %v2861
      %v3077 = vpop.f32.mrb[0].mxu0
      %v3078 = vadd.f32 0.0, %v3077
      %v3079 = vpop.f32.mrb[0].mxu0
      %3080 = vmatprep.mubr.f32.mxu0 0.0
      %3081 = vmatmul.mubr.f32.gmra.mrb[0].mxu0 %v2864
      %v3082 = vpop.f32.mrb[0].mxu0
      %v3083 = vadd.f32 0.0, %v3082
      %v3084 = vpop.f32.mrb[0].mxu0
      %3085 = vmatprep.mubr.f32.mxu0 0.0
      %3086 = vmatmul.mubr.f32.gmra.mrb[0].mxu0 %v2867
      %v3087 = vpop.f32.mrb[0].mxu0
      %v3088 = vadd.f32 0.0, %v3087
      %v3089 = vpop.f32.mrb[0].mxu0
      %3090 = vmatprep.mubr.f32.mxu0 0.0
      %3091 = vmatmul.mubr.f32.gmra.mrb[0].mxu0 %v2870
      %v3092 = vpop.f32.mrb[0].mxu0
      %v3093 = vadd.f32 0.0, %v3092
      %v3094 = vpop.f32.mrb[0].mxu0
      %3095 = vmatprep.mubr.f32.mxu0 0.0
      %3096 = vmatmul.mubr.f32.gmra.mrb[0].mxu0 %v2873
      %v3097 = vpop.f32.mrb[0].mxu0
      %v3098 = vadd.f32 0.0, %v3097
      %v3099 = vpop.f32.mrb[0].mxu0
      %3100 = vmatprep.mubr.f32.mxu0 0.0
      %3101 = vmatmul.mubr.f32.gmra.mrb[0].mxu0 %v2876
      %v3102 = vpop.f32.mrb[0].mxu0
      %v3103 = vadd.f32 0.0, %v3102
      %v3104 = vpop.f32.mrb[0].mxu0
      %3105 = vmatprep.mubr.f32.mxu0 0.0
      %3106 = vmatmul.mubr.f32.gmra.mrb[0].mxu0 %v2879
      %v3107 = vpop.f32.mrb[0].mxu0
      %v3108 = vadd.f32 0.0, %v3107
      %v3109 = vpop.f32.mrb[0].mxu0
      %3110 = vmatprep.mubr.f32.mxu0 0.0
      %3111 = vmatmul.mubr.f32.gmra.mrb[0].mxu0 %v2882
      %v3112 = vpop.f32.mrb[0].mxu0
      %v3113 = vadd.f32 0.0, %v3112
      %v3114 = vpop.f32.mrb[0].mxu0
      %3115 = vmatprep.mubr.f32.mxu0 0.0
      %3116 = vmatmul.mubr.f32.gmra.mrb[0].mxu0 %v2885
      %v3117 = vpop.f32.mrb[0].mxu0
      %v3118 = vadd.f32 0.0, %v3117
      %v3119 = vpop.f32.mrb[0].mxu0
      %3120 = vmatprep.mubr.f32.mxu0 0.0
      %3121 = vmatmul.mubr.f32.gmra.mrb[0].mxu0 %v2888
      %v3122 = vpop.f32.mrb[0].mxu0
      %v3123 = vadd.f32 0.0, %v3122
      %v3124 = vpop.f32.mrb[0].mxu0
      %3125 = vmatprep.mubr.f32.mxu0 0.0
      %3126 = vmatmul.mubr.f32.gmra.mrb[0].mxu0 %v2891
      %v3127 = vpop.f32.mrb[0].mxu0
      %v3128 = vadd.f32 0.0, %v3127
      %v3129 = vpop.f32.mrb[0].mxu0
      %3130 = vmatprep.mubr.f32.mxu0 0.0
      %3131 = vmatmul.mubr.f32.gmra.mrb[0].mxu0 %v2894
      %v3132 = vpop.f32.mrb[0].mxu0
      %v3133 = vadd.f32 0.0, %v3132
      %v3134 = vpop.f32.mrb[0].mxu0
      %3135 = vmatprep.mubr.f32.mxu0 0.0
      %3136 = vmatmul.mubr.f32.gmra.mrb[0].mxu0 %v2897
      %v3137 = vpop.f32.mrb[0].mxu0
      %v3138 = vadd.f32 0.0, %v3137
      %v3139 = vpop.f32.mrb[0].mxu0
      %3140 = vmatprep.mubr.f32.mxu0 0.0
      %3141 = vmatmul.mubr.f32.gmra.mrb[0].mxu0 %v2900
      %v3142 = vpop.f32.mrb[0].mxu0
      %v3143 = vadd.f32 0.0, %v3142
      %v3144 = vpop.f32.mrb[0].mxu0
      %3145 = vmatprep.mubr.f32.mxu0 0.0
      %3146 = vmatmul.mubr.f32.gmra.mrb[0].mxu0 %v2903
      %v3147 = vpop.f32.mrb[0].mxu0
      %v3148 = vadd.f32 0.0, %v3147
      %v3149 = vpop.f32.mrb[0].mxu0
      %3150 = vmatprep.mubr.f32.mxu0 0.0
      %3151 = vmatmul.mubr.f32.gmra.mrb[0].mxu0 %v2906
      %v3152 = vpop.f32.mrb[0].mxu0
      %v3153 = vadd.f32 0.0, %v3152
      %v3154 = vpop.f32.mrb[0].mxu0
      %3155 = vdwg.mxu0
      %v3156 = vadd.f32 %v2726, %v2978
      %v3157 = vadd.f32 %v2727, %v2983
      %v3158 = vadd.f32 %v2728, %v2988
      %v3159 = vadd.f32 %v2729, %v2993
      %v3160 = vadd.f32 %v2730, %v2998
      %v3161 = vadd.f32 %v2731, %v3003
      %v3162 = vadd.f32 %v2732, %v3008
      %v3163 = vadd.f32 %v2733, %v3013
      %v3164 = vadd.f32 %v2734, %v3018
      %v3165 = vadd.f32 %v2735, %v3023
      %v3166 = vadd.f32 %v2736, %v3028
      %v3167 = vadd.f32 %v2737, %v3033
      %v3168 = vadd.f32 %v2738, %v3038
      %v3169 = vadd.f32 %v2739, %v3043
      %v3170 = vadd.f32 %v2740, %v3048
      %v3171 = vadd.f32 %v2741, %v3053
      %v3172 = vadd.f32 %v2742, %v3058
      %v3173 = vadd.f32 %v2743, %v3063
      %v3174 = vadd.f32 %v2744, %v3068
      %v3175 = vadd.f32 %v2745, %v3073
      %v3176 = vadd.f32 %v2746, %v3078
      %v3177 = vadd.f32 %v2747, %v3083
      %v3178 = vadd.f32 %v2748, %v3088
      %v3179 = vadd.f32 %v2749, %v3093
      %v3180 = vadd.f32 %v2750, %v3098
      %v3181 = vadd.f32 %v2751, %v3103
      %v3182 = vadd.f32 %v2752, %v3108
      %v3183 = vadd.f32 %v2753, %v3113
      %v3184 = vadd.f32 %v2754, %v3118
      %v3185 = vadd.f32 %v2755, %v3123
      %v3186 = vadd.f32 %v2756, %v3128
      %v3187 = vadd.f32 %v2757, %v3133
      %v3188 = vadd.f32 %v2758, %v3138
      %v3189 = vadd.f32 %v2759, %v3143
      %v3190 = vadd.f32 %v2760, %v3148
      %v3191 = vadd.f32 %v2761, %v3153
      %v3192 = vld [vmem:[#allocation2 + $0x25] sm:$0xff]
      %v3193 = vld [vmem:[#allocation2 + $0x2d] sm:$0xff]
      %v3194 = vld [vmem:[#allocation2 + $0x35] sm:$0xff]
      %v3195 = vld [vmem:[#allocation2 + $0x3d] sm:$0xff]
      %v3196 = vld [vmem:[#allocation2 + $0x45] sm:$0xff]
      %v3197 = vld [vmem:[#allocation2 + $0x4d] sm:$0xff]
      %v3198 = vld [vmem:[#allocation2 + $0x55] sm:$0xff]
      %v3199 = vld [vmem:[#allocation2 + $0x5d] sm:$0xff]
      %v3200 = vld [vmem:[#allocation2 + $0x65] sm:$0xff]
      %v3201 = vld [vmem:[#allocation2 + $0x6d] sm:$0xff]
      %v3202 = vld [vmem:[#allocation2 + $0x75] sm:$0xff]
      %v3203 = vld [vmem:[#allocation2 + $0x7d] sm:$0xff]
      %v3204 = vld [vmem:[#allocation2 + $0x85] sm:$0xff]
      %v3205 = vld [vmem:[#allocation2 + $0x8d] sm:$0xff]
      %v3206 = vld [vmem:[#allocation2 + $0x95] sm:$0xff]
      %v3207 = vld [vmem:[#allocation2 + $0x9d] sm:$0xff]
      %v3208 = vld [vmem:[#allocation2 + $0xa5] sm:$0xff]
      %v3209 = vld [vmem:[#allocation2 + $0xad] sm:$0xff]
      %v3210 = vld [vmem:[#allocation2 + $0xb5] sm:$0xff]
      %v3211 = vld [vmem:[#allocation2 + $0xbd] sm:$0xff]
      %v3212 = vld [vmem:[#allocation2 + $0xc5] sm:$0xff]
      %v3213 = vld [vmem:[#allocation2 + $0xcd] sm:$0xff]
      %v3214 = vld [vmem:[#allocation2 + $0xd5] sm:$0xff]
      %v3215 = vld [vmem:[#allocation2 + $0xdd] sm:$0xff]
      %v3216 = vld [vmem:[#allocation2 + $0xe5] sm:$0xff]
      %v3217 = vld [vmem:[#allocation2 + $0xed] sm:$0xff]
      %v3218 = vld [vmem:[#allocation2 + $0xf5] sm:$0xff]
      %v3219 = vld [vmem:[#allocation2 + $0xfd] sm:$0xff]
      %v3220 = vld [vmem:[#allocation2 + $0x105] sm:$0xff]
      %v3221 = vld [vmem:[#allocation2 + $0x10d] sm:$0xff]
      %v3222 = vld [vmem:[#allocation2 + $0x115] sm:$0xff]
      %v3223 = vld [vmem:[#allocation2 + $0x11d] sm:$0xff]
      %v3224 = vld [vmem:[#allocation2 + $0x125] sm:$0xff]
      %v3225 = vld [vmem:[#allocation2 + $0x12d] sm:$0xff]
      %v3226 = vld [vmem:[#allocation2 + $0x135] sm:$0xff]
      %v3227 = vld [vmem:[#allocation2 + $0x13d] sm:$0xff]
      %s3228 = scalar_lea.vmem %s1, 28
      %v3229 = vld [vmem:[%s3228] sm:$0xf]
      %v3231 = vsel %vm212, %v3192, 0
      %v3234 = vsel %vm212, %v3193, 0
      %v3237 = vsel %vm212, %v3194, 0
      %v3240 = vsel %vm212, %v3195, 0
      %v3243 = vsel %vm212, %v3196, 0
      %v3246 = vsel %vm212, %v3197, 0
      %v3249 = vsel %vm212, %v3198, 0
      %v3252 = vsel %vm212, %v3199, 0
      %v3255 = vsel %vm212, %v3200, 0
      %v3258 = vsel %vm212, %v3201, 0
      %v3261 = vsel %vm212, %v3202, 0
      %v3264 = vsel %vm212, %v3203, 0
      %v3267 = vsel %vm212, %v3204, 0
      %v3270 = vsel %vm212, %v3205, 0
      %v3273 = vsel %vm212, %v3206, 0
      %v3276 = vsel %vm212, %v3207, 0
      %v3279 = vsel %vm212, %v3208, 0
      %v3282 = vsel %vm212, %v3209, 0
      %v3285 = vsel %vm212, %v3210, 0
      %v3288 = vsel %vm212, %v3211, 0
      %v3291 = vsel %vm212, %v3212, 0
      %v3294 = vsel %vm212, %v3213, 0
      %v3297 = vsel %vm212, %v3214, 0
      %v3300 = vsel %vm212, %v3215, 0
      %v3303 = vsel %vm212, %v3216, 0
      %v3306 = vsel %vm212, %v3217, 0
      %v3309 = vsel %vm212, %v3218, 0
      %v3312 = vsel %vm212, %v3219, 0
      %v3315 = vsel %vm212, %v3220, 0
      %v3318 = vsel %vm212, %v3221, 0
      %v3321 = vsel %vm212, %v3222, 0
      %v3324 = vsel %vm212, %v3223, 0
      %v3327 = vsel %vm212, %v3224, 0
      %v3330 = vsel %vm212, %v3225, 0
      %v3333 = vsel %vm212, %v3226, 0
      %v3336 = vsel %vm212, %v3227, 0
      %v3339 = vsel %vm437, %v3229, 0
      %3341 = vmatprep.subr.mxu0 0.0
      %3342 = vmatpush1.msra.mxu0 %v3339
      %3343 = vmatprep.subr.mxu0 0.0
      %3344 = vmatpush1.msra.mxu0 0.0
      %3345 = vmatprep.subr.mxu0 0.0
      %3346 = vmatpush1.msra.mxu0 0.0
      %3347 = vmatprep.subr.mxu0 0.0
      %3348 = vmatpush1.msra.mxu0 0.0
      %3349 = vmatprep.subr.mxu0 0.0
      %3350 = vmatpush1.msra.mxu0 0.0
      %3351 = vmatprep.subr.mxu0 0.0
      %3352 = vmatpush1.msra.mxu0 0.0
      %3353 = vmatprep.subr.mxu0 0.0
      %3354 = vmatpush1.msra.mxu0 0.0
      %3355 = vmatprep.subr.mxu0 0.0
      %3356 = vmatpush1.msra.mxu0 0.0
      %3357 = vmatprep.subr.mxu0 0.0
      %3358 = vmatpush1.msra.mxu0 0.0
      %3359 = vmatprep.subr.mxu0 0.0
      %3360 = vmatpush1.msra.mxu0 0.0
      %3361 = vmatprep.subr.mxu0 0.0
      %3362 = vmatpush1.msra.mxu0 0.0
      %3363 = vmatprep.subr.mxu0 0.0
      %3364 = vmatpush1.msra.mxu0 0.0
      %3365 = vmatprep.subr.mxu0 0.0
      %3366 = vmatpush1.msra.mxu0 0.0
      %3367 = vmatprep.subr.mxu0 0.0
      %3368 = vmatpush1.msra.mxu0 0.0
      %3369 = vmatprep.subr.mxu0 0.0
      %3370 = vmatpush1.msra.mxu0 0.0
      %3371 = vmatprep.subr.mxu0 0.0
      %3372 = vmatpush1.msra.mxu0 0.0
      %3373 = vmatprep.subr.mxu0 0.0
      %3374 = vmatpush1.msra.mxu0 0.0
      %3375 = vmatprep.subr.mxu0 0.0
      %3376 = vmatpush1.msra.mxu0 0.0
      %3377 = vmatprep.subr.mxu0 0.0
      %3378 = vmatpush1.msra.mxu0 0.0
      %3379 = vmatprep.subr.mxu0 0.0
      %3380 = vmatpush1.msra.mxu0 0.0
      %3381 = vmatprep.subr.mxu0 0.0
      %3382 = vmatpush1.msra.mxu0 0.0
      %3383 = vmatprep.subr.mxu0 0.0
      %3384 = vmatpush1.msra.mxu0 0.0
      %3385 = vmatprep.subr.mxu0 0.0
      %3386 = vmatpush1.msra.mxu0 0.0
      %3387 = vmatprep.subr.mxu0 0.0
      %3388 = vmatpush1.msra.mxu0 0.0
      %3389 = vmatprep.subr.mxu0 0.0
      %3390 = vmatpush1.msra.mxu0 0.0
      %3391 = vmatprep.subr.mxu0 0.0
      %3392 = vmatpush1.msra.mxu0 0.0
      %3393 = vmatprep.subr.mxu0 0.0
      %3394 = vmatpush1.msra.mxu0 0.0
      %3395 = vmatprep.subr.mxu0 0.0
      %3396 = vmatpush1.msra.mxu0 0.0
      %3397 = vmatprep.subr.mxu0 0.0
      %3398 = vmatpush1.msra.mxu0 0.0
      %3399 = vmatprep.subr.mxu0 0.0
      %3400 = vmatpush1.msra.mxu0 0.0
      %3401 = vmatprep.subr.mxu0 0.0
      %3402 = vmatpush1.msra.mxu0 0.0
      %3403 = vmatprep.subr.mxu0 0.0
      %3404 = vmatpush1.msra.mxu0 0.0
      %3405 = vmatprep.mubr.f32.mxu0 0.0
      %3406 = vmatmul.mubr.f32.gmra.mrb[0].mxu0 %v3231
      %v3407 = vpop.f32.mrb[0].mxu0
      %v3408 = vadd.f32 0.0, %v3407
      %v3409 = vpop.f32.mrb[0].mxu0
      %3410 = vmatprep.mubr.f32.mxu0 0.0
      %3411 = vmatmul.mubr.f32.gmra.mrb[0].mxu0 %v3234
      %v3412 = vpop.f32.mrb[0].mxu0
      %v3413 = vadd.f32 0.0, %v3412
      %v3414 = vpop.f32.mrb[0].mxu0
      %3415 = vmatprep.mubr.f32.mxu0 0.0
      %3416 = vmatmul.mubr.f32.gmra.mrb[0].mxu0 %v3237
      %v3417 = vpop.f32.mrb[0].mxu0
      %v3418 = vadd.f32 0.0, %v3417
      %v3419 = vpop.f32.mrb[0].mxu0
      %3420 = vmatprep.mubr.f32.mxu0 0.0
      %3421 = vmatmul.mubr.f32.gmra.mrb[0].mxu0 %v3240
      %v3422 = vpop.f32.mrb[0].mxu0
      %v3423 = vadd.f32 0.0, %v3422
      %v3424 = vpop.f32.mrb[0].mxu0
      %3425 = vmatprep.mubr.f32.mxu0 0.0
      %3426 = vmatmul.mubr.f32.gmra.mrb[0].mxu0 %v3243
      %v3427 = vpop.f32.mrb[0].mxu0
      %v3428 = vadd.f32 0.0, %v3427
      %v3429 = vpop.f32.mrb[0].mxu0
      %3430 = vmatprep.mubr.f32.mxu0 0.0
      %3431 = vmatmul.mubr.f32.gmra.mrb[0].mxu0 %v3246
      %v3432 = vpop.f32.mrb[0].mxu0
      %v3433 = vadd.f32 0.0, %v3432
      %v3434 = vpop.f32.mrb[0].mxu0
      %3435 = vmatprep.mubr.f32.mxu0 0.0
      %3436 = vmatmul.mubr.f32.gmra.mrb[0].mxu0 %v3249
      %v3437 = vpop.f32.mrb[0].mxu0
      %v3438 = vadd.f32 0.0, %v3437
      %v3439 = vpop.f32.mrb[0].mxu0
      %3440 = vmatprep.mubr.f32.mxu0 0.0
      %3441 = vmatmul.mubr.f32.gmra.mrb[0].mxu0 %v3252
      %v3442 = vpop.f32.mrb[0].mxu0
      %v3443 = vadd.f32 0.0, %v3442
      %v3444 = vpop.f32.mrb[0].mxu0
      %3445 = vmatprep.mubr.f32.mxu0 0.0
      %3446 = vmatmul.mubr.f32.gmra.mrb[0].mxu0 %v3255
      %v3447 = vpop.f32.mrb[0].mxu0
      %v3448 = vadd.f32 0.0, %v3447
      %v3449 = vpop.f32.mrb[0].mxu0
      %3450 = vmatprep.mubr.f32.mxu0 0.0
      %3451 = vmatmul.mubr.f32.gmra.mrb[0].mxu0 %v3258
      %v3452 = vpop.f32.mrb[0].mxu0
      %v3453 = vadd.f32 0.0, %v3452
      %v3454 = vpop.f32.mrb[0].mxu0
      %3455 = vmatprep.mubr.f32.mxu0 0.0
      %3456 = vmatmul.mubr.f32.gmra.mrb[0].mxu0 %v3261
      %v3457 = vpop.f32.mrb[0].mxu0
      %v3458 = vadd.f32 0.0, %v3457
      %v3459 = vpop.f32.mrb[0].mxu0
      %3460 = vmatprep.mubr.f32.mxu0 0.0
      %3461 = vmatmul.mubr.f32.gmra.mrb[0].mxu0 %v3264
      %v3462 = vpop.f32.mrb[0].mxu0
      %v3463 = vadd.f32 0.0, %v3462
      %v3464 = vpop.f32.mrb[0].mxu0
      %3465 = vmatprep.mubr.f32.mxu0 0.0
      %3466 = vmatmul.mubr.f32.gmra.mrb[0].mxu0 %v3267
      %v3467 = vpop.f32.mrb[0].mxu0
      %v3468 = vadd.f32 0.0, %v3467
      %v3469 = vpop.f32.mrb[0].mxu0
      %3470 = vmatprep.mubr.f32.mxu0 0.0
      %3471 = vmatmul.mubr.f32.gmra.mrb[0].mxu0 %v3270
      %v3472 = vpop.f32.mrb[0].mxu0
      %v3473 = vadd.f32 0.0, %v3472
      %v3474 = vpop.f32.mrb[0].mxu0
      %3475 = vmatprep.mubr.f32.mxu0 0.0
      %3476 = vmatmul.mubr.f32.gmra.mrb[0].mxu0 %v3273
      %v3477 = vpop.f32.mrb[0].mxu0
      %v3478 = vadd.f32 0.0, %v3477
      %v3479 = vpop.f32.mrb[0].mxu0
      %3480 = vmatprep.mubr.f32.mxu0 0.0
      %3481 = vmatmul.mubr.f32.gmra.mrb[0].mxu0 %v3276
      %v3482 = vpop.f32.mrb[0].mxu0
      %v3483 = vadd.f32 0.0, %v3482
      %v3484 = vpop.f32.mrb[0].mxu0
      %3485 = vmatprep.mubr.f32.mxu0 0.0
      %3486 = vmatmul.mubr.f32.gmra.mrb[0].mxu0 %v3279
      %v3487 = vpop.f32.mrb[0].mxu0
      %v3488 = vadd.f32 0.0, %v3487
      %v3489 = vpop.f32.mrb[0].mxu0
      %3490 = vmatprep.mubr.f32.mxu0 0.0
      %3491 = vmatmul.mubr.f32.gmra.mrb[0].mxu0 %v3282
      %v3492 = vpop.f32.mrb[0].mxu0
      %v3493 = vadd.f32 0.0, %v3492
      %v3494 = vpop.f32.mrb[0].mxu0
      %3495 = vmatprep.mubr.f32.mxu0 0.0
      %3496 = vmatmul.mubr.f32.gmra.mrb[0].mxu0 %v3285
      %v3497 = vpop.f32.mrb[0].mxu0
      %v3498 = vadd.f32 0.0, %v3497
      %v3499 = vpop.f32.mrb[0].mxu0
      %3500 = vmatprep.mubr.f32.mxu0 0.0
      %3501 = vmatmul.mubr.f32.gmra.mrb[0].mxu0 %v3288
      %v3502 = vpop.f32.mrb[0].mxu0
      %v3503 = vadd.f32 0.0, %v3502
      %v3504 = vpop.f32.mrb[0].mxu0
      %3505 = vmatprep.mubr.f32.mxu0 0.0
      %3506 = vmatmul.mubr.f32.gmra.mrb[0].mxu0 %v3291
      %v3507 = vpop.f32.mrb[0].mxu0
      %v3508 = vadd.f32 0.0, %v3507
      %v3509 = vpop.f32.mrb[0].mxu0
      %3510 = vmatprep.mubr.f32.mxu0 0.0
      %3511 = vmatmul.mubr.f32.gmra.mrb[0].mxu0 %v3294
      %v3512 = vpop.f32.mrb[0].mxu0
      %v3513 = vadd.f32 0.0, %v3512
      %v3514 = vpop.f32.mrb[0].mxu0
      %3515 = vmatprep.mubr.f32.mxu0 0.0
      %3516 = vmatmul.mubr.f32.gmra.mrb[0].mxu0 %v3297
      %v3517 = vpop.f32.mrb[0].mxu0
      %v3518 = vadd.f32 0.0, %v3517
      %v3519 = vpop.f32.mrb[0].mxu0
      %3520 = vmatprep.mubr.f32.mxu0 0.0
      %3521 = vmatmul.mubr.f32.gmra.mrb[0].mxu0 %v3300
      %v3522 = vpop.f32.mrb[0].mxu0
      %v3523 = vadd.f32 0.0, %v3522
      %v3524 = vpop.f32.mrb[0].mxu0
      %3525 = vmatprep.mubr.f32.mxu0 0.0
      %3526 = vmatmul.mubr.f32.gmra.mrb[0].mxu0 %v3303
      %v3527 = vpop.f32.mrb[0].mxu0
      %v3528 = vadd.f32 0.0, %v3527
      %v3529 = vpop.f32.mrb[0].mxu0
      %3530 = vmatprep.mubr.f32.mxu0 0.0
      %3531 = vmatmul.mubr.f32.gmra.mrb[0].mxu0 %v3306
      %v3532 = vpop.f32.mrb[0].mxu0
      %v3533 = vadd.f32 0.0, %v3532
      %v3534 = vpop.f32.mrb[0].mxu0
      %3535 = vmatprep.mubr.f32.mxu0 0.0
      %3536 = vmatmul.mubr.f32.gmra.mrb[0].mxu0 %v3309
      %v3537 = vpop.f32.mrb[0].mxu0
      %v3538 = vadd.f32 0.0, %v3537
      %v3539 = vpop.f32.mrb[0].mxu0
      %3540 = vmatprep.mubr.f32.mxu0 0.0
      %3541 = vmatmul.mubr.f32.gmra.mrb[0].mxu0 %v3312
      %v3542 = vpop.f32.mrb[0].mxu0
      %v3543 = vadd.f32 0.0, %v3542
      %v3544 = vpop.f32.mrb[0].mxu0
      %3545 = vmatprep.mubr.f32.mxu0 0.0
      %3546 = vmatmul.mubr.f32.gmra.mrb[0].mxu0 %v3315
      %v3547 = vpop.f32.mrb[0].mxu0
      %v3548 = vadd.f32 0.0, %v3547
      %v3549 = vpop.f32.mrb[0].mxu0
      %3550 = vmatprep.mubr.f32.mxu0 0.0
      %3551 = vmatmul.mubr.f32.gmra.mrb[0].mxu0 %v3318
      %v3552 = vpop.f32.mrb[0].mxu0
      %v3553 = vadd.f32 0.0, %v3552
      %v3554 = vpop.f32.mrb[0].mxu0
      %3555 = vmatprep.mubr.f32.mxu0 0.0
      %3556 = vmatmul.mubr.f32.gmra.mrb[0].mxu0 %v3321
      %v3557 = vpop.f32.mrb[0].mxu0
      %v3558 = vadd.f32 0.0, %v3557
      %v3559 = vpop.f32.mrb[0].mxu0
      %3560 = vmatprep.mubr.f32.mxu0 0.0
      %3561 = vmatmul.mubr.f32.gmra.mrb[0].mxu0 %v3324
      %v3562 = vpop.f32.mrb[0].mxu0
      %v3563 = vadd.f32 0.0, %v3562
      %v3564 = vpop.f32.mrb[0].mxu0
      %3565 = vmatprep.mubr.f32.mxu0 0.0
      %3566 = vmatmul.mubr.f32.gmra.mrb[0].mxu0 %v3327
      %v3567 = vpop.f32.mrb[0].mxu0
      %v3568 = vadd.f32 0.0, %v3567
      %v3569 = vpop.f32.mrb[0].mxu0
      %3570 = vmatprep.mubr.f32.mxu0 0.0
      %3571 = vmatmul.mubr.f32.gmra.mrb[0].mxu0 %v3330
      %v3572 = vpop.f32.mrb[0].mxu0
      %v3573 = vadd.f32 0.0, %v3572
      %v3574 = vpop.f32.mrb[0].mxu0
      %3575 = vmatprep.mubr.f32.mxu0 0.0
      %3576 = vmatmul.mubr.f32.gmra.mrb[0].mxu0 %v3333
      %v3577 = vpop.f32.mrb[0].mxu0
      %v3578 = vadd.f32 0.0, %v3577
      %v3579 = vpop.f32.mrb[0].mxu0
      %3580 = vmatprep.mubr.f32.mxu0 0.0
      %3581 = vmatmul.mubr.f32.gmra.mrb[0].mxu0 %v3336
      %v3582 = vpop.f32.mrb[0].mxu0
      %v3583 = vadd.f32 0.0, %v3582
      %v3584 = vpop.f32.mrb[0].mxu0
      %3585 = vdwg.mxu0
      %v3586 = vadd.f32 %v3156, %v3408
      %v3587 = vadd.f32 %v3157, %v3413
      %v3588 = vadd.f32 %v3158, %v3418
      %v3589 = vadd.f32 %v3159, %v3423
      %v3590 = vadd.f32 %v3160, %v3428
      %v3591 = vadd.f32 %v3161, %v3433
      %v3592 = vadd.f32 %v3162, %v3438
      %v3593 = vadd.f32 %v3163, %v3443
      %v3594 = vadd.f32 %v3164, %v3448
      %v3595 = vadd.f32 %v3165, %v3453
      %v3596 = vadd.f32 %v3166, %v3458
      %v3597 = vadd.f32 %v3167, %v3463
      %v3598 = vadd.f32 %v3168, %v3468
      %v3599 = vadd.f32 %v3169, %v3473
      %v3600 = vadd.f32 %v3170, %v3478
      %v3601 = vadd.f32 %v3171, %v3483
      %v3602 = vadd.f32 %v3172, %v3488
      %v3603 = vadd.f32 %v3173, %v3493
      %v3604 = vadd.f32 %v3174, %v3498
      %v3605 = vadd.f32 %v3175, %v3503
      %v3606 = vadd.f32 %v3176, %v3508
      %v3607 = vadd.f32 %v3177, %v3513
      %v3608 = vadd.f32 %v3178, %v3518
      %v3609 = vadd.f32 %v3179, %v3523
      %v3610 = vadd.f32 %v3180, %v3528
      %v3611 = vadd.f32 %v3181, %v3533
      %v3612 = vadd.f32 %v3182, %v3538
      %v3613 = vadd.f32 %v3183, %v3543
      %v3614 = vadd.f32 %v3184, %v3548
      %v3615 = vadd.f32 %v3185, %v3553
      %v3616 = vadd.f32 %v3186, %v3558
      %v3617 = vadd.f32 %v3187, %v3563
      %v3618 = vadd.f32 %v3188, %v3568
      %v3619 = vadd.f32 %v3189, %v3573
      %v3620 = vadd.f32 %v3190, %v3578
      %v3621 = vadd.f32 %v3191, %v3583
      %v3622 = vld [vmem:[#allocation2 + $0x26] sm:$0xff]
      %v3623 = vld [vmem:[#allocation2 + $0x2e] sm:$0xff]
      %v3624 = vld [vmem:[#allocation2 + $0x36] sm:$0xff]
      %v3625 = vld [vmem:[#allocation2 + $0x3e] sm:$0xff]
      %v3626 = vld [vmem:[#allocation2 + $0x46] sm:$0xff]
      %v3627 = vld [vmem:[#allocation2 + $0x4e] sm:$0xff]
      %v3628 = vld [vmem:[#allocation2 + $0x56] sm:$0xff]
      %v3629 = vld [vmem:[#allocation2 + $0x5e] sm:$0xff]
      %v3630 = vld [vmem:[#allocation2 + $0x66] sm:$0xff]
      %v3631 = vld [vmem:[#allocation2 + $0x6e] sm:$0xff]
      %v3632 = vld [vmem:[#allocation2 + $0x76] sm:$0xff]
      %v3633 = vld [vmem:[#allocation2 + $0x7e] sm:$0xff]
      %v3634 = vld [vmem:[#allocation2 + $0x86] sm:$0xff]
      %v3635 = vld [vmem:[#allocation2 + $0x8e] sm:$0xff]
      %v3636 = vld [vmem:[#allocation2 + $0x96] sm:$0xff]
      %v3637 = vld [vmem:[#allocation2 + $0x9e] sm:$0xff]
      %v3638 = vld [vmem:[#allocation2 + $0xa6] sm:$0xff]
      %v3639 = vld [vmem:[#allocation2 + $0xae] sm:$0xff]
      %v3640 = vld [vmem:[#allocation2 + $0xb6] sm:$0xff]
      %v3641 = vld [vmem:[#allocation2 + $0xbe] sm:$0xff]
      %v3642 = vld [vmem:[#allocation2 + $0xc6] sm:$0xff]
      %v3643 = vld [vmem:[#allocation2 + $0xce] sm:$0xff]
      %v3644 = vld [vmem:[#allocation2 + $0xd6] sm:$0xff]
      %v3645 = vld [vmem:[#allocation2 + $0xde] sm:$0xff]
      %v3646 = vld [vmem:[#allocation2 + $0xe6] sm:$0xff]
      %v3647 = vld [vmem:[#allocation2 + $0xee] sm:$0xff]
      %v3648 = vld [vmem:[#allocation2 + $0xf6] sm:$0xff]
      %v3649 = vld [vmem:[#allocation2 + $0xfe] sm:$0xff]
      %v3650 = vld [vmem:[#allocation2 + $0x106] sm:$0xff]
      %v3651 = vld [vmem:[#allocation2 + $0x10e] sm:$0xff]
      %v3652 = vld [vmem:[#allocation2 + $0x116] sm:$0xff]
      %v3653 = vld [vmem:[#allocation2 + $0x11e] sm:$0xff]
      %v3654 = vld [vmem:[#allocation2 + $0x126] sm:$0xff]
      %v3655 = vld [vmem:[#allocation2 + $0x12e] sm:$0xff]
      %v3656 = vld [vmem:[#allocation2 + $0x136] sm:$0xff]
      %v3657 = vld [vmem:[#allocation2 + $0x13e] sm:$0xff]
      %s3658 = scalar_lea.vmem %s1, 32
      %v3659 = vld [vmem:[%s3658] sm:$0xf]
      %v3661 = vsel %vm212, %v3622, 0
      %v3664 = vsel %vm212, %v3623, 0
      %v3667 = vsel %vm212, %v3624, 0
      %v3670 = vsel %vm212, %v3625, 0
      %v3673 = vsel %vm212, %v3626, 0
      %v3676 = vsel %vm212, %v3627, 0
      %v3679 = vsel %vm212, %v3628, 0
      %v3682 = vsel %vm212, %v3629, 0
      %v3685 = vsel %vm212, %v3630, 0
      %v3688 = vsel %vm212, %v3631, 0
      %v3691 = vsel %vm212, %v3632, 0
      %v3694 = vsel %vm212, %v3633, 0
      %v3697 = vsel %vm212, %v3634, 0
      %v3700 = vsel %vm212, %v3635, 0
      %v3703 = vsel %vm212, %v3636, 0
      %v3706 = vsel %vm212, %v3637, 0
      %v3709 = vsel %vm212, %v3638, 0
      %v3712 = vsel %vm212, %v3639, 0
      %v3715 = vsel %vm212, %v3640, 0
      %v3718 = vsel %vm212, %v3641, 0
      %v3721 = vsel %vm212, %v3642, 0
      %v3724 = vsel %vm212, %v3643, 0
      %v3727 = vsel %vm212, %v3644, 0
      %v3730 = vsel %vm212, %v3645, 0
      %v3733 = vsel %vm212, %v3646, 0
      %v3736 = vsel %vm212, %v3647, 0
      %v3739 = vsel %vm212, %v3648, 0
      %v3742 = vsel %vm212, %v3649, 0
      %v3745 = vsel %vm212, %v3650, 0
      %v3748 = vsel %vm212, %v3651, 0
      %v3751 = vsel %vm212, %v3652, 0
      %v3754 = vsel %vm212, %v3653, 0
      %v3757 = vsel %vm212, %v3654, 0
      %v3760 = vsel %vm212, %v3655, 0
      %v3763 = vsel %vm212, %v3656, 0
      %v3766 = vsel %vm212, %v3657, 0
      %v3769 = vsel %vm437, %v3659, 0
      %3771 = vmatprep.subr.mxu0 0.0
      %3772 = vmatpush1.msra.mxu0 %v3769
      %3773 = vmatprep.subr.mxu0 0.0
      %3774 = vmatpush1.msra.mxu0 0.0
      %3775 = vmatprep.subr.mxu0 0.0
      %3776 = vmatpush1.msra.mxu0 0.0
      %3777 = vmatprep.subr.mxu0 0.0
      %3778 = vmatpush1.msra.mxu0 0.0
      %3779 = vmatprep.subr.mxu0 0.0
      %3780 = vmatpush1.msra.mxu0 0.0
      %3781 = vmatprep.subr.mxu0 0.0
      %3782 = vmatpush1.msra.mxu0 0.0
      %3783 = vmatprep.subr.mxu0 0.0
      %3784 = vmatpush1.msra.mxu0 0.0
      %3785 = vmatprep.subr.mxu0 0.0
      %3786 = vmatpush1.msra.mxu0 0.0
      %3787 = vmatprep.subr.mxu0 0.0
      %3788 = vmatpush1.msra.mxu0 0.0
      %3789 = vmatprep.subr.mxu0 0.0
      %3790 = vmatpush1.msra.mxu0 0.0
      %3791 = vmatprep.subr.mxu0 0.0
      %3792 = vmatpush1.msra.mxu0 0.0
      %3793 = vmatprep.subr.mxu0 0.0
      %3794 = vmatpush1.msra.mxu0 0.0
      %3795 = vmatprep.subr.mxu0 0.0
      %3796 = vmatpush1.msra.mxu0 0.0
      %3797 = vmatprep.subr.mxu0 0.0
      %3798 = vmatpush1.msra.mxu0 0.0
      %3799 = vmatprep.subr.mxu0 0.0
      %3800 = vmatpush1.msra.mxu0 0.0
      %3801 = vmatprep.subr.mxu0 0.0
      %3802 = vmatpush1.msra.mxu0 0.0
      %3803 = vmatprep.subr.mxu0 0.0
      %3804 = vmatpush1.msra.mxu0 0.0
      %3805 = vmatprep.subr.mxu0 0.0
      %3806 = vmatpush1.msra.mxu0 0.0
      %3807 = vmatprep.subr.mxu0 0.0
      %3808 = vmatpush1.msra.mxu0 0.0
      %3809 = vmatprep.subr.mxu0 0.0
      %3810 = vmatpush1.msra.mxu0 0.0
      %3811 = vmatprep.subr.mxu0 0.0
      %3812 = vmatpush1.msra.mxu0 0.0
      %3813 = vmatprep.subr.mxu0 0.0
      %3814 = vmatpush1.msra.mxu0 0.0
      %3815 = vmatprep.subr.mxu0 0.0
      %3816 = vmatpush1.msra.mxu0 0.0
      %3817 = vmatprep.subr.mxu0 0.0
      %3818 = vmatpush1.msra.mxu0 0.0
      %3819 = vmatprep.subr.mxu0 0.0
      %3820 = vmatpush1.msra.mxu0 0.0
      %3821 = vmatprep.subr.mxu0 0.0
      %3822 = vmatpush1.msra.mxu0 0.0
      %3823 = vmatprep.subr.mxu0 0.0
      %3824 = vmatpush1.msra.mxu0 0.0
      %3825 = vmatprep.subr.mxu0 0.0
      %3826 = vmatpush1.msra.mxu0 0.0
      %3827 = vmatprep.subr.mxu0 0.0
      %3828 = vmatpush1.msra.mxu0 0.0
      %3829 = vmatprep.subr.mxu0 0.0
      %3830 = vmatpush1.msra.mxu0 0.0
      %3831 = vmatprep.subr.mxu0 0.0
      %3832 = vmatpush1.msra.mxu0 0.0
      %3833 = vmatprep.subr.mxu0 0.0
      %3834 = vmatpush1.msra.mxu0 0.0
      %3835 = vmatprep.mubr.f32.mxu0 0.0
      %3836 = vmatmul.mubr.f32.gmra.mrb[0].mxu0 %v3661
      %v3837 = vpop.f32.mrb[0].mxu0
      %v3838 = vadd.f32 0.0, %v3837
      %v3839 = vpop.f32.mrb[0].mxu0
      %3840 = vmatprep.mubr.f32.mxu0 0.0
      %3841 = vmatmul.mubr.f32.gmra.mrb[0].mxu0 %v3664
      %v3842 = vpop.f32.mrb[0].mxu0
      %v3843 = vadd.f32 0.0, %v3842
      %v3844 = vpop.f32.mrb[0].mxu0
      %3845 = vmatprep.mubr.f32.mxu0 0.0
      %3846 = vmatmul.mubr.f32.gmra.mrb[0].mxu0 %v3667
      %v3847 = vpop.f32.mrb[0].mxu0
      %v3848 = vadd.f32 0.0, %v3847
      %v3849 = vpop.f32.mrb[0].mxu0
      %3850 = vmatprep.mubr.f32.mxu0 0.0
      %3851 = vmatmul.mubr.f32.gmra.mrb[0].mxu0 %v3670
      %v3852 = vpop.f32.mrb[0].mxu0
      %v3853 = vadd.f32 0.0, %v3852
      %v3854 = vpop.f32.mrb[0].mxu0
      %3855 = vmatprep.mubr.f32.mxu0 0.0
      %3856 = vmatmul.mubr.f32.gmra.mrb[0].mxu0 %v3673
      %v3857 = vpop.f32.mrb[0].mxu0
      %v3858 = vadd.f32 0.0, %v3857
      %v3859 = vpop.f32.mrb[0].mxu0
      %3860 = vmatprep.mubr.f32.mxu0 0.0
      %3861 = vmatmul.mubr.f32.gmra.mrb[0].mxu0 %v3676
      %v3862 = vpop.f32.mrb[0].mxu0
      %v3863 = vadd.f32 0.0, %v3862
      %v3864 = vpop.f32.mrb[0].mxu0
      %3865 = vmatprep.mubr.f32.mxu0 0.0
      %3866 = vmatmul.mubr.f32.gmra.mrb[0].mxu0 %v3679
      %v3867 = vpop.f32.mrb[0].mxu0
      %v3868 = vadd.f32 0.0, %v3867
      %v3869 = vpop.f32.mrb[0].mxu0
      %3870 = vmatprep.mubr.f32.mxu0 0.0
      %3871 = vmatmul.mubr.f32.gmra.mrb[0].mxu0 %v3682
      %v3872 = vpop.f32.mrb[0].mxu0
      %v3873 = vadd.f32 0.0, %v3872
      %v3874 = vpop.f32.mrb[0].mxu0
      %3875 = vmatprep.mubr.f32.mxu0 0.0
      %3876 = vmatmul.mubr.f32.gmra.mrb[0].mxu0 %v3685
      %v3877 = vpop.f32.mrb[0].mxu0
      %v3878 = vadd.f32 0.0, %v3877
      %v3879 = vpop.f32.mrb[0].mxu0
      %3880 = vmatprep.mubr.f32.mxu0 0.0
      %3881 = vmatmul.mubr.f32.gmra.mrb[0].mxu0 %v3688
      %v3882 = vpop.f32.mrb[0].mxu0
      %v3883 = vadd.f32 0.0, %v3882
      %v3884 = vpop.f32.mrb[0].mxu0
      %3885 = vmatprep.mubr.f32.mxu0 0.0
      %3886 = vmatmul.mubr.f32.gmra.mrb[0].mxu0 %v3691
      %v3887 = vpop.f32.mrb[0].mxu0
      %v3888 = vadd.f32 0.0, %v3887
      %v3889 = vpop.f32.mrb[0].mxu0
      %3890 = vmatprep.mubr.f32.mxu0 0.0
      %3891 = vmatmul.mubr.f32.gmra.mrb[0].mxu0 %v3694
      %v3892 = vpop.f32.mrb[0].mxu0
      %v3893 = vadd.f32 0.0, %v3892
      %v3894 = vpop.f32.mrb[0].mxu0
      %3895 = vmatprep.mubr.f32.mxu0 0.0
      %3896 = vmatmul.mubr.f32.gmra.mrb[0].mxu0 %v3697
      %v3897 = vpop.f32.mrb[0].mxu0
      %v3898 = vadd.f32 0.0, %v3897
      %v3899 = vpop.f32.mrb[0].mxu0
      %3900 = vmatprep.mubr.f32.mxu0 0.0
      %3901 = vmatmul.mubr.f32.gmra.mrb[0].mxu0 %v3700
      %v3902 = vpop.f32.mrb[0].mxu0
      %v3903 = vadd.f32 0.0, %v3902
      %v3904 = vpop.f32.mrb[0].mxu0
      %3905 = vmatprep.mubr.f32.mxu0 0.0
      %3906 = vmatmul.mubr.f32.gmra.mrb[0].mxu0 %v3703
      %v3907 = vpop.f32.mrb[0].mxu0
      %v3908 = vadd.f32 0.0, %v3907
      %v3909 = vpop.f32.mrb[0].mxu0
      %3910 = vmatprep.mubr.f32.mxu0 0.0
      %3911 = vmatmul.mubr.f32.gmra.mrb[0].mxu0 %v3706
      %v3912 = vpop.f32.mrb[0].mxu0
      %v3913 = vadd.f32 0.0, %v3912
      %v3914 = vpop.f32.mrb[0].mxu0
      %3915 = vmatprep.mubr.f32.mxu0 0.0
      %3916 = vmatmul.mubr.f32.gmra.mrb[0].mxu0 %v3709
      %v3917 = vpop.f32.mrb[0].mxu0
      %v3918 = vadd.f32 0.0, %v3917
      %v3919 = vpop.f32.mrb[0].mxu0
      %3920 = vmatprep.mubr.f32.mxu0 0.0
      %3921 = vmatmul.mubr.f32.gmra.mrb[0].mxu0 %v3712
      %v3922 = vpop.f32.mrb[0].mxu0
      %v3923 = vadd.f32 0.0, %v3922
      %v3924 = vpop.f32.mrb[0].mxu0
      %3925 = vmatprep.mubr.f32.mxu0 0.0
      %3926 = vmatmul.mubr.f32.gmra.mrb[0].mxu0 %v3715
      %v3927 = vpop.f32.mrb[0].mxu0
      %v3928 = vadd.f32 0.0, %v3927
      %v3929 = vpop.f32.mrb[0].mxu0
      %3930 = vmatprep.mubr.f32.mxu0 0.0
      %3931 = vmatmul.mubr.f32.gmra.mrb[0].mxu0 %v3718
      %v3932 = vpop.f32.mrb[0].mxu0
      %v3933 = vadd.f32 0.0, %v3932
      %v3934 = vpop.f32.mrb[0].mxu0
      %3935 = vmatprep.mubr.f32.mxu0 0.0
      %3936 = vmatmul.mubr.f32.gmra.mrb[0].mxu0 %v3721
      %v3937 = vpop.f32.mrb[0].mxu0
      %v3938 = vadd.f32 0.0, %v3937
      %v3939 = vpop.f32.mrb[0].mxu0
      %3940 = vmatprep.mubr.f32.mxu0 0.0
      %3941 = vmatmul.mubr.f32.gmra.mrb[0].mxu0 %v3724
      %v3942 = vpop.f32.mrb[0].mxu0
      %v3943 = vadd.f32 0.0, %v3942
      %v3944 = vpop.f32.mrb[0].mxu0
      %3945 = vmatprep.mubr.f32.mxu0 0.0
      %3946 = vmatmul.mubr.f32.gmra.mrb[0].mxu0 %v3727
      %v3947 = vpop.f32.mrb[0].mxu0
      %v3948 = vadd.f32 0.0, %v3947
      %v3949 = vpop.f32.mrb[0].mxu0
      %3950 = vmatprep.mubr.f32.mxu0 0.0
      %3951 = vmatmul.mubr.f32.gmra.mrb[0].mxu0 %v3730
      %v3952 = vpop.f32.mrb[0].mxu0
      %v3953 = vadd.f32 0.0, %v3952
      %v3954 = vpop.f32.mrb[0].mxu0
      %3955 = vmatprep.mubr.f32.mxu0 0.0
      %3956 = vmatmul.mubr.f32.gmra.mrb[0].mxu0 %v3733
      %v3957 = vpop.f32.mrb[0].mxu0
      %v3958 = vadd.f32 0.0, %v3957
      %v3959 = vpop.f32.mrb[0].mxu0
      %3960 = vmatprep.mubr.f32.mxu0 0.0
      %3961 = vmatmul.mubr.f32.gmra.mrb[0].mxu0 %v3736
      %v3962 = vpop.f32.mrb[0].mxu0
      %v3963 = vadd.f32 0.0, %v3962
      %v3964 = vpop.f32.mrb[0].mxu0
      %3965 = vmatprep.mubr.f32.mxu0 0.0
      %3966 = vmatmul.mubr.f32.gmra.mrb[0].mxu0 %v3739
      %v3967 = vpop.f32.mrb[0].mxu0
      %v3968 = vadd.f32 0.0, %v3967
      %v3969 = vpop.f32.mrb[0].mxu0
      %3970 = vmatprep.mubr.f32.mxu0 0.0
      %3971 = vmatmul.mubr.f32.gmra.mrb[0].mxu0 %v3742
      %v3972 = vpop.f32.mrb[0].mxu0
      %v3973 = vadd.f32 0.0, %v3972
      %v3974 = vpop.f32.mrb[0].mxu0
      %3975 = vmatprep.mubr.f32.mxu0 0.0
      %3976 = vmatmul.mubr.f32.gmra.mrb[0].mxu0 %v3745
      %v3977 = vpop.f32.mrb[0].mxu0
      %v3978 = vadd.f32 0.0, %v3977
      %v3979 = vpop.f32.mrb[0].mxu0
      %3980 = vmatprep.mubr.f32.mxu0 0.0
      %3981 = vmatmul.mubr.f32.gmra.mrb[0].mxu0 %v3748
      %v3982 = vpop.f32.mrb[0].mxu0
      %v3983 = vadd.f32 0.0, %v3982
      %v3984 = vpop.f32.mrb[0].mxu0
      %3985 = vmatprep.mubr.f32.mxu0 0.0
      %3986 = vmatmul.mubr.f32.gmra.mrb[0].mxu0 %v3751
      %v3987 = vpop.f32.mrb[0].mxu0
      %v3988 = vadd.f32 0.0, %v3987
      %v3989 = vpop.f32.mrb[0].mxu0
      %3990 = vmatprep.mubr.f32.mxu0 0.0
      %3991 = vmatmul.mubr.f32.gmra.mrb[0].mxu0 %v3754
      %v3992 = vpop.f32.mrb[0].mxu0
      %v3993 = vadd.f32 0.0, %v3992
      %v3994 = vpop.f32.mrb[0].mxu0
      %3995 = vmatprep.mubr.f32.mxu0 0.0
      %3996 = vmatmul.mubr.f32.gmra.mrb[0].mxu0 %v3757
      %v3997 = vpop.f32.mrb[0].mxu0
      %v3998 = vadd.f32 0.0, %v3997
      %v3999 = vpop.f32.mrb[0].mxu0
      %4000 = vmatprep.mubr.f32.mxu0 0.0
      %4001 = vmatmul.mubr.f32.gmra.mrb[0].mxu0 %v3760
      %v4002 = vpop.f32.mrb[0].mxu0
      %v4003 = vadd.f32 0.0, %v4002
      %v4004 = vpop.f32.mrb[0].mxu0
      %4005 = vmatprep.mubr.f32.mxu0 0.0
      %4006 = vmatmul.mubr.f32.gmra.mrb[0].mxu0 %v3763
      %v4007 = vpop.f32.mrb[0].mxu0
      %v4008 = vadd.f32 0.0, %v4007
      %v4009 = vpop.f32.mrb[0].mxu0
      %4010 = vmatprep.mubr.f32.mxu0 0.0
      %4011 = vmatmul.mubr.f32.gmra.mrb[0].mxu0 %v3766
      %v4012 = vpop.f32.mrb[0].mxu0
      %v4013 = vadd.f32 0.0, %v4012
      %v4014 = vpop.f32.mrb[0].mxu0
      %4015 = vdwg.mxu0
      %v4016 = vadd.f32 %v3586, %v3838
      %v4017 = vadd.f32 %v3587, %v3843
      %v4018 = vadd.f32 %v3588, %v3848
      %v4019 = vadd.f32 %v3589, %v3853
      %v4020 = vadd.f32 %v3590, %v3858
      %v4021 = vadd.f32 %v3591, %v3863
      %v4022 = vadd.f32 %v3592, %v3868
      %v4023 = vadd.f32 %v3593, %v3873
      %v4024 = vadd.f32 %v3594, %v3878
      %v4025 = vadd.f32 %v3595, %v3883
      %v4026 = vadd.f32 %v3596, %v3888
      %v4027 = vadd.f32 %v3597, %v3893
      %v4028 = vadd.f32 %v3598, %v3898
      %v4029 = vadd.f32 %v3599, %v3903
      %v4030 = vadd.f32 %v3600, %v3908
      %v4031 = vadd.f32 %v3601, %v3913
      %v4032 = vadd.f32 %v3602, %v3918
      %v4033 = vadd.f32 %v3603, %v3923
      %v4034 = vadd.f32 %v3604, %v3928
      %v4035 = vadd.f32 %v3605, %v3933
      %v4036 = vadd.f32 %v3606, %v3938
      %v4037 = vadd.f32 %v3607, %v3943
      %v4038 = vadd.f32 %v3608, %v3948
      %v4039 = vadd.f32 %v3609, %v3953
      %v4040 = vadd.f32 %v3610, %v3958
      %v4041 = vadd.f32 %v3611, %v3963
      %v4042 = vadd.f32 %v3612, %v3968
      %v4043 = vadd.f32 %v3613, %v3973
      %v4044 = vadd.f32 %v3614, %v3978
      %v4045 = vadd.f32 %v3615, %v3983
      %v4046 = vadd.f32 %v3616, %v3988
      %v4047 = vadd.f32 %v3617, %v3993
      %v4048 = vadd.f32 %v3618, %v3998
      %v4049 = vadd.f32 %v3619, %v4003
      %v4050 = vadd.f32 %v3620, %v4008
      %v4051 = vadd.f32 %v3621, %v4013
      %v4052 = vld [vmem:[%s2] sm:$0x1]
      %v4054 = vlaneseq
      %v4055 = vshrl.u32 %v4054, 7
      %v4056 = vsub.s32 0, %v4055
      %v4057 = vrot.slane %v4052, %v4056
      %v4059 = vadd.f32 %v4016, %v4057
      %v4060 = vadd.f32 %v4017, %v4057
      %v4061 = vadd.f32 %v4018, %v4057
      %v4062 = vadd.f32 %v4019, %v4057
      %v4063 = vadd.f32 %v4020, %v4057
      %v4064 = vadd.f32 %v4021, %v4057
      %v4065 = vadd.f32 %v4022, %v4057
      %v4066 = vadd.f32 %v4023, %v4057
      %v4067 = vadd.f32 %v4024, %v4057
      %v4068 = vadd.f32 %v4025, %v4057
      %v4069 = vadd.f32 %v4026, %v4057
      %v4070 = vadd.f32 %v4027, %v4057
      %v4071 = vadd.f32 %v4028, %v4057
      %v4072 = vadd.f32 %v4029, %v4057
      %v4073 = vadd.f32 %v4030, %v4057
      %v4074 = vadd.f32 %v4031, %v4057
      %v4075 = vadd.f32 %v4032, %v4057
      %v4076 = vadd.f32 %v4033, %v4057
      %v4077 = vadd.f32 %v4034, %v4057
      %v4078 = vadd.f32 %v4035, %v4057
      %v4079 = vadd.f32 %v4036, %v4057
      %v4080 = vadd.f32 %v4037, %v4057
      %v4081 = vadd.f32 %v4038, %v4057
      %v4082 = vadd.f32 %v4039, %v4057
      %v4083 = vadd.f32 %v4040, %v4057
      %v4084 = vadd.f32 %v4041, %v4057
      %v4085 = vadd.f32 %v4042, %v4057
      %v4086 = vadd.f32 %v4043, %v4057
      %v4087 = vadd.f32 %v4044, %v4057
      %v4088 = vadd.f32 %v4045, %v4057
      %v4089 = vadd.f32 %v4046, %v4057
      %v4090 = vadd.f32 %v4047, %v4057
      %v4091 = vadd.f32 %v4048, %v4057
      %v4092 = vadd.f32 %v4049, %v4057
      %v4093 = vadd.f32 %v4050, %v4057
      %v4094 = vadd.f32 %v4051, %v4057
      %vm4095 = vcmask 15360
      %4096 = vst.msk [vmem:[%s170] sm:$0xff] %vm4095, %v4059
      %4097 = vst.msk [vmem:[%s170 + $0x8] sm:$0xff] %vm4095, %v4060
      %4098 = vst.msk [vmem:[%s170 + $0x10] sm:$0xff] %vm4095, %v4061
      %4099 = vst.msk [vmem:[%s170 + $0x18] sm:$0xff] %vm4095, %v4062
      %4100 = vst.msk [vmem:[%s170 + $0x20] sm:$0xff] %vm4095, %v4063
      %4101 = vst.msk [vmem:[%s170 + $0x28] sm:$0xff] %vm4095, %v4064
      %4102 = vst.msk [vmem:[%s170 + $0x30] sm:$0xff] %vm4095, %v4065
      %4103 = vst.msk [vmem:[%s170 + $0x38] sm:$0xff] %vm4095, %v4066
      %4104 = vst.msk [vmem:[%s170 + $0x40] sm:$0xff] %vm4095, %v4067
      %4105 = vst.msk [vmem:[%s170 + $0x48] sm:$0xff] %vm4095, %v4068
      %4106 = vst.msk [vmem:[%s170 + $0x50] sm:$0xff] %vm4095, %v4069
      %4107 = vst.msk [vmem:[%s170 + $0x58] sm:$0xff] %vm4095, %v4070
      %4108 = vst.msk [vmem:[%s170 + $0x60] sm:$0xff] %vm4095, %v4071
      %4109 = vst.msk [vmem:[%s170 + $0x68] sm:$0xff] %vm4095, %v4072
      %4110 = vst.msk [vmem:[%s170 + $0x70] sm:$0xff] %vm4095, %v4073
      %4111 = vst.msk [vmem:[%s170 + $0x78] sm:$0xff] %vm4095, %v4074
      %4112 = vst.msk [vmem:[%s170 + $0x80] sm:$0xff] %vm4095, %v4075
      %4113 = vst.msk [vmem:[%s170 + $0x88] sm:$0xff] %vm4095, %v4076
      %4114 = vst.msk [vmem:[%s170 + $0x90] sm:$0xff] %vm4095, %v4077
      %4115 = vst.msk [vmem:[%s170 + $0x98] sm:$0xff] %vm4095, %v4078
      %4116 = vst.msk [vmem:[%s170 + $0xa0] sm:$0xff] %vm4095, %v4079
      %4117 = vst.msk [vmem:[%s170 + $0xa8] sm:$0xff] %vm4095, %v4080
      %4118 = vst.msk [vmem:[%s170 + $0xb0] sm:$0xff] %vm4095, %v4081
      %4119 = vst.msk [vmem:[%s170 + $0xb8] sm:$0xff] %vm4095, %v4082
      %4120 = vst.msk [vmem:[%s170 + $0xc0] sm:$0xff] %vm4095, %v4083
      %4121 = vst.msk [vmem:[%s170 + $0xc8] sm:$0xff] %vm4095, %v4084
      %4122 = vst.msk [vmem:[%s170 + $0xd0] sm:$0xff] %vm4095, %v4085
      %4123 = vst.msk [vmem:[%s170 + $0xd8] sm:$0xff] %vm4095, %v4086
      %4124 = vst.msk [vmem:[%s170 + $0xe0] sm:$0xff] %vm4095, %v4087
      %4125 = vst.msk [vmem:[%s170 + $0xe8] sm:$0xff] %vm4095, %v4088
      %4126 = vst.msk [vmem:[%s170 + $0xf0] sm:$0xff] %vm4095, %v4089
      %4127 = vst.msk [vmem:[%s170 + $0xf8] sm:$0xff] %vm4095, %v4090
      %4128 = vst.msk [vmem:[%s170 + $0x100] sm:$0xff] %vm4095, %v4091
      %4129 = vst.msk [vmem:[%s170 + $0x108] sm:$0xff] %vm4095, %v4092
      %4130 = vst.msk [vmem:[%s170 + $0x110] sm:$0xff] %vm4095, %v4093
      %4131 = vst.msk [vmem:[%s170 + $0x118] sm:$0xff] %vm4095, %v4094
      %p4132 = scmp.lt.s32.totalorder %s14, 1
      %s4133 = scalar_select %p4132, %s14, 1
      %s4134 = smul.addr %s4133, 36
      %s4135 = smul.addr %s4134, 8
      %s4136 = scalar_lea.vmem %s3, %s4135
      // Predicated region
      $region33: #{tpu_custom_call.1} parent=31 // pred_check
        %p4137 = pneg %p100
      $region34: #{tpu_custom_call.1} parent=31 // pred_check_branch
        %4139 = sbr.rel (%p4137) target = $region36
      $region35: #{tpu_custom_call.1} parent=31 // pred_region
        _
      $region36: #{tpu_custom_call.1} parent=31 // pred_fallthru
        _
    $region32: #{tpu_custom_call.1} parent=5 // pred_fallthru
      _
    %p4140 = scmp.le.s32.totalorder 2, %s9
    // Predicated region
    $region37: #{tpu_custom_call.1} parent=5 // pred_check
      %p4141 = pneg %p4140
    $region38: #{tpu_custom_call.1} parent=5 // pred_check_branch
      %4143 = sbr.rel (%p4141) target = $region40
    $region39: #{tpu_custom_call.1} parent=5 // pred_region
      %s4144 = ssub.s32 %s9, 2
      // Predicated region
      $region41: #{tpu_custom_call.1} parent=39 // pred_check
        %p4145 = pneg %p106
      $region42: #{tpu_custom_call.1} parent=39 // pred_check_branch
        %4147 = sbr.rel (%p4145) target = $region44
      $region43: #{tpu_custom_call.1} parent=39 // pred_region
        %p4148 = scmp.lt.s32.totalorder %s15, 1
        %s4149 = scalar_select %p4148, %s15, 1
        %s4150 = smul.addr %s4149, 36
        %s4151 = smul.addr %s4150, 8
        %s4152 = scalar_lea.vmem %s3, %s4151
      $region44: #{tpu_custom_call.1} parent=39 // pred_fallthru
        _
    $region40: #{tpu_custom_call.1} parent=5 // pred_fallthru
      _
  $region6: #{tpu_custom_call.1} parent=0 // loop_footer
    %s13 = sadd.s32 1, %s9
  $region7: #{tpu_custom_call.1} parent=0 // loop_footer_branch
    %8 = sbr.rel target = $region3
  $region8: #{tpu_custom_call.1} parent=0 // loop_exit
    _

</llo_original>
